<compile_context>
chip_gen: v6e
topology: v6e:2x2x1
jax: 0.10.0
libtpu: 0.0.40
codegen_flags: <defaults>
</compile_context>

<pallas_src>
import math
import numpy as np
import jax
import jax.numpy as jnp
from jax import lax
from jax.experimental import pallas as pl
from jax.experimental.pallas import tpu as pltpu


# ------------------------------------------------------------------ helpers --

def _gelu_tanh(x):
    # tanh-approximate GELU (runs on the EUP); tiny deviation from torch's erf GELU.
    c = 0.7978845608028654  # sqrt(2/pi)
    return 0.5 * x * (1.0 + jnp.tanh(c * (x + 0.044715 * x * x * x)))


def _layernorm(x, w, b, eps=1e-5):
    mu = jnp.mean(x, axis=-1, keepdims=True)
    xc = x - mu
    var = jnp.mean(xc * xc, axis=-1, keepdims=True)
    return xc * lax.rsqrt(var + eps) * w + b


# ----------------------------------------------------------- Pallas kernel --

def fused_mdm_pallas(x_p, m_p, t_pe, flat_seed, params, num_heads):
    """Whole MDM_Old forward (minus trivial wrapper reshapes) in one pallas_call.

    x_p:       [bs, C_x, T]   pose channels, native layout
    m_p:       [bs, C_m, T]   mfcc channels, native layout
    t_pe:      [bs, D]        pe[timesteps]
    flat_seed: [bs, S]        flattened (and possibly force-masked) seed poses
    returns    [bs, T*input_feats]  lane-dense output slab
    """
    p = params
    enc = p['enc']
    bs, C_x, T = x_p.shape
    C_m = m_p.shape[1]
    L, D, D3 = enc['wqkv'].shape
    H = num_heads
    assert D % H == 0
    hd = D // H
    F = enc['w1'].shape[2]
    T1 = T + 1
    R = bs * T1
    OUTW = p['fin_wrep'].shape[1]           # T * input_feats

    dn_t = (((0,), (0,)), ((), ()))         # 2D dot, contract dim 0 of both (x^T @ W)
    dn_qk = (((2,), (2,)), ((0,), (0,)))    # (G,T1,hd) x (G,T1,hd) -> (G,T1,T1)
    dn_pv = (((2,), (1,)), ((0,), (0,)))    # (G,T1,T1) x (G,T1,hd) -> (G,T1,hd)

    def kernel(x_ref, m_ref, tpe_ref, seed_ref, pe_ref,
               pwx_ref, pwm_ref, pb_ref,
               tw1_ref, tb1_ref, tw2_ref, tb2_ref, sw_ref, sb_ref,
               wqkv_ref, bqkv_ref, wo_ref, bo_ref, ln1w_ref, ln1b_ref,
               w1_ref, b1_ref, w2_ref, b2_ref, ln2w_ref, ln2b_ref,
               fw_ref, fb_ref, msk_ref,
               o_ref, act_ref):
        l = pl.program_id(0)

        # ---------------- layer 0: build the resident [R, D] sequence --------------
        @pl.when(l == 0)
        def _():
            pe_all = pe_ref[...]                                      # [T1, D]
            # fused TimestepEmbedder (Linear->SiLU->Linear) + SeedPoseEncoder
            h = jnp.dot(tpe_ref[...], tw1_ref[...],
                        preferred_element_type=jnp.float32) + tb1_ref[...]
            h = h * jax.nn.sigmoid(h)                                 # SiLU
            tok = jnp.dot(h, tw2_ref[...],
                          preferred_element_type=jnp.float32) + tb2_ref[...]
            tok = tok + jnp.dot(seed_ref[...], sw_ref[...],
                                preferred_element_type=jnp.float32) + sb_ref[...]
            tok = tok + pe_all[0:1, :]                                # token keeps pe[0]

            x_all = x_ref[...]                                        # [bs, C_x, T]
            m_all = m_ref[...]                                        # [bs, C_m, T]
            pe_fr = pe_all[1:, :]                                     # frames use pe[1..T]
            rows = []
            for b in range(bs):
                fr = (lax.dot_general(x_all[b], pwx_ref[...], dn_t,
                                      preferred_element_type=jnp.float32)
                      + lax.dot_general(m_all[b], pwm_ref[...], dn_t,
                                        preferred_element_type=jnp.float32)
                      + pb_ref[...] + pe_fr)                          # [T, D]
                rows.append(fr)
                rows.append(tok[b:b + 1, :])                          # token appended last
            act_ref[...] = jnp.concatenate(rows, axis=0)              # [R, D]

        xb = act_ref[...]                                             # [R, D]

        # ---------------- multi-head self-attention ---------------------------------
        qkv = jnp.dot(xb, wqkv_ref[...],
                      preferred_element_type=jnp.float32) + bqkv_ref[...]   # [R, 3D]
        q3 = jnp.stack([qkv[b * T1:(b + 1) * T1, h * hd:(h + 1) * hd]
                        for b in range(bs) for h in range(H)], axis=0)      # [G,T1,hd]
        k3 = jnp.stack([qkv[b * T1:(b + 1) * T1, D + h * hd:D + (h + 1) * hd]
                        for b in range(bs) for h in range(H)], axis=0)
        v3 = jnp.stack([qkv[b * T1:(b + 1) * T1, 2 * D + h * hd:2 * D + (h + 1) * hd]
                        for b in range(bs) for h in range(H)], axis=0)
        s = lax.dot_general(q3, k3, dn_qk, preferred_element_type=jnp.float32)  # [G,T1,T1]
        s = s - jnp.max(s, axis=-1, keepdims=True)
        ps = jnp.exp(s)
        ps = ps * pl.reciprocal(jnp.sum(ps, axis=-1, keepdims=True), approx=True)
        ctx3 = lax.dot_general(ps, v3, dn_pv, preferred_element_type=jnp.float32)  # [G,T1,hd]
        ctx = jnp.concatenate(
            [jnp.concatenate([ctx3[b * H + h] for h in range(H)], axis=1)
             for b in range(bs)], axis=0)                                   # [R, D]
        attn = jnp.dot(ctx, wo_ref[...],
                       preferred_element_type=jnp.float32) + bo_ref[...]
        x1 = _layernorm(xb + attn, ln1w_ref[...], ln1b_ref[...])

        # ---------------- feed forward -----------------------------------------------
        h1 = jnp.dot(x1, w1_ref[...], preferred_element_type=jnp.float32) + b1_ref[...]
        h1 = _gelu_tanh(h1)
        h2 = jnp.dot(h1, w2_ref[...], preferred_element_type=jnp.float32) + b2_ref[...]
        x2 = _layernorm(x1 + h2, ln2w_ref[...], ln2b_ref[...])
        act_ref[...] = x2

        # ---------------- last layer: lane-dense OutputProcess linear ----------------
        @pl.when(l == pl.num_programs(0) - 1)
        def _():
            # frame-replicated weight + block-diagonal mask -> [bs, T*feats] dense slab
            full = jnp.dot(x2, fw_ref[...], preferred_element_type=jnp.float32)  # [R, OUTW]
            msk = msk_ref[...]                                                    # [T, OUTW]
            outs = []
            for b in range(bs):
                sel = jnp.sum(full[b * T1:b * T1 + T, :] * msk,
                              axis=0, keepdims=True) + fb_ref[...]                # [1, OUTW]
                outs.append(sel)
            o_ref[...] = jnp.concatenate(outs, axis=0).astype(o_ref.dtype)

    # ---- specs: whole-array blocks (constant) + per-layer stacked blocks (indexed by l)
    def fspec(a):
        nd = a.ndim
        return pl.BlockSpec(tuple(a.shape), lambda l, _n=nd: (0,) * _n)

    def lspec(a):
        nd = a.ndim
        return pl.BlockSpec((None,) + tuple(a.shape[1:]),
                            lambda l, _n=nd: (l,) + (0,) * (_n - 1))

    args = (x_p, m_p, t_pe, flat_seed, p['pe_seq'],
            p['pose_wxt'], p['pose_wmt'], p['pose_b'],
            p['time_w1t'], p['time_b1'], p['time_w2t'], p['time_b2'],
            p['seed_wt'], p['seed_b'],
            enc['wqkv'], enc['bqkv'], enc['wo'], enc['bo'], enc['ln1w'], enc['ln1b'],
            enc['w1'], enc['b1'], enc['w2'], enc['b2'], enc['ln2w'], enc['ln2b'],
            p['fin_wrep'], p['fin_brep'], p['out_mask'])
    in_specs = ([fspec(a) for a in args[:14]]
                + [lspec(a) for a in args[14:26]]
                + [fspec(a) for a in args[26:]])

    return pl.pallas_call(
        kernel,
        out_shape=jax.ShapeDtypeStruct((bs, OUTW), x_p.dtype),
        grid=(L,),
        in_specs=in_specs,
        out_specs=pl.BlockSpec((bs, OUTW), lambda l: (0, 0)),
        scratch_shapes=[pltpu.VMEM((R, D), jnp.float32)],
        compiler_params=pltpu.CompilerParams(dimension_semantics=("arbitrary",)),
    )(*args)


# -------------------------------------------------------------- parameters --

def _linear_init(key, in_dim, out_dim):
    kw, kb = jax.random.split(key)
    bound = 1.0 / math.sqrt(in_dim)
    w = jax.random.uniform(kw, (out_dim, in_dim), jnp.float32, -bound, bound)
    b = jax.random.uniform(kb, (out_dim,), jnp.float32, -bound, bound)
    return w, b


def init_params(key, *, njoints, nfeats, latent_dim, ff_size, num_layers,
                num_heads, seed_poses, nframes, mfcc_dim=26, max_len=64):
    input_feats = njoints * nfeats
    D, H, F, T = latent_dim, num_heads, ff_size, nframes
    hd = D // H
    scale = 1.0 / math.sqrt(hd)
    C_x = njoints * nfeats
    C_m = mfcc_dim * nfeats

    keys = jax.random.split(key, 6 + num_layers)
    p = {}
    # weights stored pre-transposed / pre-arranged into the exact layouts the kernel uses
    seed_w, seed_b = _linear_init(keys[0], njoints * seed_poses, D)
    p['seed_wt'], p['seed_b'] = seed_w.T, seed_b.reshape(1, D)

    pose_w, pose_b = _linear_init(keys[1], C_x + C_m, D)
    pose_wt = pose_w.T                               # [C_x + C_m, D]
    p['pose_wxt'] = pose_wt[:C_x]                    # pose half
    p['pose_wmt'] = pose_wt[C_x:]                    # mfcc half
    p['pose_b'] = pose_b.reshape(1, D)

    tw1, tb1 = _linear_init(keys[2], D, D)
    tw2, tb2 = _linear_init(keys[3], D, D)
    p['time_w1t'], p['time_b1'] = tw1.T, tb1.reshape(1, D)
    p['time_w2t'], p['time_b2'] = tw2.T, tb2.reshape(1, D)

    fin_w, fin_b = _linear_init(keys[4], D, input_feats)
    # lane-dense final projection: frame-replicated weight + block-diagonal select mask
    p['fin_wrep'] = jnp.tile(fin_w.T, (1, T))                                # [D, T*feats]
    p['fin_brep'] = jnp.tile(fin_b.reshape(1, input_feats), (1, T))          # [1, T*feats]
    p['out_mask'] = jnp.asarray(np.kron(np.eye(T, dtype=np.float32),
                                        np.ones((1, input_feats), np.float32)))

    enc = {k: [] for k in ('wqkv', 'bqkv', 'wo', 'bo', 'ln1w', 'ln1b',
                           'w1', 'b1', 'w2', 'b2', 'ln2w', 'ln2b')}
    for li in range(num_layers):
        lk = jax.random.split(keys[5 + li], 4)
        in_w, in_b = _linear_init(lk[0], D, 3 * D)        # torch in_proj  [3D, D]
        out_w, out_b = _linear_init(lk[1], D, D)          # torch out_proj [D, D]
        l1w, l1b = _linear_init(lk[2], D, F)
        l2w, l2b = _linear_init(lk[3], F, D)
        # concatenated QKV with 1/sqrt(hd) folded into the Q columns
        wqkv = jnp.concatenate([in_w[:D].T * scale, in_w[D:2 * D].T, in_w[2 * D:].T],
                               axis=1)                    # [D, 3D]
        bqkv = jnp.concatenate([in_b[:D] * scale, in_b[D:2 * D], in_b[2 * D:]]
                               ).reshape(1, 3 * D)
        enc['wqkv'].append(wqkv)
        enc['bqkv'].append(bqkv)
        enc['wo'].append(out_w.T)                         # [D, D]
        enc['bo'].append(out_b.reshape(1, D))
        enc['ln1w'].append(jnp.ones((1, D), jnp.float32))
        enc['ln1b'].append(jnp.zeros((1, D), jnp.float32))
        enc['w1'].append(l1w.T)                           # [D, F]
        enc['b1'].append(l1b.reshape(1, F))
        enc['w2'].append(l2w.T)                           # [F, D]
        enc['b2'].append(l2b.reshape(1, D))
        enc['ln2w'].append(jnp.ones((1, D), jnp.float32))
        enc['ln2b'].append(jnp.zeros((1, D), jnp.float32))
    p['enc'] = {k: jnp.stack(v, axis=0) for k, v in enc.items()}

    # PositionalEncoding buffer, same recipe as the PyTorch module.
    position = np.arange(max_len, dtype=np.float32)[:, None]
    div_term = np.exp(np.arange(0, D, 2, dtype=np.float32) * (-np.log(10000.0) / D))
    pe = np.zeros((max_len, D), dtype=np.float32)
    pe[:, 0::2] = np.sin(position * div_term)
    pe[:, 1::2] = np.cos(position * div_term)
    p['pe'] = jnp.asarray(pe)                  # for the timestep gather
    p['pe_seq'] = jnp.asarray(pe[:T + 1])      # pe[0] (token) + pe[1..T] (frames)
    return p


# ----------------------------------------------------------------- forward --

def mdm_forward(params, x, timesteps, y, cfg):
    bs, njoints, nfeats, nframes = x.shape
    force_mask = bool(y.get('uncond', False))

    # TimestepEmbedder input + SeedPoseEncoder input (the MLPs themselves run in-kernel)
    t_pe = params['pe'][timesteps]                                   # [bs, D]
    flat_seed = jnp.squeeze(y['seed'], axis=2).reshape(bs, -1)       # [bs, nj*seed_poses]
    if force_mask:
        flat_seed = jnp.zeros_like(flat_seed)
    # TODO(synk): training-time Bernoulli cond masking (cond_mask_prob>0) not modeled (eval).

    # InputProcess ('genea_vec'): native channel-major layout, no host concat/transpose
    x_p = x.reshape(bs, njoints * nfeats, nframes)                   # [bs, C_x, T]
    m_p = y['mfcc'].reshape(bs, -1, nframes)                         # [bs, C_m, T]

    o = fused_mdm_pallas(x_p, m_p, t_pe, flat_seed, params,
                         cfg['num_heads'])                           # [bs, T*input_feats]

    # OutputProcess layout: lane index = t*feats + (j*nf + f)
    o = o.reshape(bs, nframes, njoints, nfeats)
    return jnp.transpose(o, (0, 2, 3, 1))                            # [bs, nj, nf, T]


# -------------------------------------------------------------------- main --

if __name__ == "__main__":
    cfg = dict(njoints=16, nfeats=1, latent_dim=32, ff_size=64,
               num_layers=2, num_heads=4, seed_poses=2)
    bs, nframes, mfcc_dim, max_len = 2, 8, 26, 64

    root = jax.random.PRNGKey(0)
    kp, kx, kt, ks, km = jax.random.split(root, 5)
    params = init_params(kp, njoints=cfg['njoints'], nfeats=cfg['nfeats'],
                         latent_dim=cfg['latent_dim'], ff_size=cfg['ff_size'],
                         num_layers=cfg['num_layers'], num_heads=cfg['num_heads'],
                         seed_poses=cfg['seed_poses'], nframes=nframes,
                         mfcc_dim=mfcc_dim, max_len=max_len)

    x = jax.random.normal(kx, (bs, cfg['njoints'], cfg['nfeats'], nframes), jnp.float32)
    timesteps = jax.random.randint(kt, (bs,), 0, max_len, dtype=jnp.int32)
    seed = jax.random.normal(ks, (bs, cfg['njoints'], 1, cfg['seed_poses']), jnp.float32)
    mfcc = jax.random.normal(km, (bs, mfcc_dim, cfg['nfeats'], nframes), jnp.float32)

    @jax.jit
    def run(params, x, timesteps, seed, mfcc):
        y = {'seed': seed, 'mfcc': mfcc, 'uncond': False}
        return mdm_forward(params, x, timesteps, y, cfg)

    out = jax.block_until_ready(run(params, x, timesteps, seed, mfcc))
    assert out.shape == (bs, cfg['njoints'], cfg['nfeats'], nframes), out.shape
    assert bool(jnp.all(jnp.isfinite(out)))
    print("KERNEL_OK")
</pallas_src>

<mosaic_0001>
module attributes {stable_mosaic.version = 11 : i64} {
  func.func @kernel(%arg0: i32, %arg1: memref<2x16x8xf32, #tpu.memory_space<vmem>>, %arg2: memref<2x26x8xf32, #tpu.memory_space<vmem>>, %arg3: memref<2x32xf32, #tpu.memory_space<vmem>>, %arg4: memref<2x32xf32, #tpu.memory_space<vmem>>, %arg5: memref<9x32xf32, #tpu.memory_space<vmem>>, %arg6: memref<16x32xf32, #tpu.memory_space<vmem>>, %arg7: memref<26x32xf32, #tpu.memory_space<vmem>>, %arg8: memref<1x32xf32, #tpu.memory_space<vmem>>, %arg9: memref<32x32xf32, #tpu.memory_space<vmem>>, %arg10: memref<1x32xf32, #tpu.memory_space<vmem>>, %arg11: memref<32x32xf32, #tpu.memory_space<vmem>>, %arg12: memref<1x32xf32, #tpu.memory_space<vmem>>, %arg13: memref<32x32xf32, #tpu.memory_space<vmem>>, %arg14: memref<1x32xf32, #tpu.memory_space<vmem>>, %arg15: memref<1x32x96xf32, #tpu.memory_space<vmem>>, %arg16: memref<1x1x96xf32, #tpu.memory_space<vmem>>, %arg17: memref<1x32x32xf32, #tpu.memory_space<vmem>>, %arg18: memref<1x1x32xf32, #tpu.memory_space<vmem>>, %arg19: memref<1x1x32xf32, #tpu.memory_space<vmem>>, %arg20: memref<1x1x32xf32, #tpu.memory_space<vmem>>, %arg21: memref<1x32x64xf32, #tpu.memory_space<vmem>>, %arg22: memref<1x1x64xf32, #tpu.memory_space<vmem>>, %arg23: memref<1x64x32xf32, #tpu.memory_space<vmem>>, %arg24: memref<1x1x32xf32, #tpu.memory_space<vmem>>, %arg25: memref<1x1x32xf32, #tpu.memory_space<vmem>>, %arg26: memref<1x1x32xf32, #tpu.memory_space<vmem>>, %arg27: memref<32x128xf32, #tpu.memory_space<vmem>>, %arg28: memref<1x128xf32, #tpu.memory_space<vmem>>, %arg29: memref<8x128xf32, #tpu.memory_space<vmem>>, %arg30: memref<2x128xf32, #tpu.memory_space<vmem>>, %arg31: memref<18x32xf32, #tpu.memory_space<vmem>>) attributes {dimension_semantics = [#tpu.dimension_semantics<arbitrary>], iteration_bounds = array<i64: 2>, scalar_prefetch = 0 : i64, scratch_operands = 1 : i64, tpu.core_type = #tpu.core_type<tc>, window_params = [{pipeline_mode = #tpu.pipeline_mode<synchronous>, transform_indices = @transform_0, window_bounds = array<i64: 2, 16, 8>}, {pipeline_mode = #tpu.pipeline_mode<synchronous>, transform_indices = @transform_1, window_bounds = array<i64: 2, 26, 8>}, {pipeline_mode = #tpu.pipeline_mode<synchronous>, transform_indices = @transform_2, window_bounds = array<i64: 2, 32>}, {pipeline_mode = #tpu.pipeline_mode<synchronous>, transform_indices = @transform_3, window_bounds = array<i64: 2, 32>}, {pipeline_mode = #tpu.pipeline_mode<synchronous>, transform_indices = @transform_4, window_bounds = array<i64: 9, 32>}, {pipeline_mode = #tpu.pipeline_mode<synchronous>, transform_indices = @transform_5, window_bounds = array<i64: 16, 32>}, {pipeline_mode = #tpu.pipeline_mode<synchronous>, transform_indices = @transform_6, window_bounds = array<i64: 26, 32>}, {pipeline_mode = #tpu.pipeline_mode<synchronous>, transform_indices = @transform_7, window_bounds = array<i64: 1, 32>}, {pipeline_mode = #tpu.pipeline_mode<synchronous>, transform_indices = @transform_8, window_bounds = array<i64: 32, 32>}, {pipeline_mode = #tpu.pipeline_mode<synchronous>, transform_indices = @transform_9, window_bounds = array<i64: 1, 32>}, {pipeline_mode = #tpu.pipeline_mode<synchronous>, transform_indices = @transform_10, window_bounds = array<i64: 32, 32>}, {pipeline_mode = #tpu.pipeline_mode<synchronous>, transform_indices = @transform_11, window_bounds = array<i64: 1, 32>}, {pipeline_mode = #tpu.pipeline_mode<synchronous>, transform_indices = @transform_12, window_bounds = array<i64: 32, 32>}, {pipeline_mode = #tpu.pipeline_mode<synchronous>, transform_indices = @transform_13, window_bounds = array<i64: 1, 32>}, {transform_indices = @transform_14, window_bounds = array<i64: 1, 32, 96>}, {transform_indices = @transform_15, window_bounds = array<i64: 1, 1, 96>}, {transform_indices = @transform_16, window_bounds = array<i64: 1, 32, 32>}, {transform_indices = @transform_17, window_bounds = array<i64: 1, 1, 32>}, {transform_indices = @transform_18, window_bounds = array<i64: 1, 1, 32>}, {transform_indices = @transform_19, window_bounds = array<i64: 1, 1, 32>}, {transform_indices = @transform_20, window_bounds = array<i64: 1, 32, 64>}, {transform_indices = @transform_21, window_bounds = array<i64: 1, 1, 64>}, {transform_indices = @transform_22, window_bounds = array<i64: 1, 64, 32>}, {transform_indices = @transform_23, window_bounds = array<i64: 1, 1, 32>}, {transform_indices = @transform_24, window_bounds = array<i64: 1, 1, 32>}, {transform_indices = @transform_25, window_bounds = array<i64: 1, 1, 32>}, {pipeline_mode = #tpu.pipeline_mode<synchronous>, transform_indices = @transform_26, window_bounds = array<i64: 32, 128>}, {pipeline_mode = #tpu.pipeline_mode<synchronous>, transform_indices = @transform_27, window_bounds = array<i64: 1, 128>}, {pipeline_mode = #tpu.pipeline_mode<synchronous>, transform_indices = @transform_28, window_bounds = array<i64: 8, 128>}, {pipeline_mode = #tpu.pipeline_mode<synchronous>, transform_indices = @transform_29, window_bounds = array<i64: 2, 128>}]} {
    %c0_i32 = arith.constant 0 : i32
    %0 = arith.cmpi eq, %arg0, %c0_i32 : i32
    %1 = arith.extui %0 : i1 to i32
    %c0_i32_0 = arith.constant 0 : i32
    %2 = arith.cmpi ne, %1, %c0_i32_0 : i32
    scf.if %2 {
      %c0_62 = arith.constant 0 : index
      %c0_63 = arith.constant 0 : index
      %181 = vector.load %arg5[%c0_62, %c0_63] : memref<9x32xf32, #tpu.memory_space<vmem>>, vector<9x32xf32>
      %c0_64 = arith.constant 0 : index
      %c0_65 = arith.constant 0 : index
      %182 = vector.load %arg3[%c0_64, %c0_65] : memref<2x32xf32, #tpu.memory_space<vmem>>, vector<2x32xf32>
      %c0_66 = arith.constant 0 : index
      %c0_67 = arith.constant 0 : index
      %183 = vector.load %arg9[%c0_66, %c0_67] : memref<32x32xf32, #tpu.memory_space<vmem>>, vector<32x32xf32>
      %cst_68 = arith.constant dense<0.000000e+00> : vector<2x32xf32>
      %184 = tpu.matmul %182, %183, %cst_68 {dimension_numbers = #tpu.dot_dimension_numbers<[1], [0], [0], [1], [0, 0, 1, 1], [], []>} : vector<2x32xf32>, vector<32x32xf32>, vector<2x32xf32> -> vector<2x32xf32>
      %c0_69 = arith.constant 0 : index
      %c0_70 = arith.constant 0 : index
      %185 = vector.load %arg10[%c0_69, %c0_70] : memref<1x32xf32, #tpu.memory_space<vmem>>, vector<1x32xf32>
      %186 = vector.broadcast %185 : vector<1x32xf32> to vector<2x32xf32>
      %187 = arith.addf %184, %186 : vector<2x32xf32>
      %188 = arith.negf %187 : vector<2x32xf32>
      %189 = math.exp %188 : vector<2x32xf32>
      %cst_71 = arith.constant 1.000000e+00 : f32
      %190 = vector.broadcast %cst_71 : f32 to vector<2x32xf32>
      %191 = arith.addf %190, %189 : vector<2x32xf32>
      %192 = arith.divf %190, %191 : vector<2x32xf32>
      %193 = arith.mulf %187, %192 : vector<2x32xf32>
      %c0_72 = arith.constant 0 : index
      %c0_73 = arith.constant 0 : index
      %194 = vector.load %arg11[%c0_72, %c0_73] : memref<32x32xf32, #tpu.memory_space<vmem>>, vector<32x32xf32>
      %cst_74 = arith.constant dense<0.000000e+00> : vector<2x32xf32>
      %195 = tpu.matmul %193, %194, %cst_74 {dimension_numbers = #tpu.dot_dimension_numbers<[1], [0], [0], [1], [0, 0, 1, 1], [], []>} : vector<2x32xf32>, vector<32x32xf32>, vector<2x32xf32> -> vector<2x32xf32>
      %c0_75 = arith.constant 0 : index
      %c0_76 = arith.constant 0 : index
      %196 = vector.load %arg12[%c0_75, %c0_76] : memref<1x32xf32, #tpu.memory_space<vmem>>, vector<1x32xf32>
      %197 = vector.broadcast %196 : vector<1x32xf32> to vector<2x32xf32>
      %198 = arith.addf %195, %197 : vector<2x32xf32>
      %c0_77 = arith.constant 0 : index
      %c0_78 = arith.constant 0 : index
      %199 = vector.load %arg4[%c0_77, %c0_78] : memref<2x32xf32, #tpu.memory_space<vmem>>, vector<2x32xf32>
      %c0_79 = arith.constant 0 : index
      %c0_80 = arith.constant 0 : index
      %200 = vector.load %arg13[%c0_79, %c0_80] : memref<32x32xf32, #tpu.memory_space<vmem>>, vector<32x32xf32>
      %cst_81 = arith.constant dense<0.000000e+00> : vector<2x32xf32>
      %201 = tpu.matmul %199, %200, %cst_81 {dimension_numbers = #tpu.dot_dimension_numbers<[1], [0], [0], [1], [0, 0, 1, 1], [], []>} : vector<2x32xf32>, vector<32x32xf32>, vector<2x32xf32> -> vector<2x32xf32>
      %202 = arith.addf %198, %201 : vector<2x32xf32>
      %c0_82 = arith.constant 0 : index
      %c0_83 = arith.constant 0 : index
      %203 = vector.load %arg14[%c0_82, %c0_83] : memref<1x32xf32, #tpu.memory_space<vmem>>, vector<1x32xf32>
      %204 = vector.broadcast %203 : vector<1x32xf32> to vector<2x32xf32>
      %205 = arith.addf %202, %204 : vector<2x32xf32>
      %206 = vector.extract_strided_slice %181 {offsets = [0, 0], sizes = [1, 32], strides = [1, 1]} : vector<9x32xf32> to vector<1x32xf32>
      %207 = vector.broadcast %206 : vector<1x32xf32> to vector<2x32xf32>
      %208 = arith.addf %205, %207 : vector<2x32xf32>
      %c0_84 = arith.constant 0 : index
      %c0_85 = arith.constant 0 : index
      %c0_86 = arith.constant 0 : index
      %209 = vector.load %arg1[%c0_84, %c0_85, %c0_86] : memref<2x16x8xf32, #tpu.memory_space<vmem>>, vector<2x16x8xf32>
      %c0_87 = arith.constant 0 : index
      %c0_88 = arith.constant 0 : index
      %c0_89 = arith.constant 0 : index
      %210 = vector.load %arg2[%c0_87, %c0_88, %c0_89] : memref<2x26x8xf32, #tpu.memory_space<vmem>>, vector<2x26x8xf32>
      %211 = vector.extract_strided_slice %181 {offsets = [1, 0], sizes = [8, 32], strides = [1, 1]} : vector<9x32xf32> to vector<8x32xf32>
      %212 = vector.extract_strided_slice %209 {offsets = [0, 0, 0], sizes = [1, 16, 8], strides = [1, 1, 1]} : vector<2x16x8xf32> to vector<1x16x8xf32>
      %213 = vector.shape_cast %212 : vector<1x16x8xf32> to vector<16x8xf32>
      %c0_90 = arith.constant 0 : index
      %c0_91 = arith.constant 0 : index
      %214 = vector.load %arg6[%c0_90, %c0_91] : memref<16x32xf32, #tpu.memory_space<vmem>>, vector<16x32xf32>
      %cst_92 = arith.constant dense<0.000000e+00> : vector<8x32xf32>
      %215 = tpu.matmul %213, %214, %cst_92 {dimension_numbers = #tpu.dot_dimension_numbers<[0], [0], [1], [1], [0, 1, 1, 1], [], []>} : vector<16x8xf32>, vector<16x32xf32>, vector<8x32xf32> -> vector<8x32xf32>
      %216 = vector.extract_strided_slice %210 {offsets = [0, 0, 0], sizes = [1, 26, 8], strides = [1, 1, 1]} : vector<2x26x8xf32> to vector<1x26x8xf32>
      %217 = vector.shape_cast %216 : vector<1x26x8xf32> to vector<26x8xf32>
      %c0_93 = arith.constant 0 : index
      %c0_94 = arith.constant 0 : index
      %218 = vector.load %arg7[%c0_93, %c0_94] : memref<26x32xf32, #tpu.memory_space<vmem>>, vector<26x32xf32>
      %cst_95 = arith.constant dense<0.000000e+00> : vector<8x32xf32>
      %219 = tpu.matmul %217, %218, %cst_95 {dimension_numbers = #tpu.dot_dimension_numbers<[0], [0], [1], [1], [0, 1, 1, 1], [], []>} : vector<26x8xf32>, vector<26x32xf32>, vector<8x32xf32> -> vector<8x32xf32>
      %220 = arith.addf %215, %219 : vector<8x32xf32>
      %c0_96 = arith.constant 0 : index
      %c0_97 = arith.constant 0 : index
      %221 = vector.load %arg8[%c0_96, %c0_97] : memref<1x32xf32, #tpu.memory_space<vmem>>, vector<1x32xf32>
      %222 = vector.broadcast %221 : vector<1x32xf32> to vector<8x32xf32>
      %223 = arith.addf %220, %222 : vector<8x32xf32>
      %224 = arith.addf %223, %211 : vector<8x32xf32>
      %225 = vector.extract_strided_slice %208 {offsets = [0, 0], sizes = [1, 32], strides = [1, 1]} : vector<2x32xf32> to vector<1x32xf32>
      %226 = vector.extract_strided_slice %209 {offsets = [1, 0, 0], sizes = [1, 16, 8], strides = [1, 1, 1]} : vector<2x16x8xf32> to vector<1x16x8xf32>
      %227 = vector.shape_cast %226 : vector<1x16x8xf32> to vector<16x8xf32>
      %c0_98 = arith.constant 0 : index
      %c0_99 = arith.constant 0 : index
      %228 = vector.load %arg6[%c0_98, %c0_99] : memref<16x32xf32, #tpu.memory_space<vmem>>, vector<16x32xf32>
      %cst_100 = arith.constant dense<0.000000e+00> : vector<8x32xf32>
      %229 = tpu.matmul %227, %228, %cst_100 {dimension_numbers = #tpu.dot_dimension_numbers<[0], [0], [1], [1], [0, 1, 1, 1], [], []>} : vector<16x8xf32>, vector<16x32xf32>, vector<8x32xf32> -> vector<8x32xf32>
      %230 = vector.extract_strided_slice %210 {offsets = [1, 0, 0], sizes = [1, 26, 8], strides = [1, 1, 1]} : vector<2x26x8xf32> to vector<1x26x8xf32>
      %231 = vector.shape_cast %230 : vector<1x26x8xf32> to vector<26x8xf32>
      %c0_101 = arith.constant 0 : index
      %c0_102 = arith.constant 0 : index
      %232 = vector.load %arg7[%c0_101, %c0_102] : memref<26x32xf32, #tpu.memory_space<vmem>>, vector<26x32xf32>
      %cst_103 = arith.constant dense<0.000000e+00> : vector<8x32xf32>
      %233 = tpu.matmul %231, %232, %cst_103 {dimension_numbers = #tpu.dot_dimension_numbers<[0], [0], [1], [1], [0, 1, 1, 1], [], []>} : vector<26x8xf32>, vector<26x32xf32>, vector<8x32xf32> -> vector<8x32xf32>
      %234 = arith.addf %229, %233 : vector<8x32xf32>
      %c0_104 = arith.constant 0 : index
      %c0_105 = arith.constant 0 : index
      %235 = vector.load %arg8[%c0_104, %c0_105] : memref<1x32xf32, #tpu.memory_space<vmem>>, vector<1x32xf32>
      %236 = vector.broadcast %235 : vector<1x32xf32> to vector<8x32xf32>
      %237 = arith.addf %234, %236 : vector<8x32xf32>
      %238 = arith.addf %237, %211 : vector<8x32xf32>
      %239 = vector.extract_strided_slice %208 {offsets = [1, 0], sizes = [1, 32], strides = [1, 1]} : vector<2x32xf32> to vector<1x32xf32>
      %240 = tpu.concatenate %224, %225, %238, %239 in 0 : vector<8x32xf32>, vector<1x32xf32>, vector<8x32xf32>, vector<1x32xf32> -> vector<18x32xf32>
      %c0_106 = arith.constant 0 : index
      %c0_107 = arith.constant 0 : index
      %241 = vector.load %arg31[%c0_106, %c0_107] : memref<18x32xf32, #tpu.memory_space<vmem>>, vector<18x32xf32>
      tpu.vector_store %arg31[%c0_106, %c0_107], %240 {strides = array<i32>} : memref<18x32xf32, #tpu.memory_space<vmem>>, vector<18x32xf32>,
    } else {
    }
    %c0 = arith.constant 0 : index
    %c0_1 = arith.constant 0 : index
    %3 = vector.load %arg31[%c0, %c0_1] : memref<18x32xf32, #tpu.memory_space<vmem>>, vector<18x32xf32>
    %c0_2 = arith.constant 0 : index
    %c0_3 = arith.constant 0 : index
    %c0_4 = arith.constant 0 : index
    %4 = vector.load %arg15[%c0_2, %c0_3, %c0_4] : memref<1x32x96xf32, #tpu.memory_space<vmem>>, vector<1x32x96xf32>
    %5 = vector.shape_cast %4 : vector<1x32x96xf32> to vector<32x96xf32>
    %cst = arith.constant dense<0.000000e+00> : vector<18x96xf32>
    %6 = tpu.matmul %3, %5, %cst {dimension_numbers = #tpu.dot_dimension_numbers<[1], [0], [0], [1], [0, 0, 1, 1], [], []>} : vector<18x32xf32>, vector<32x96xf32>, vector<18x96xf32> -> vector<18x96xf32>
    %c0_5 = arith.constant 0 : index
    %c0_6 = arith.constant 0 : index
    %c0_7 = arith.constant 0 : index
    %7 = vector.load %arg16[%c0_5, %c0_6, %c0_7] : memref<1x1x96xf32, #tpu.memory_space<vmem>>, vector<1x1x96xf32>
    %8 = vector.shape_cast %7 : vector<1x1x96xf32> to vector<1x96xf32>
    %9 = vector.broadcast %8 : vector<1x96xf32> to vector<18x96xf32>
    %10 = arith.addf %6, %9 : vector<18x96xf32>
    %11 = vector.extract_strided_slice %10 {offsets = [0, 0], sizes = [9, 8], strides = [1, 1]} : vector<18x96xf32> to vector<9x8xf32>
    %12 = vector.extract_strided_slice %10 {offsets = [0, 8], sizes = [9, 8], strides = [1, 1]} : vector<18x96xf32> to vector<9x8xf32>
    %13 = vector.extract_strided_slice %10 {offsets = [0, 16], sizes = [9, 8], strides = [1, 1]} : vector<18x96xf32> to vector<9x8xf32>
    %14 = vector.extract_strided_slice %10 {offsets = [0, 24], sizes = [9, 8], strides = [1, 1]} : vector<18x96xf32> to vector<9x8xf32>
    %15 = vector.extract_strided_slice %10 {offsets = [9, 0], sizes = [9, 8], strides = [1, 1]} : vector<18x96xf32> to vector<9x8xf32>
    %16 = vector.extract_strided_slice %10 {offsets = [9, 8], sizes = [9, 8], strides = [1, 1]} : vector<18x96xf32> to vector<9x8xf32>
    %17 = vector.extract_strided_slice %10 {offsets = [9, 16], sizes = [9, 8], strides = [1, 1]} : vector<18x96xf32> to vector<9x8xf32>
    %18 = vector.extract_strided_slice %10 {offsets = [9, 24], sizes = [9, 8], strides = [1, 1]} : vector<18x96xf32> to vector<9x8xf32>
    %19 = vector.shape_cast %11 : vector<9x8xf32> to vector<1x9x8xf32>
    %20 = vector.shape_cast %12 : vector<9x8xf32> to vector<1x9x8xf32>
    %21 = vector.shape_cast %13 : vector<9x8xf32> to vector<1x9x8xf32>
    %22 = vector.shape_cast %14 : vector<9x8xf32> to vector<1x9x8xf32>
    %23 = vector.shape_cast %15 : vector<9x8xf32> to vector<1x9x8xf32>
    %24 = vector.shape_cast %16 : vector<9x8xf32> to vector<1x9x8xf32>
    %25 = vector.shape_cast %17 : vector<9x8xf32> to vector<1x9x8xf32>
    %26 = vector.shape_cast %18 : vector<9x8xf32> to vector<1x9x8xf32>
    %27 = tpu.concatenate %19, %20, %21, %22, %23, %24, %25, %26 in 0 : vector<1x9x8xf32>, vector<1x9x8xf32>, vector<1x9x8xf32>, vector<1x9x8xf32>, vector<1x9x8xf32>, vector<1x9x8xf32>, vector<1x9x8xf32>, vector<1x9x8xf32> -> vector<8x9x8xf32>
    %28 = vector.extract_strided_slice %10 {offsets = [0, 32], sizes = [9, 8], strides = [1, 1]} : vector<18x96xf32> to vector<9x8xf32>
    %29 = vector.extract_strided_slice %10 {offsets = [0, 40], sizes = [9, 8], strides = [1, 1]} : vector<18x96xf32> to vector<9x8xf32>
    %30 = vector.extract_strided_slice %10 {offsets = [0, 48], sizes = [9, 8], strides = [1, 1]} : vector<18x96xf32> to vector<9x8xf32>
    %31 = vector.extract_strided_slice %10 {offsets = [0, 56], sizes = [9, 8], strides = [1, 1]} : vector<18x96xf32> to vector<9x8xf32>
    %32 = vector.extract_strided_slice %10 {offsets = [9, 32], sizes = [9, 8], strides = [1, 1]} : vector<18x96xf32> to vector<9x8xf32>
    %33 = vector.extract_strided_slice %10 {offsets = [9, 40], sizes = [9, 8], strides = [1, 1]} : vector<18x96xf32> to vector<9x8xf32>
    %34 = vector.extract_strided_slice %10 {offsets = [9, 48], sizes = [9, 8], strides = [1, 1]} : vector<18x96xf32> to vector<9x8xf32>
    %35 = vector.extract_strided_slice %10 {offsets = [9, 56], sizes = [9, 8], strides = [1, 1]} : vector<18x96xf32> to vector<9x8xf32>
    %36 = vector.shape_cast %28 : vector<9x8xf32> to vector<1x9x8xf32>
    %37 = vector.shape_cast %29 : vector<9x8xf32> to vector<1x9x8xf32>
    %38 = vector.shape_cast %30 : vector<9x8xf32> to vector<1x9x8xf32>
    %39 = vector.shape_cast %31 : vector<9x8xf32> to vector<1x9x8xf32>
    %40 = vector.shape_cast %32 : vector<9x8xf32> to vector<1x9x8xf32>
    %41 = vector.shape_cast %33 : vector<9x8xf32> to vector<1x9x8xf32>
    %42 = vector.shape_cast %34 : vector<9x8xf32> to vector<1x9x8xf32>
    %43 = vector.shape_cast %35 : vector<9x8xf32> to vector<1x9x8xf32>
    %44 = tpu.concatenate %36, %37, %38, %39, %40, %41, %42, %43 in 0 : vector<1x9x8xf32>, vector<1x9x8xf32>, vector<1x9x8xf32>, vector<1x9x8xf32>, vector<1x9x8xf32>, vector<1x9x8xf32>, vector<1x9x8xf32>, vector<1x9x8xf32> -> vector<8x9x8xf32>
    %45 = vector.extract_strided_slice %10 {offsets = [0, 64], sizes = [9, 8], strides = [1, 1]} : vector<18x96xf32> to vector<9x8xf32>
    %46 = vector.extract_strided_slice %10 {offsets = [0, 72], sizes = [9, 8], strides = [1, 1]} : vector<18x96xf32> to vector<9x8xf32>
    %47 = vector.extract_strided_slice %10 {offsets = [0, 80], sizes = [9, 8], strides = [1, 1]} : vector<18x96xf32> to vector<9x8xf32>
    %48 = vector.extract_strided_slice %10 {offsets = [0, 88], sizes = [9, 8], strides = [1, 1]} : vector<18x96xf32> to vector<9x8xf32>
    %49 = vector.extract_strided_slice %10 {offsets = [9, 64], sizes = [9, 8], strides = [1, 1]} : vector<18x96xf32> to vector<9x8xf32>
    %50 = vector.extract_strided_slice %10 {offsets = [9, 72], sizes = [9, 8], strides = [1, 1]} : vector<18x96xf32> to vector<9x8xf32>
    %51 = vector.extract_strided_slice %10 {offsets = [9, 80], sizes = [9, 8], strides = [1, 1]} : vector<18x96xf32> to vector<9x8xf32>
    %52 = vector.extract_strided_slice %10 {offsets = [9, 88], sizes = [9, 8], strides = [1, 1]} : vector<18x96xf32> to vector<9x8xf32>
    %53 = vector.shape_cast %45 : vector<9x8xf32> to vector<1x9x8xf32>
    %54 = vector.shape_cast %46 : vector<9x8xf32> to vector<1x9x8xf32>
    %55 = vector.shape_cast %47 : vector<9x8xf32> to vector<1x9x8xf32>
    %56 = vector.shape_cast %48 : vector<9x8xf32> to vector<1x9x8xf32>
    %57 = vector.shape_cast %49 : vector<9x8xf32> to vector<1x9x8xf32>
    %58 = vector.shape_cast %50 : vector<9x8xf32> to vector<1x9x8xf32>
    %59 = vector.shape_cast %51 : vector<9x8xf32> to vector<1x9x8xf32>
    %60 = vector.shape_cast %52 : vector<9x8xf32> to vector<1x9x8xf32>
    %61 = tpu.concatenate %53, %54, %55, %56, %57, %58, %59, %60 in 0 : vector<1x9x8xf32>, vector<1x9x8xf32>, vector<1x9x8xf32>, vector<1x9x8xf32>, vector<1x9x8xf32>, vector<1x9x8xf32>, vector<1x9x8xf32>, vector<1x9x8xf32> -> vector<8x9x8xf32>
    %cst_8 = arith.constant dense<0.000000e+00> : vector<8x9x9xf32>
    %62 = tpu.matmul %27, %44, %cst_8 {dimension_numbers = #tpu.dot_dimension_numbers<[2], [2], [1], [1], [0, 0, 0, 1, 1, 1], [0], [0]>} : vector<8x9x8xf32>, vector<8x9x8xf32>, vector<8x9x9xf32> -> vector<8x9x9xf32>
    %cst_9 = arith.constant dense<0xFF800000> : vector<8x9xf32>
    %63 = vector.multi_reduction <maximumf>, %62, %cst_9 [2] : vector<8x9x9xf32> to vector<8x9xf32>
    %64 = vector.shape_cast %63 : vector<8x9xf32> to vector<8x9x1xf32>
    %65 = vector.broadcast %64 : vector<8x9x1xf32> to vector<8x9x9xf32>
    %66 = arith.subf %62, %65 : vector<8x9x9xf32>
    %67 = math.exp %66 : vector<8x9x9xf32>
    %cst_10 = arith.constant dense<0.000000e+00> : vector<8x9xf32>
    %68 = vector.multi_reduction <add>, %67, %cst_10 [2] : vector<8x9x9xf32> to vector<8x9xf32>
    %69 = vector.shape_cast %68 : vector<8x9xf32> to vector<8x9x1xf32>
    %70 = tpu.reciprocal %69 {approx = true} : vector<8x9x1xf32> -> vector<8x9x1xf32>
    %71 = vector.broadcast %70 : vector<8x9x1xf32> to vector<8x9x9xf32>
    %72 = arith.mulf %67, %71 : vector<8x9x9xf32>
    %cst_11 = arith.constant dense<0.000000e+00> : vector<8x9x8xf32>
    %73 = tpu.matmul %72, %61, %cst_11 {dimension_numbers = #tpu.dot_dimension_numbers<[2], [1], [1], [2], [0, 0, 0, 1, 1, 2], [0], [0]>} : vector<8x9x9xf32>, vector<8x9x8xf32>, vector<8x9x8xf32> -> vector<8x9x8xf32>
    %74 = vector.extract_strided_slice %73 {offsets = [0, 0, 0], sizes = [1, 9, 8], strides = [1, 1, 1]} : vector<8x9x8xf32> to vector<1x9x8xf32>
    %75 = vector.shape_cast %74 : vector<1x9x8xf32> to vector<9x8xf32>
    %76 = vector.extract_strided_slice %73 {offsets = [1, 0, 0], sizes = [1, 9, 8], strides = [1, 1, 1]} : vector<8x9x8xf32> to vector<1x9x8xf32>
    %77 = vector.shape_cast %76 : vector<1x9x8xf32> to vector<9x8xf32>
    %78 = vector.extract_strided_slice %73 {offsets = [2, 0, 0], sizes = [1, 9, 8], strides = [1, 1, 1]} : vector<8x9x8xf32> to vector<1x9x8xf32>
    %79 = vector.shape_cast %78 : vector<1x9x8xf32> to vector<9x8xf32>
    %80 = vector.extract_strided_slice %73 {offsets = [3, 0, 0], sizes = [1, 9, 8], strides = [1, 1, 1]} : vector<8x9x8xf32> to vector<1x9x8xf32>
    %81 = vector.shape_cast %80 : vector<1x9x8xf32> to vector<9x8xf32>
    %82 = tpu.concatenate %75, %77, %79, %81 in 1 : vector<9x8xf32>, vector<9x8xf32>, vector<9x8xf32>, vector<9x8xf32> -> vector<9x32xf32>
    %83 = vector.extract_strided_slice %73 {offsets = [4, 0, 0], sizes = [1, 9, 8], strides = [1, 1, 1]} : vector<8x9x8xf32> to vector<1x9x8xf32>
    %84 = vector.shape_cast %83 : vector<1x9x8xf32> to vector<9x8xf32>
    %85 = vector.extract_strided_slice %73 {offsets = [5, 0, 0], sizes = [1, 9, 8], strides = [1, 1, 1]} : vector<8x9x8xf32> to vector<1x9x8xf32>
    %86 = vector.shape_cast %85 : vector<1x9x8xf32> to vector<9x8xf32>
    %87 = vector.extract_strided_slice %73 {offsets = [6, 0, 0], sizes = [1, 9, 8], strides = [1, 1, 1]} : vector<8x9x8xf32> to vector<1x9x8xf32>
    %88 = vector.shape_cast %87 : vector<1x9x8xf32> to vector<9x8xf32>
    %89 = vector.extract_strided_slice %73 {offsets = [7, 0, 0], sizes = [1, 9, 8], strides = [1, 1, 1]} : vector<8x9x8xf32> to vector<1x9x8xf32>
    %90 = vector.shape_cast %89 : vector<1x9x8xf32> to vector<9x8xf32>
    %91 = tpu.concatenate %84, %86, %88, %90 in 1 : vector<9x8xf32>, vector<9x8xf32>, vector<9x8xf32>, vector<9x8xf32> -> vector<9x32xf32>
    %92 = tpu.concatenate %82, %91 in 0 : vector<9x32xf32>, vector<9x32xf32> -> vector<18x32xf32>
    %c0_12 = arith.constant 0 : index
    %c0_13 = arith.constant 0 : index
    %c0_14 = arith.constant 0 : index
    %93 = vector.load %arg17[%c0_12, %c0_13, %c0_14] : memref<1x32x32xf32, #tpu.memory_space<vmem>>, vector<1x32x32xf32>
    %94 = vector.shape_cast %93 : vector<1x32x32xf32> to vector<32x32xf32>
    %cst_15 = arith.constant dense<0.000000e+00> : vector<18x32xf32>
    %95 = tpu.matmul %92, %94, %cst_15 {dimension_numbers = #tpu.dot_dimension_numbers<[1], [0], [0], [1], [0, 0, 1, 1], [], []>} : vector<18x32xf32>, vector<32x32xf32>, vector<18x32xf32> -> vector<18x32xf32>
    %c0_16 = arith.constant 0 : index
    %c0_17 = arith.constant 0 : index
    %c0_18 = arith.constant 0 : index
    %96 = vector.load %arg18[%c0_16, %c0_17, %c0_18] : memref<1x1x32xf32, #tpu.memory_space<vmem>>, vector<1x1x32xf32>
    %97 = vector.shape_cast %96 : vector<1x1x32xf32> to vector<1x32xf32>
    %98 = vector.broadcast %97 : vector<1x32xf32> to vector<18x32xf32>
    %99 = arith.addf %95, %98 : vector<18x32xf32>
    %100 = arith.addf %3, %99 : vector<18x32xf32>
    %c0_19 = arith.constant 0 : index
    %c0_20 = arith.constant 0 : index
    %c0_21 = arith.constant 0 : index
    %101 = vector.load %arg19[%c0_19, %c0_20, %c0_21] : memref<1x1x32xf32, #tpu.memory_space<vmem>>, vector<1x1x32xf32>
    %102 = vector.shape_cast %101 : vector<1x1x32xf32> to vector<1x32xf32>
    %c0_22 = arith.constant 0 : index
    %c0_23 = arith.constant 0 : index
    %c0_24 = arith.constant 0 : index
    %103 = vector.load %arg20[%c0_22, %c0_23, %c0_24] : memref<1x1x32xf32, #tpu.memory_space<vmem>>, vector<1x1x32xf32>
    %104 = vector.shape_cast %103 : vector<1x1x32xf32> to vector<1x32xf32>
    %cst_25 = arith.constant dense<0.000000e+00> : vector<18xf32>
    %105 = vector.multi_reduction <add>, %100, %cst_25 [1] : vector<18x32xf32> to vector<18xf32>
    %106 = vector.shape_cast %105 : vector<18xf32> to vector<18x1xf32>
    %cst_26 = arith.constant 3.200000e+01 : f32
    %107 = vector.broadcast %cst_26 : f32 to vector<18x1xf32>
    %108 = arith.divf %106, %107 : vector<18x1xf32>
    %109 = vector.broadcast %108 : vector<18x1xf32> to vector<18x32xf32>
    %110 = arith.subf %100, %109 : vector<18x32xf32>
    %111 = arith.mulf %110, %110 : vector<18x32xf32>
    %cst_27 = arith.constant dense<0.000000e+00> : vector<18xf32>
    %112 = vector.multi_reduction <add>, %111, %cst_27 [1] : vector<18x32xf32> to vector<18xf32>
    %113 = vector.shape_cast %112 : vector<18xf32> to vector<18x1xf32>
    %cst_28 = arith.constant 3.200000e+01 : f32
    %114 = vector.broadcast %cst_28 : f32 to vector<18x1xf32>
    %115 = arith.divf %113, %114 : vector<18x1xf32>
    %cst_29 = arith.constant 9.99999974E-6 : f32
    %116 = vector.broadcast %cst_29 : f32 to vector<18x1xf32>
    %117 = arith.addf %115, %116 : vector<18x1xf32>
    %118 = math.rsqrt %117 : vector<18x1xf32>
    %119 = vector.broadcast %118 : vector<18x1xf32> to vector<18x32xf32>
    %120 = arith.mulf %110, %119 : vector<18x32xf32>
    %121 = vector.broadcast %102 : vector<1x32xf32> to vector<18x32xf32>
    %122 = arith.mulf %120, %121 : vector<18x32xf32>
    %123 = vector.broadcast %104 : vector<1x32xf32> to vector<18x32xf32>
    %124 = arith.addf %122, %123 : vector<18x32xf32>
    %c0_30 = arith.constant 0 : index
    %c0_31 = arith.constant 0 : index
    %c0_32 = arith.constant 0 : index
    %125 = vector.load %arg21[%c0_30, %c0_31, %c0_32] : memref<1x32x64xf32, #tpu.memory_space<vmem>>, vector<1x32x64xf32>
    %126 = vector.shape_cast %125 : vector<1x32x64xf32> to vector<32x64xf32>
    %cst_33 = arith.constant dense<0.000000e+00> : vector<18x64xf32>
    %127 = tpu.matmul %124, %126, %cst_33 {dimension_numbers = #tpu.dot_dimension_numbers<[1], [0], [0], [1], [0, 0, 1, 1], [], []>} : vector<18x32xf32>, vector<32x64xf32>, vector<18x64xf32> -> vector<18x64xf32>
    %c0_34 = arith.constant 0 : index
    %c0_35 = arith.constant 0 : index
    %c0_36 = arith.constant 0 : index
    %128 = vector.load %arg22[%c0_34, %c0_35, %c0_36] : memref<1x1x64xf32, #tpu.memory_space<vmem>>, vector<1x1x64xf32>
    %129 = vector.shape_cast %128 : vector<1x1x64xf32> to vector<1x64xf32>
    %130 = vector.broadcast %129 : vector<1x64xf32> to vector<18x64xf32>
    %131 = arith.addf %127, %130 : vector<18x64xf32>
    %cst_37 = arith.constant 5.000000e-01 : f32
    %132 = vector.broadcast %cst_37 : f32 to vector<18x64xf32>
    %133 = arith.mulf %132, %131 : vector<18x64xf32>
    %cst_38 = arith.constant 4.471500e-02 : f32
    %134 = vector.broadcast %cst_38 : f32 to vector<18x64xf32>
    %135 = arith.mulf %134, %131 : vector<18x64xf32>
    %136 = arith.mulf %135, %131 : vector<18x64xf32>
    %137 = arith.mulf %136, %131 : vector<18x64xf32>
    %138 = arith.addf %131, %137 : vector<18x64xf32>
    %cst_39 = arith.constant 0.797884583 : f32
    %139 = vector.broadcast %cst_39 : f32 to vector<18x64xf32>
    %140 = arith.mulf %139, %138 : vector<18x64xf32>
    %141 = math.tanh %140 : vector<18x64xf32>
    %cst_40 = arith.constant 1.000000e+00 : f32
    %142 = vector.broadcast %cst_40 : f32 to vector<18x64xf32>
    %143 = arith.addf %142, %141 : vector<18x64xf32>
    %144 = arith.mulf %133, %143 : vector<18x64xf32>
    %c0_41 = arith.constant 0 : index
    %c0_42 = arith.constant 0 : index
    %c0_43 = arith.constant 0 : index
    %145 = vector.load %arg23[%c0_41, %c0_42, %c0_43] : memref<1x64x32xf32, #tpu.memory_space<vmem>>, vector<1x64x32xf32>
    %146 = vector.shape_cast %145 : vector<1x64x32xf32> to vector<64x32xf32>
    %cst_44 = arith.constant dense<0.000000e+00> : vector<18x32xf32>
    %147 = tpu.matmul %144, %146, %cst_44 {dimension_numbers = #tpu.dot_dimension_numbers<[1], [0], [0], [1], [0, 0, 1, 1], [], []>} : vector<18x64xf32>, vector<64x32xf32>, vector<18x32xf32> -> vector<18x32xf32>
    %c0_45 = arith.constant 0 : index
    %c0_46 = arith.constant 0 : index
    %c0_47 = arith.constant 0 : index
    %148 = vector.load %arg24[%c0_45, %c0_46, %c0_47] : memref<1x1x32xf32, #tpu.memory_space<vmem>>, vector<1x1x32xf32>
    %149 = vector.shape_cast %148 : vector<1x1x32xf32> to vector<1x32xf32>
    %150 = vector.broadcast %149 : vector<1x32xf32> to vector<18x32xf32>
    %151 = arith.addf %147, %150 : vector<18x32xf32>
    %152 = arith.addf %124, %151 : vector<18x32xf32>
    %c0_48 = arith.constant 0 : index
    %c0_49 = arith.constant 0 : index
    %c0_50 = arith.constant 0 : index
    %153 = vector.load %arg25[%c0_48, %c0_49, %c0_50] : memref<1x1x32xf32, #tpu.memory_space<vmem>>, vector<1x1x32xf32>
    %154 = vector.shape_cast %153 : vector<1x1x32xf32> to vector<1x32xf32>
    %c0_51 = arith.constant 0 : index
    %c0_52 = arith.constant 0 : index
    %c0_53 = arith.constant 0 : index
    %155 = vector.load %arg26[%c0_51, %c0_52, %c0_53] : memref<1x1x32xf32, #tpu.memory_space<vmem>>, vector<1x1x32xf32>
    %156 = vector.shape_cast %155 : vector<1x1x32xf32> to vector<1x32xf32>
    %cst_54 = arith.constant dense<0.000000e+00> : vector<18xf32>
    %157 = vector.multi_reduction <add>, %152, %cst_54 [1] : vector<18x32xf32> to vector<18xf32>
    %158 = vector.shape_cast %157 : vector<18xf32> to vector<18x1xf32>
    %cst_55 = arith.constant 3.200000e+01 : f32
    %159 = vector.broadcast %cst_55 : f32 to vector<18x1xf32>
    %160 = arith.divf %158, %159 : vector<18x1xf32>
    %161 = vector.broadcast %160 : vector<18x1xf32> to vector<18x32xf32>
    %162 = arith.subf %152, %161 : vector<18x32xf32>
    %163 = arith.mulf %162, %162 : vector<18x32xf32>
    %cst_56 = arith.constant dense<0.000000e+00> : vector<18xf32>
    %164 = vector.multi_reduction <add>, %163, %cst_56 [1] : vector<18x32xf32> to vector<18xf32>
    %165 = vector.shape_cast %164 : vector<18xf32> to vector<18x1xf32>
    %cst_57 = arith.constant 3.200000e+01 : f32
    %166 = vector.broadcast %cst_57 : f32 to vector<18x1xf32>
    %167 = arith.divf %165, %166 : vector<18x1xf32>
    %cst_58 = arith.constant 9.99999974E-6 : f32
    %168 = vector.broadcast %cst_58 : f32 to vector<18x1xf32>
    %169 = arith.addf %167, %168 : vector<18x1xf32>
    %170 = math.rsqrt %169 : vector<18x1xf32>
    %171 = vector.broadcast %170 : vector<18x1xf32> to vector<18x32xf32>
    %172 = arith.mulf %162, %171 : vector<18x32xf32>
    %173 = vector.broadcast %154 : vector<1x32xf32> to vector<18x32xf32>
    %174 = arith.mulf %172, %173 : vector<18x32xf32>
    %175 = vector.broadcast %156 : vector<1x32xf32> to vector<18x32xf32>
    %176 = arith.addf %174, %175 : vector<18x32xf32>
    %c0_59 = arith.constant 0 : index
    %c0_60 = arith.constant 0 : index
    %177 = vector.load %arg31[%c0_59, %c0_60] : memref<18x32xf32, #tpu.memory_space<vmem>>, vector<18x32xf32>
    tpu.vector_store %arg31[%c0_59, %c0_60], %176 {strides = array<i32>} : memref<18x32xf32, #tpu.memory_space<vmem>>, vector<18x32xf32>,
    %c1_i32 = arith.constant 1 : i32
    %178 = arith.cmpi eq, %arg0, %c1_i32 : i32
    %179 = arith.extui %178 : i1 to i32
    %c0_i32_61 = arith.constant 0 : i32
    %180 = arith.cmpi ne, %179, %c0_i32_61 : i32
    scf.if %180 {
      %c0_62 = arith.constant 0 : index
      %c0_63 = arith.constant 0 : index
      %181 = vector.load %arg27[%c0_62, %c0_63] : memref<32x128xf32, #tpu.memory_space<vmem>>, vector<32x128xf32>
      %cst_64 = arith.constant dense<0.000000e+00> : vector<18x128xf32>
      %182 = tpu.matmul %176, %181, %cst_64 {dimension_numbers = #tpu.dot_dimension_numbers<[1], [0], [0], [1], [0, 0, 1, 1], [], []>} : vector<18x32xf32>, vector<32x128xf32>, vector<18x128xf32> -> vector<18x128xf32>
      %c0_65 = arith.constant 0 : index
      %c0_66 = arith.constant 0 : index
      %183 = vector.load %arg29[%c0_65, %c0_66] : memref<8x128xf32, #tpu.memory_space<vmem>>, vector<8x128xf32>
      %184 = vector.extract_strided_slice %182 {offsets = [0, 0], sizes = [8, 128], strides = [1, 1]} : vector<18x128xf32> to vector<8x128xf32>
      %185 = arith.mulf %184, %183 : vector<8x128xf32>
      %cst_67 = arith.constant dense<0.000000e+00> : vector<128xf32>
      %186 = vector.multi_reduction <add>, %185, %cst_67 [0] : vector<8x128xf32> to vector<128xf32>
      %187 = vector.shape_cast %186 : vector<128xf32> to vector<1x128xf32>
      %c0_68 = arith.constant 0 : index
      %c0_69 = arith.constant 0 : index
      %188 = vector.load %arg28[%c0_68, %c0_69] : memref<1x128xf32, #tpu.memory_space<vmem>>, vector<1x128xf32>
      %189 = arith.addf %187, %188 : vector<1x128xf32>
      %190 = vector.extract_strided_slice %182 {offsets = [9, 0], sizes = [8, 128], strides = [1, 1]} : vector<18x128xf32> to vector<8x128xf32>
      %191 = arith.mulf %190, %183 : vector<8x128xf32>
      %cst_70 = arith.constant dense<0.000000e+00> : vector<128xf32>
      %192 = vector.multi_reduction <add>, %191, %cst_70 [0] : vector<8x128xf32> to vector<128xf32>
      %193 = vector.shape_cast %192 : vector<128xf32> to vector<1x128xf32>
      %c0_71 = arith.constant 0 : index
      %c0_72 = arith.constant 0 : index
      %194 = vector.load %arg28[%c0_71, %c0_72] : memref<1x128xf32, #tpu.memory_space<vmem>>, vector<1x128xf32>
      %195 = arith.addf %193, %194 : vector<1x128xf32>
      %196 = tpu.concatenate %189, %195 in 0 : vector<1x128xf32>, vector<1x128xf32> -> vector<2x128xf32>
      %c0_73 = arith.constant 0 : index
      %c0_74 = arith.constant 0 : index
      %197 = vector.load %arg30[%c0_73, %c0_74] : memref<2x128xf32, #tpu.memory_space<vmem>>, vector<2x128xf32>
      tpu.vector_store %arg30[%c0_73, %c0_74], %196 {strides = array<i32>} : memref<2x128xf32, #tpu.memory_space<vmem>>, vector<2x128xf32>,
    } else {
    }
    return
  }
  func.func @transform_0(%arg0: i32) -> (i32, i32, i32) {
    %c0_i32 = arith.constant 0 : i32
    %c0_i32_0 = arith.constant 0 : i32
    %c0_i32_1 = arith.constant 0 : i32
    %c0_i32_2 = arith.constant 0 : i32
    return %c0_i32, %c0_i32_0, %c0_i32_1 : i32, i32, i32
  }
  func.func @transform_1(%arg0: i32) -> (i32, i32, i32) {
    %c0_i32 = arith.constant 0 : i32
    %c0_i32_0 = arith.constant 0 : i32
    %c0_i32_1 = arith.constant 0 : i32
    %c0_i32_2 = arith.constant 0 : i32
    return %c0_i32, %c0_i32_0, %c0_i32_1 : i32, i32, i32
  }
  func.func @transform_2(%arg0: i32) -> (i32, i32) {
    %c0_i32 = arith.constant 0 : i32
    %c0_i32_0 = arith.constant 0 : i32
    %c0_i32_1 = arith.constant 0 : i32
    return %c0_i32, %c0_i32_0 : i32, i32
  }
  func.func @transform_3(%arg0: i32) -> (i32, i32) {
    %c0_i32 = arith.constant 0 : i32
    %c0_i32_0 = arith.constant 0 : i32
    %c0_i32_1 = arith.constant 0 : i32
    return %c0_i32, %c0_i32_0 : i32, i32
  }
  func.func @transform_4(%arg0: i32) -> (i32, i32) {
    %c0_i32 = arith.constant 0 : i32
    %c0_i32_0 = arith.constant 0 : i32
    %c0_i32_1 = arith.constant 0 : i32
    return %c0_i32, %c0_i32_0 : i32, i32
  }
  func.func @transform_5(%arg0: i32) -> (i32, i32) {
    %c0_i32 = arith.constant 0 : i32
    %c0_i32_0 = arith.constant 0 : i32
    %c0_i32_1 = arith.constant 0 : i32
    return %c0_i32, %c0_i32_0 : i32, i32
  }
  func.func @transform_6(%arg0: i32) -> (i32, i32) {
    %c0_i32 = arith.constant 0 : i32
    %c0_i32_0 = arith.constant 0 : i32
    %c0_i32_1 = arith.constant 0 : i32
    return %c0_i32, %c0_i32_0 : i32, i32
  }
  func.func @transform_7(%arg0: i32) -> (i32, i32) {
    %c0_i32 = arith.constant 0 : i32
    %c0_i32_0 = arith.constant 0 : i32
    %c0_i32_1 = arith.constant 0 : i32
    return %c0_i32, %c0_i32_0 : i32, i32
  }
  func.func @transform_8(%arg0: i32) -> (i32, i32) {
    %c0_i32 = arith.constant 0 : i32
    %c0_i32_0 = arith.constant 0 : i32
    %c0_i32_1 = arith.constant 0 : i32
    return %c0_i32, %c0_i32_0 : i32, i32
  }
  func.func @transform_9(%arg0: i32) -> (i32, i32) {
    %c0_i32 = arith.constant 0 : i32
    %c0_i32_0 = arith.constant 0 : i32
    %c0_i32_1 = arith.constant 0 : i32
    return %c0_i32, %c0_i32_0 : i32, i32
  }
  func.func @transform_10(%arg0: i32) -> (i32, i32) {
    %c0_i32 = arith.constant 0 : i32
    %c0_i32_0 = arith.constant 0 : i32
    %c0_i32_1 = arith.constant 0 : i32
    return %c0_i32, %c0_i32_0 : i32, i32
  }
  func.func @transform_11(%arg0: i32) -> (i32, i32) {
    %c0_i32 = arith.constant 0 : i32
    %c0_i32_0 = arith.constant 0 : i32
    %c0_i32_1 = arith.constant 0 : i32
    return %c0_i32, %c0_i32_0 : i32, i32
  }
  func.func @transform_12(%arg0: i32) -> (i32, i32) {
    %c0_i32 = arith.constant 0 : i32
    %c0_i32_0 = arith.constant 0 : i32
    %c0_i32_1 = arith.constant 0 : i32
    return %c0_i32, %c0_i32_0 : i32, i32
  }
  func.func @transform_13(%arg0: i32) -> (i32, i32) {
    %c0_i32 = arith.constant 0 : i32
    %c0_i32_0 = arith.constant 0 : i32
    %c0_i32_1 = arith.constant 0 : i32
    return %c0_i32, %c0_i32_0 : i32, i32
  }
  func.func @transform_14(%arg0: i32) -> (i32, i32, i32) {
    %c0_i32 = arith.constant 0 : i32
    %c0_i32_0 = arith.constant 0 : i32
    %c0_i32_1 = arith.constant 0 : i32
    return %arg0, %c0_i32, %c0_i32_0 : i32, i32, i32
  }
  func.func @transform_15(%arg0: i32) -> (i32, i32, i32) {
    %c0_i32 = arith.constant 0 : i32
    %c0_i32_0 = arith.constant 0 : i32
    %c0_i32_1 = arith.constant 0 : i32
    return %arg0, %c0_i32, %c0_i32_0 : i32, i32, i32
  }
  func.func @transform_16(%arg0: i32) -> (i32, i32, i32) {
    %c0_i32 = arith.constant 0 : i32
    %c0_i32_0 = arith.constant 0 : i32
    %c0_i32_1 = arith.constant 0 : i32
    return %arg0, %c0_i32, %c0_i32_0 : i32, i32, i32
  }
  func.func @transform_17(%arg0: i32) -> (i32, i32, i32) {
    %c0_i32 = arith.constant 0 : i32
    %c0_i32_0 = arith.constant 0 : i32
    %c0_i32_1 = arith.constant 0 : i32
    return %arg0, %c0_i32, %c0_i32_0 : i32, i32, i32
  }
  func.func @transform_18(%arg0: i32) -> (i32, i32, i32) {
    %c0_i32 = arith.constant 0 : i32
    %c0_i32_0 = arith.constant 0 : i32
    %c0_i32_1 = arith.constant 0 : i32
    return %arg0, %c0_i32, %c0_i32_0 : i32, i32, i32
  }
  func.func @transform_19(%arg0: i32) -> (i32, i32, i32) {
    %c0_i32 = arith.constant 0 : i32
    %c0_i32_0 = arith.constant 0 : i32
    %c0_i32_1 = arith.constant 0 : i32
    return %arg0, %c0_i32, %c0_i32_0 : i32, i32, i32
  }
  func.func @transform_20(%arg0: i32) -> (i32, i32, i32) {
    %c0_i32 = arith.constant 0 : i32
    %c0_i32_0 = arith.constant 0 : i32
    %c0_i32_1 = arith.constant 0 : i32
    return %arg0, %c0_i32, %c0_i32_0 : i32, i32, i32
  }
  func.func @transform_21(%arg0: i32) -> (i32, i32, i32) {
    %c0_i32 = arith.constant 0 : i32
    %c0_i32_0 = arith.constant 0 : i32
    %c0_i32_1 = arith.constant 0 : i32
    return %arg0, %c0_i32, %c0_i32_0 : i32, i32, i32
  }
  func.func @transform_22(%arg0: i32) -> (i32, i32, i32) {
    %c0_i32 = arith.constant 0 : i32
    %c0_i32_0 = arith.constant 0 : i32
    %c0_i32_1 = arith.constant 0 : i32
    return %arg0, %c0_i32, %c0_i32_0 : i32, i32, i32
  }
  func.func @transform_23(%arg0: i32) -> (i32, i32, i32) {
    %c0_i32 = arith.constant 0 : i32
    %c0_i32_0 = arith.constant 0 : i32
    %c0_i32_1 = arith.constant 0 : i32
    return %arg0, %c0_i32, %c0_i32_0 : i32, i32, i32
  }
  func.func @transform_24(%arg0: i32) -> (i32, i32, i32) {
    %c0_i32 = arith.constant 0 : i32
    %c0_i32_0 = arith.constant 0 : i32
    %c0_i32_1 = arith.constant 0 : i32
    return %arg0, %c0_i32, %c0_i32_0 : i32, i32, i32
  }
  func.func @transform_25(%arg0: i32) -> (i32, i32, i32) {
    %c0_i32 = arith.constant 0 : i32
    %c0_i32_0 = arith.constant 0 : i32
    %c0_i32_1 = arith.constant 0 : i32
    return %arg0, %c0_i32, %c0_i32_0 : i32, i32, i32
  }
  func.func @transform_26(%arg0: i32) -> (i32, i32) {
    %c0_i32 = arith.constant 0 : i32
    %c0_i32_0 = arith.constant 0 : i32
    %c0_i32_1 = arith.constant 0 : i32
    return %c0_i32, %c0_i32_0 : i32, i32
  }
  func.func @transform_27(%arg0: i32) -> (i32, i32) {
    %c0_i32 = arith.constant 0 : i32
    %c0_i32_0 = arith.constant 0 : i32
    %c0_i32_1 = arith.constant 0 : i32
    return %c0_i32, %c0_i32_0 : i32, i32
  }
  func.func @transform_28(%arg0: i32) -> (i32, i32) {
    %c0_i32 = arith.constant 0 : i32
    %c0_i32_0 = arith.constant 0 : i32
    %c0_i32_1 = arith.constant 0 : i32
    return %c0_i32, %c0_i32_0 : i32, i32
  }
  func.func @transform_29(%arg0: i32) -> (i32, i32) {
    %c0_i32 = arith.constant 0 : i32
    %c0_i32_0 = arith.constant 0 : i32
    %c0_i32_1 = arith.constant 0 : i32
    return %c0_i32, %c0_i32_0 : i32, i32
  }
}

</mosaic_0001>

<llo_original>
// kernel: squeeze.1
$region0: #{squeeze.1}
  %s0 = inlined_call_operand.vmem [shape: f32[2,16,1,2], index: 0, kind: input, shape index: {}]
  %s1 = inlined_call_operand.vmem [shape: f32[2,32], index: 1, kind: output, shape index: {}]
  $region1: #{squeeze.1} parent=0
    #allocation0 [shape = 'u8[4096]{0}', space=vmem, size = 0x1000, scoped, tag = 'scoped mem for output reshape']
    %s2 = smov 3
    %v3 = vld [vmem:[%s0] ss:$16 sm:%s2]
    %vm4 = vcmask 15360
    %5 = vst.msk [vmem:[#allocation0] sm:$0x3] %vm4, %v3
    %s6 = scalar_lea.vmem %s0, 15
    %s7 = smov 3
    %v8 = vld [vmem:[%s6] ss:$16 sm:%s7]
    %9 = vrot.lane.b32.xlu0 %v8, 30
    %v10 = vpop.permute.xlu0 %9
    %vm11 = vcmask 261360
    %12 = vst.msk [vmem:[#allocation0] sm:$0x3] %vm11, %v10
    %s13 = scalar_lea.vmem %s0, 14
    %s14 = smov 3
    %v15 = vld [vmem:[%s13] ss:$16 sm:%s14]
    %16 = vrot.lane.b32.xlu0 %v15, 28
    %v17 = vpop.permute.xlu0 %16
    %vm18 = vcmask 244960
    %19 = vst.msk [vmem:[#allocation0] sm:$0x3] %vm18, %v17
    %s20 = scalar_lea.vmem %s0, 13
    %s21 = smov 3
    %v22 = vld [vmem:[%s20] ss:$16 sm:%s21]
    %23 = vrot.lane.b32.xlu0 %v22, 26
    %v24 = vpop.permute.xlu0 %23
    %vm25 = vcmask 228560
    %26 = vst.msk [vmem:[#allocation0] sm:$0x3] %vm25, %v24
    %s27 = scalar_lea.vmem %s0, 12
    %s28 = smov 3
    %v29 = vld [vmem:[%s27] ss:$16 sm:%s28]
    %30 = vrot.lane.b32.xlu0 %v29, 24
    %v31 = vpop.permute.xlu0 %30
    %vm32 = vcmask 212160
    %33 = vst.msk [vmem:[#allocation0] sm:$0x3] %vm32, %v31
    %s34 = scalar_lea.vmem %s0, 11
    %s35 = smov 3
    %v36 = vld [vmem:[%s34] ss:$16 sm:%s35]
    %37 = vrot.lane.b32.xlu0 %v36, 22
    %v38 = vpop.permute.xlu0 %37
    %vm39 = vcmask 195760
    %40 = vst.msk [vmem:[#allocation0] sm:$0x3] %vm39, %v38
    %s41 = scalar_lea.vmem %s0, 10
    %s42 = smov 3
    %v43 = vld [vmem:[%s41] ss:$16 sm:%s42]
    %44 = vrot.lane.b32.xlu0 %v43, 20
    %v45 = vpop.permute.xlu0 %44
    %vm46 = vcmask 179360
    %47 = vst.msk [vmem:[#allocation0] sm:$0x3] %vm46, %v45
    %s48 = scalar_lea.vmem %s0, 9
    %s49 = smov 3
    %v50 = vld [vmem:[%s48] ss:$16 sm:%s49]
    %51 = vrot.lane.b32.xlu0 %v50, 18
    %v52 = vpop.permute.xlu0 %51
    %vm53 = vcmask 162960
    %54 = vst.msk [vmem:[#allocation0] sm:$0x3] %vm53, %v52
    %s55 = scalar_lea.vmem %s0, 8
    %s56 = smov 3
    %v57 = vld [vmem:[%s55] ss:$16 sm:%s56]
    %58 = vrot.lane.b32.xlu0 %v57, 16
    %v59 = vpop.permute.xlu0 %58
    %vm60 = vcmask 146560
    %61 = vst.msk [vmem:[#allocation0] sm:$0x3] %vm60, %v59
    %s62 = scalar_lea.vmem %s0, 7
    %s63 = smov 3
    %v64 = vld [vmem:[%s62] ss:$16 sm:%s63]
    %65 = vrot.lane.b32.xlu0 %v64, 14
    %v66 = vpop.permute.xlu0 %65
    %vm67 = vcmask 130160
    %68 = vst.msk [vmem:[#allocation0] sm:$0x3] %vm67, %v66
    %s69 = scalar_lea.vmem %s0, 6
    %s70 = smov 3
    %v71 = vld [vmem:[%s69] ss:$16 sm:%s70]
    %72 = vrot.lane.b32.xlu0 %v71, 12
    %v73 = vpop.permute.xlu0 %72
    %vm74 = vcmask 113760
    %75 = vst.msk [vmem:[#allocation0] sm:$0x3] %vm74, %v73
    %s76 = scalar_lea.vmem %s0, 5
    %s77 = smov 3
    %v78 = vld [vmem:[%s76] ss:$16 sm:%s77]
    %79 = vrot.lane.b32.xlu0 %v78, 10
    %v80 = vpop.permute.xlu0 %79
    %vm81 = vcmask 97360
    %82 = vst.msk [vmem:[#allocation0] sm:$0x3] %vm81, %v80
    %s83 = scalar_lea.vmem %s0, 4
    %s84 = smov 3
    %v85 = vld [vmem:[%s83] ss:$16 sm:%s84]
    %86 = vrot.lane.b32.xlu0 %v85, 8
    %v87 = vpop.permute.xlu0 %86
    %vm88 = vcmask 80960
    %89 = vst.msk [vmem:[#allocation0] sm:$0x3] %vm88, %v87
    %s90 = scalar_lea.vmem %s0, 3
    %s91 = smov 3
    %v92 = vld [vmem:[%s90] ss:$16 sm:%s91]
    %93 = vrot.lane.b32.xlu0 %v92, 6
    %v94 = vpop.permute.xlu0 %93
    %vm95 = vcmask 64560
    %96 = vst.msk [vmem:[#allocation0] sm:$0x3] %vm95, %v94
    %s97 = scalar_lea.vmem %s0, 2
    %s98 = smov 3
    %v99 = vld [vmem:[%s97] ss:$16 sm:%s98]
    %100 = vrot.lane.b32.xlu0 %v99, 4
    %v101 = vpop.permute.xlu0 %100
    %vm102 = vcmask 48160
    %103 = vst.msk [vmem:[#allocation0] sm:$0x3] %vm102, %v101
    %s104 = scalar_lea.vmem %s0, 1
    %s105 = smov 3
    %v106 = vld [vmem:[%s104] ss:$16 sm:%s105]
    %107 = vrot.lane.b32.xlu0 %v106, 2
    %v108 = vpop.permute.xlu0 %107
    %vm109 = vcmask 31760
    %110 = vst.msk [vmem:[#allocation0] sm:$0x3] %vm109, %v108
    %s112 = sshll.u32 1, 2
    %s113 = ssub.s32 %s112, 1
    %v115 = vld [vmem:[#allocation0] sm:%s113]
    %s116 = sshll.u32 1, 2
    %s117 = ssub.s32 %s116, 1
    %118 = vst [vmem:[%s1] sm:%s117] %v115

// kernel: run.1
$region0: #{run.1}
  #allocation0 [shape = 'u32[]', space=smem, size = 0x4, offset = 0x4, fixed_abs, tag = 'smem constant byte address 0x4 - core index']
  #allocation1 [shape = 'u32[144,128]{1,0:T(1,128)}', space=vmem, size = 0x12000, scoped, tag = 'internal scratch']
  #allocation2 [shape = 'f32[18,32]{1,0:T(8,128)}', space=vmem, size = 0x3000, scoped, tag = 'scratch operand']
  %s0 = inlined_call_operand.smem [shape: u32[30], index: -1, kind: input, shape index: {}]
  %s1 = sld [smem:[%s0]]
  %s2 = scalar_lea.smem %s0, 1
  %s3 = sld [smem:[%s2]]
  %s4 = scalar_lea.smem %s0, 2
  %s5 = sld [smem:[%s4]]
  %s6 = scalar_lea.smem %s0, 3
  %s7 = sld [smem:[%s6]]
  %s8 = scalar_lea.smem %s0, 4
  %s9 = sld [smem:[%s8]]
  %s10 = scalar_lea.smem %s0, 5
  %s11 = sld [smem:[%s10]]
  %s12 = scalar_lea.smem %s0, 6
  %s13 = sld [smem:[%s12]]
  %s14 = scalar_lea.smem %s0, 7
  %s15 = sld [smem:[%s14]]
  %s16 = scalar_lea.smem %s0, 8
  %s17 = sld [smem:[%s16]]
  %s18 = scalar_lea.smem %s0, 9
  %s19 = sld [smem:[%s18]]
  %s20 = scalar_lea.smem %s0, 10
  %s21 = sld [smem:[%s20]]
  %s22 = scalar_lea.smem %s0, 11
  %s23 = sld [smem:[%s22]]
  %s24 = scalar_lea.smem %s0, 12
  %s25 = sld [smem:[%s24]]
  %s26 = scalar_lea.smem %s0, 13
  %s27 = sld [smem:[%s26]]
  %s28 = scalar_lea.smem %s0, 14
  %s29 = sld [smem:[%s28]]
  %s30 = scalar_lea.smem %s0, 15
  %s31 = sld [smem:[%s30]]
  %s32 = scalar_lea.smem %s0, 16
  %s33 = sld [smem:[%s32]]
  %s34 = scalar_lea.smem %s0, 17
  %s35 = sld [smem:[%s34]]
  %s36 = scalar_lea.smem %s0, 18
  %s37 = sld [smem:[%s36]]
  %s38 = scalar_lea.smem %s0, 19
  %s39 = sld [smem:[%s38]]
  %s40 = scalar_lea.smem %s0, 20
  %s41 = sld [smem:[%s40]]
  %s42 = scalar_lea.smem %s0, 21
  %s43 = sld [smem:[%s42]]
  %s44 = scalar_lea.smem %s0, 22
  %s45 = sld [smem:[%s44]]
  %s46 = scalar_lea.smem %s0, 23
  %s47 = sld [smem:[%s46]]
  %s48 = scalar_lea.smem %s0, 24
  %s49 = sld [smem:[%s48]]
  %s50 = scalar_lea.smem %s0, 25
  %s51 = sld [smem:[%s50]]
  %s52 = scalar_lea.smem %s0, 26
  %s53 = sld [smem:[%s52]]
  %s54 = scalar_lea.smem %s0, 27
  %s55 = sld [smem:[%s54]]
  %s56 = scalar_lea.smem %s0, 28
  %s57 = sld [smem:[%s56]]
  %s58 = scalar_lea.smem %s0, 29
  %s59 = sld [smem:[%s58]]
  %s60 = sld [smem:[#allocation0]]
  $region169: #{run.1} parent=0
    _
  %s62 = ssub.s32 1, %s60
  %s63 = scalar_select 0, %s62, %s60
  $region1: #{run.1} parent=0
    #allocation3 [shape = 'u8[1024]{0}', space=vmem, size = 0x400, scoped, tag = 'input window, operand 21']
    #allocation4 [shape = 's32[2]{0}', space=sflag, size = 0x8, scoped, tag = 'scoped memory for run.1']
    #allocation5 [shape = 'u8[1024]{0}', space=vmem, size = 0x400, scoped, tag = 'input window, operand 23']
    #allocation6 [shape = 's32[2]{0}', space=sflag, size = 0x8, scoped, tag = 'scoped memory for run.1']
    #allocation7 [shape = 'u8[512]{0}', space=vmem, size = 0x400, scoped, tag = 'input window, operand 27, single buffered']
    %64 = vsyncpa [#allocation4], 0
    %s65 = scalar_lea.sflag [#allocation4], 1
    %66 = vsyncpa %s65, 0
    %67 = vsyncpa [#allocation6], 0
    %s68 = scalar_lea.sflag [#allocation6], 1
    %69 = vsyncpa %s68, 0
    loop: start=0, step=1, limit=4
    $region2: #{run.1} parent=1 // loop_pre_header
      _
    $region3: #{run.1} parent=1 // loop_header
      %s71 = sphi 0, %s75
      %p72 = scmp.ge.s32.totalorder %s71, 4
      %s79 = sphi 0, %s79
      %s81 = sphi 0, %s79
      %s82 = sphi 0, %s81
      %s96 = sphi 0, %s82
      %s100 = sphi 0, %s100
      %s102 = sphi 0, %s100
      %s103 = sphi 0, %s102
      %s117 = sphi 0, %s103
      %s121 = sphi 0, %s121
      %s123 = sphi 0, %s121
      %s124 = sphi 0, %s123
      %s138 = sphi 0, %s124
      %s142 = sphi 0, %s142
      %s144 = sphi 0, %s142
      %s145 = sphi 0, %s144
      %s159 = sphi 0, %s145
      %s163 = sphi 0, %s163
      %s165 = sphi 0, %s163
      %s166 = sphi 0, %s165
      %s180 = sphi 0, %s166
      %s184 = sphi 0, %s184
      %s186 = sphi 0, %s184
      %s187 = sphi 0, %s186
      %s201 = sphi 0, %s187
      %s205 = sphi 0, %s205
      %s207 = sphi 0, %s205
      %s208 = sphi 0, %s207
      %s222 = sphi 0, %s208
      %s226 = sphi 0, %s226
      %s228 = sphi 0, %s226
      %s229 = sphi 0, %s228
      %s243 = sphi 0, %s229
      %s247 = sphi 0, %s247
      %s249 = sphi 0, %s247
      %s250 = sphi 0, %s249
      %s264 = sphi 0, %s250
      %s268 = sphi 0, %s268
      %s270 = sphi 0, %s268
      %s271 = sphi 0, %s270
      %s285 = sphi 0, %s271
      %s289 = sphi 0, %s289
      %s291 = sphi 0, %s289
      %s292 = sphi 0, %s291
      %s306 = sphi 0, %s292
      %s310 = sphi 0, %s310
      %s312 = sphi 0, %s310
      %s313 = sphi 0, %s312
      %s327 = sphi 0, %s313
      %s331 = sphi 0, %s331
      %s333 = sphi 0, %s331
      %s334 = sphi 0, %s333
      %s348 = sphi 0, %s334
      %s352 = sphi 0, %s352
      %s354 = sphi 0, %s352
      %s355 = sphi 0, %s354
      %s369 = sphi 0, %s355
      %s375 = sphi 0, %s377
      %s378 = sphi 0, %s375
      %s379 = sphi 0, %s378
      %s395 = sphi 0, %s379
      %s401 = sphi 0, %s403
      %s404 = sphi 0, %s401
      %s405 = sphi 0, %s404
      %s421 = sphi 0, %s405
      %s427 = sphi 0, %s429
      %s430 = sphi 0, %s427
      %s431 = sphi 0, %s430
      %s447 = sphi 0, %s431
      %s453 = sphi 0, %s455
      %s456 = sphi 0, %s453
      %s457 = sphi 0, %s456
      %s473 = sphi 0, %s457
      %s479 = sphi 0, %s481
      %s482 = sphi 0, %s479
      %s483 = sphi 0, %s482
      %s499 = sphi 0, %s483
      %s505 = sphi 0, %s507
      %s508 = sphi 0, %s505
      %s509 = sphi 0, %s508
      %s525 = sphi 0, %s509
      %s531 = sphi 0, %s533
      %s534 = sphi 0, %s531
      %s535 = sphi 0, %s534
      %s551 = sphi 0, %s535
      %s557 = sphi 0, %s559
      %s560 = sphi 0, %s557
      %s561 = sphi 0, %s560
      %s577 = sphi 0, %s561
      %s583 = sphi 0, %s585
      %s586 = sphi 0, %s583
      %s587 = sphi 0, %s586
      %s603 = sphi 0, %s587
      %s609 = sphi 0, %s611
      %s612 = sphi 0, %s609
      %s613 = sphi 0, %s612
      %s629 = sphi 0, %s613
      %s635 = sphi 0, %s637
      %s638 = sphi 0, %s635
      %s639 = sphi 0, %s638
      %s655 = sphi 0, %s639
      %s661 = sphi 0, %s663
      %s664 = sphi 0, %s661
      %s665 = sphi 0, %s664
      %s681 = sphi 0, %s665
      %s685 = sphi 0, %s685
      %s687 = sphi 0, %s685
      %s688 = sphi 0, %s687
      %s702 = sphi 0, %s688
      %s706 = sphi 0, %s706
      %s708 = sphi 0, %s706
      %s709 = sphi 0, %s708
      %s723 = sphi 0, %s709
      %s727 = sphi 0, %s727
      %s729 = sphi 0, %s727
      %s730 = sphi 0, %s729
      %s744 = sphi 0, %s730
      %s748 = sphi 0, %s748
      %s750 = sphi 0, %s748
      %s751 = sphi 0, %s750
      %s765 = sphi 0, %s751
    $region4: #{run.1} parent=1 // loop_header_branch
      %74 = sbr.rel (%p72) target = $region8
    $region5: #{run.1} parent=1 // loop_body
      %s76 = ssub.s32 %s71, 1
      %s77 = ssub.s32 %s71, 2
      %s78 = sadd.s32 %s71, 1
      %s80 = sadd.s32 %s79, 1
      %p83 = scmp.eq.s32.totalorder %s71, 1
      %p84 = scmp.ne.s32.totalorder %s79, %s81
      %p85 = scmp.eq.s32.totalorder %s71, 0
      %p86 = por %p84, %p85
      %p87 = scmp.ne.s32.totalorder %s79, %s81
      %p88 = scmp.eq.s32.totalorder %s76, 1
      %p89 = por %p87, %p88
      %p90 = scmp.ne.s32.totalorder %s81, %s82
      %p91 = scmp.eq.s32.totalorder %s76, 0
      %p92 = por %p90, %p91
      %p93 = scmp.ne.s32.totalorder %s81, %s82
      %p94 = scmp.eq.s32.totalorder %s77, 1
      %p95 = por %p93, %p94
      %p97 = scmp.ne.s32.totalorder %s82, %s96
      %p98 = scmp.eq.s32.totalorder %s77, 0
      %p99 = por %p97, %p98
      %s101 = sadd.s32 %s100, 1
      %p104 = scmp.eq.s32.totalorder %s71, 1
      %p105 = scmp.ne.s32.totalorder %s100, %s102
      %p106 = scmp.eq.s32.totalorder %s71, 0
      %p107 = por %p105, %p106
      %p108 = scmp.ne.s32.totalorder %s100, %s102
      %p109 = scmp.eq.s32.totalorder %s76, 1
      %p110 = por %p108, %p109
      %p111 = scmp.ne.s32.totalorder %s102, %s103
      %p112 = scmp.eq.s32.totalorder %s76, 0
      %p113 = por %p111, %p112
      %p114 = scmp.ne.s32.totalorder %s102, %s103
      %p115 = scmp.eq.s32.totalorder %s77, 1
      %p116 = por %p114, %p115
      %p118 = scmp.ne.s32.totalorder %s103, %s117
      %p119 = scmp.eq.s32.totalorder %s77, 0
      %p120 = por %p118, %p119
      %s122 = sadd.s32 %s121, 1
      %p125 = scmp.eq.s32.totalorder %s71, 1
      %p126 = scmp.ne.s32.totalorder %s121, %s123
      %p127 = scmp.eq.s32.totalorder %s71, 0
      %p128 = por %p126, %p127
      %p129 = scmp.ne.s32.totalorder %s121, %s123
      %p130 = scmp.eq.s32.totalorder %s76, 1
      %p131 = por %p129, %p130
      %p132 = scmp.ne.s32.totalorder %s123, %s124
      %p133 = scmp.eq.s32.totalorder %s76, 0
      %p134 = por %p132, %p133
      %p135 = scmp.ne.s32.totalorder %s123, %s124
      %p136 = scmp.eq.s32.totalorder %s77, 1
      %p137 = por %p135, %p136
      %p139 = scmp.ne.s32.totalorder %s124, %s138
      %p140 = scmp.eq.s32.totalorder %s77, 0
      %p141 = por %p139, %p140
      %s143 = sadd.s32 %s142, 1
      %p146 = scmp.eq.s32.totalorder %s71, 1
      %p147 = scmp.ne.s32.totalorder %s142, %s144
      %p148 = scmp.eq.s32.totalorder %s71, 0
      %p149 = por %p147, %p148
      %p150 = scmp.ne.s32.totalorder %s142, %s144
      %p151 = scmp.eq.s32.totalorder %s76, 1
      %p152 = por %p150, %p151
      %p153 = scmp.ne.s32.totalorder %s144, %s145
      %p154 = scmp.eq.s32.totalorder %s76, 0
      %p155 = por %p153, %p154
      %p156 = scmp.ne.s32.totalorder %s144, %s145
      %p157 = scmp.eq.s32.totalorder %s77, 1
      %p158 = por %p156, %p157
      %p160 = scmp.ne.s32.totalorder %s145, %s159
      %p161 = scmp.eq.s32.totalorder %s77, 0
      %p162 = por %p160, %p161
      %s164 = sadd.s32 %s163, 1
      %p167 = scmp.eq.s32.totalorder %s71, 1
      %p168 = scmp.ne.s32.totalorder %s163, %s165
      %p169 = scmp.eq.s32.totalorder %s71, 0
      %p170 = por %p168, %p169
      %p171 = scmp.ne.s32.totalorder %s163, %s165
      %p172 = scmp.eq.s32.totalorder %s76, 1
      %p173 = por %p171, %p172
      %p174 = scmp.ne.s32.totalorder %s165, %s166
      %p175 = scmp.eq.s32.totalorder %s76, 0
      %p176 = por %p174, %p175
      %p177 = scmp.ne.s32.totalorder %s165, %s166
      %p178 = scmp.eq.s32.totalorder %s77, 1
      %p179 = por %p177, %p178
      %p181 = scmp.ne.s32.totalorder %s166, %s180
      %p182 = scmp.eq.s32.totalorder %s77, 0
      %p183 = por %p181, %p182
      %s185 = sadd.s32 %s184, 1
      %p188 = scmp.eq.s32.totalorder %s71, 1
      %p189 = scmp.ne.s32.totalorder %s184, %s186
      %p190 = scmp.eq.s32.totalorder %s71, 0
      %p191 = por %p189, %p190
      %p192 = scmp.ne.s32.totalorder %s184, %s186
      %p193 = scmp.eq.s32.totalorder %s76, 1
      %p194 = por %p192, %p193
      %p195 = scmp.ne.s32.totalorder %s186, %s187
      %p196 = scmp.eq.s32.totalorder %s76, 0
      %p197 = por %p195, %p196
      %p198 = scmp.ne.s32.totalorder %s186, %s187
      %p199 = scmp.eq.s32.totalorder %s77, 1
      %p200 = por %p198, %p199
      %p202 = scmp.ne.s32.totalorder %s187, %s201
      %p203 = scmp.eq.s32.totalorder %s77, 0
      %p204 = por %p202, %p203
      %s206 = sadd.s32 %s205, 1
      %p209 = scmp.eq.s32.totalorder %s71, 1
      %p210 = scmp.ne.s32.totalorder %s205, %s207
      %p211 = scmp.eq.s32.totalorder %s71, 0
      %p212 = por %p210, %p211
      %p213 = scmp.ne.s32.totalorder %s205, %s207
      %p214 = scmp.eq.s32.totalorder %s76, 1
      %p215 = por %p213, %p214
      %p216 = scmp.ne.s32.totalorder %s207, %s208
      %p217 = scmp.eq.s32.totalorder %s76, 0
      %p218 = por %p216, %p217
      %p219 = scmp.ne.s32.totalorder %s207, %s208
      %p220 = scmp.eq.s32.totalorder %s77, 1
      %p221 = por %p219, %p220
      %p223 = scmp.ne.s32.totalorder %s208, %s222
      %p224 = scmp.eq.s32.totalorder %s77, 0
      %p225 = por %p223, %p224
      %s227 = sadd.s32 %s226, 1
      %p230 = scmp.eq.s32.totalorder %s71, 1
      %p231 = scmp.ne.s32.totalorder %s226, %s228
      %p232 = scmp.eq.s32.totalorder %s71, 0
      %p233 = por %p231, %p232
      %p234 = scmp.ne.s32.totalorder %s226, %s228
      %p235 = scmp.eq.s32.totalorder %s76, 1
      %p236 = por %p234, %p235
      %p237 = scmp.ne.s32.totalorder %s228, %s229
      %p238 = scmp.eq.s32.totalorder %s76, 0
      %p239 = por %p237, %p238
      %p240 = scmp.ne.s32.totalorder %s228, %s229
      %p241 = scmp.eq.s32.totalorder %s77, 1
      %p242 = por %p240, %p241
      %p244 = scmp.ne.s32.totalorder %s229, %s243
      %p245 = scmp.eq.s32.totalorder %s77, 0
      %p246 = por %p244, %p245
      %s248 = sadd.s32 %s247, 1
      %p251 = scmp.eq.s32.totalorder %s71, 1
      %p252 = scmp.ne.s32.totalorder %s247, %s249
      %p253 = scmp.eq.s32.totalorder %s71, 0
      %p254 = por %p252, %p253
      %p255 = scmp.ne.s32.totalorder %s247, %s249
      %p256 = scmp.eq.s32.totalorder %s76, 1
      %p257 = por %p255, %p256
      %p258 = scmp.ne.s32.totalorder %s249, %s250
      %p259 = scmp.eq.s32.totalorder %s76, 0
      %p260 = por %p258, %p259
      %p261 = scmp.ne.s32.totalorder %s249, %s250
      %p262 = scmp.eq.s32.totalorder %s77, 1
      %p263 = por %p261, %p262
      %p265 = scmp.ne.s32.totalorder %s250, %s264
      %p266 = scmp.eq.s32.totalorder %s77, 0
      %p267 = por %p265, %p266
      %s269 = sadd.s32 %s268, 1
      %p272 = scmp.eq.s32.totalorder %s71, 1
      %p273 = scmp.ne.s32.totalorder %s268, %s270
      %p274 = scmp.eq.s32.totalorder %s71, 0
      %p275 = por %p273, %p274
      %p276 = scmp.ne.s32.totalorder %s268, %s270
      %p277 = scmp.eq.s32.totalorder %s76, 1
      %p278 = por %p276, %p277
      %p279 = scmp.ne.s32.totalorder %s270, %s271
      %p280 = scmp.eq.s32.totalorder %s76, 0
      %p281 = por %p279, %p280
      %p282 = scmp.ne.s32.totalorder %s270, %s271
      %p283 = scmp.eq.s32.totalorder %s77, 1
      %p284 = por %p282, %p283
      %p286 = scmp.ne.s32.totalorder %s271, %s285
      %p287 = scmp.eq.s32.totalorder %s77, 0
      %p288 = por %p286, %p287
      %s290 = sadd.s32 %s289, 1
      %p293 = scmp.eq.s32.totalorder %s71, 1
      %p294 = scmp.ne.s32.totalorder %s289, %s291
      %p295 = scmp.eq.s32.totalorder %s71, 0
      %p296 = por %p294, %p295
      %p297 = scmp.ne.s32.totalorder %s289, %s291
      %p298 = scmp.eq.s32.totalorder %s76, 1
      %p299 = por %p297, %p298
      %p300 = scmp.ne.s32.totalorder %s291, %s292
      %p301 = scmp.eq.s32.totalorder %s76, 0
      %p302 = por %p300, %p301
      %p303 = scmp.ne.s32.totalorder %s291, %s292
      %p304 = scmp.eq.s32.totalorder %s77, 1
      %p305 = por %p303, %p304
      %p307 = scmp.ne.s32.totalorder %s292, %s306
      %p308 = scmp.eq.s32.totalorder %s77, 0
      %p309 = por %p307, %p308
      %s311 = sadd.s32 %s310, 1
      %p314 = scmp.eq.s32.totalorder %s71, 1
      %p315 = scmp.ne.s32.totalorder %s310, %s312
      %p316 = scmp.eq.s32.totalorder %s71, 0
      %p317 = por %p315, %p316
      %p318 = scmp.ne.s32.totalorder %s310, %s312
      %p319 = scmp.eq.s32.totalorder %s76, 1
      %p320 = por %p318, %p319
      %p321 = scmp.ne.s32.totalorder %s312, %s313
      %p322 = scmp.eq.s32.totalorder %s76, 0
      %p323 = por %p321, %p322
      %p324 = scmp.ne.s32.totalorder %s312, %s313
      %p325 = scmp.eq.s32.totalorder %s77, 1
      %p326 = por %p324, %p325
      %p328 = scmp.ne.s32.totalorder %s313, %s327
      %p329 = scmp.eq.s32.totalorder %s77, 0
      %p330 = por %p328, %p329
      %s332 = sadd.s32 %s331, 1
      %p335 = scmp.eq.s32.totalorder %s71, 1
      %p336 = scmp.ne.s32.totalorder %s331, %s333
      %p337 = scmp.eq.s32.totalorder %s71, 0
      %p338 = por %p336, %p337
      %p339 = scmp.ne.s32.totalorder %s331, %s333
      %p340 = scmp.eq.s32.totalorder %s76, 1
      %p341 = por %p339, %p340
      %p342 = scmp.ne.s32.totalorder %s333, %s334
      %p343 = scmp.eq.s32.totalorder %s76, 0
      %p344 = por %p342, %p343
      %p345 = scmp.ne.s32.totalorder %s333, %s334
      %p346 = scmp.eq.s32.totalorder %s77, 1
      %p347 = por %p345, %p346
      %p349 = scmp.ne.s32.totalorder %s334, %s348
      %p350 = scmp.eq.s32.totalorder %s77, 0
      %p351 = por %p349, %p350
      %s353 = sadd.s32 %s352, 1
      %p356 = scmp.eq.s32.totalorder %s71, 1
      %p357 = scmp.ne.s32.totalorder %s352, %s354
      %p358 = scmp.eq.s32.totalorder %s71, 0
      %p359 = por %p357, %p358
      %p360 = scmp.ne.s32.totalorder %s352, %s354
      %p361 = scmp.eq.s32.totalorder %s76, 1
      %p362 = por %p360, %p361
      %p363 = scmp.ne.s32.totalorder %s354, %s355
      %p364 = scmp.eq.s32.totalorder %s76, 0
      %p365 = por %p363, %p364
      %p366 = scmp.ne.s32.totalorder %s354, %s355
      %p367 = scmp.eq.s32.totalorder %s77, 1
      %p368 = por %p366, %p367
      %p370 = scmp.ne.s32.totalorder %s355, %s369
      %p371 = scmp.eq.s32.totalorder %s77, 0
      %p372 = por %p370, %p371
      %s373 = ssub.s32 %s71, %s78
      %p374 = scmp.eq.s32.totalorder %s373, 0
      %s376 = sadd.s32 %s375, 1
      %s377 = scalar_select %p374, %s375, %s376
      %p380 = pneg %p374
      %p381 = scmp.eq.s32.totalorder %s71, 1
      %p382 = por %p380, %p381
      %p383 = scmp.ne.s32.totalorder %s375, %s378
      %p384 = scmp.eq.s32.totalorder %s71, 0
      %p385 = por %p383, %p384
      %p386 = scmp.ne.s32.totalorder %s375, %s378
      %p387 = scmp.eq.s32.totalorder %s76, 1
      %p388 = por %p386, %p387
      %p389 = scmp.ne.s32.totalorder %s378, %s379
      %p390 = scmp.eq.s32.totalorder %s76, 0
      %p391 = por %p389, %p390
      %p392 = scmp.ne.s32.totalorder %s378, %s379
      %p393 = scmp.eq.s32.totalorder %s77, 1
      %p394 = por %p392, %p393
      %p396 = scmp.ne.s32.totalorder %s379, %s395
      %p397 = scmp.eq.s32.totalorder %s77, 0
      %p398 = por %p396, %p397
      %s399 = ssub.s32 %s71, %s78
      %p400 = scmp.eq.s32.totalorder %s399, 0
      %s402 = sadd.s32 %s401, 1
      %s403 = scalar_select %p400, %s401, %s402
      %p406 = pneg %p400
      %p407 = scmp.eq.s32.totalorder %s71, 1
      %p408 = por %p406, %p407
      %p409 = scmp.ne.s32.totalorder %s401, %s404
      %p410 = scmp.eq.s32.totalorder %s71, 0
      %p411 = por %p409, %p410
      %p412 = scmp.ne.s32.totalorder %s401, %s404
      %p413 = scmp.eq.s32.totalorder %s76, 1
      %p414 = por %p412, %p413
      %p415 = scmp.ne.s32.totalorder %s404, %s405
      %p416 = scmp.eq.s32.totalorder %s76, 0
      %p417 = por %p415, %p416
      %p418 = scmp.ne.s32.totalorder %s404, %s405
      %p419 = scmp.eq.s32.totalorder %s77, 1
      %p420 = por %p418, %p419
      %p422 = scmp.ne.s32.totalorder %s405, %s421
      %p423 = scmp.eq.s32.totalorder %s77, 0
      %p424 = por %p422, %p423
      %s425 = ssub.s32 %s71, %s78
      %p426 = scmp.eq.s32.totalorder %s425, 0
      %s428 = sadd.s32 %s427, 1
      %s429 = scalar_select %p426, %s427, %s428
      %p432 = pneg %p426
      %p433 = scmp.eq.s32.totalorder %s71, 1
      %p434 = por %p432, %p433
      %p435 = scmp.ne.s32.totalorder %s427, %s430
      %p436 = scmp.eq.s32.totalorder %s71, 0
      %p437 = por %p435, %p436
      %p438 = scmp.ne.s32.totalorder %s427, %s430
      %p439 = scmp.eq.s32.totalorder %s76, 1
      %p440 = por %p438, %p439
      %p441 = scmp.ne.s32.totalorder %s430, %s431
      %p442 = scmp.eq.s32.totalorder %s76, 0
      %p443 = por %p441, %p442
      %p444 = scmp.ne.s32.totalorder %s430, %s431
      %p445 = scmp.eq.s32.totalorder %s77, 1
      %p446 = por %p444, %p445
      %p448 = scmp.ne.s32.totalorder %s431, %s447
      %p449 = scmp.eq.s32.totalorder %s77, 0
      %p450 = por %p448, %p449
      %s451 = ssub.s32 %s71, %s78
      %p452 = scmp.eq.s32.totalorder %s451, 0
      %s454 = sadd.s32 %s453, 1
      %s455 = scalar_select %p452, %s453, %s454
      %p458 = pneg %p452
      %p459 = scmp.eq.s32.totalorder %s71, 1
      %p460 = por %p458, %p459
      %p461 = scmp.ne.s32.totalorder %s453, %s456
      %p462 = scmp.eq.s32.totalorder %s71, 0
      %p463 = por %p461, %p462
      %p464 = scmp.ne.s32.totalorder %s453, %s456
      %p465 = scmp.eq.s32.totalorder %s76, 1
      %p466 = por %p464, %p465
      %p467 = scmp.ne.s32.totalorder %s456, %s457
      %p468 = scmp.eq.s32.totalorder %s76, 0
      %p469 = por %p467, %p468
      %p470 = scmp.ne.s32.totalorder %s456, %s457
      %p471 = scmp.eq.s32.totalorder %s77, 1
      %p472 = por %p470, %p471
      %p474 = scmp.ne.s32.totalorder %s457, %s473
      %p475 = scmp.eq.s32.totalorder %s77, 0
      %p476 = por %p474, %p475
      %s477 = ssub.s32 %s71, %s78
      %p478 = scmp.eq.s32.totalorder %s477, 0
      %s480 = sadd.s32 %s479, 1
      %s481 = scalar_select %p478, %s479, %s480
      %p484 = pneg %p478
      %p485 = scmp.eq.s32.totalorder %s71, 1
      %p486 = por %p484, %p485
      %p487 = scmp.ne.s32.totalorder %s479, %s482
      %p488 = scmp.eq.s32.totalorder %s71, 0
      %p489 = por %p487, %p488
      %p490 = scmp.ne.s32.totalorder %s479, %s482
      %p491 = scmp.eq.s32.totalorder %s76, 1
      %p492 = por %p490, %p491
      %p493 = scmp.ne.s32.totalorder %s482, %s483
      %p494 = scmp.eq.s32.totalorder %s76, 0
      %p495 = por %p493, %p494
      %p496 = scmp.ne.s32.totalorder %s482, %s483
      %p497 = scmp.eq.s32.totalorder %s77, 1
      %p498 = por %p496, %p497
      %p500 = scmp.ne.s32.totalorder %s483, %s499
      %p501 = scmp.eq.s32.totalorder %s77, 0
      %p502 = por %p500, %p501
      %s503 = ssub.s32 %s71, %s78
      %p504 = scmp.eq.s32.totalorder %s503, 0
      %s506 = sadd.s32 %s505, 1
      %s507 = scalar_select %p504, %s505, %s506
      %p510 = pneg %p504
      %p511 = scmp.eq.s32.totalorder %s71, 1
      %p512 = por %p510, %p511
      %p513 = scmp.ne.s32.totalorder %s505, %s508
      %p514 = scmp.eq.s32.totalorder %s71, 0
      %p515 = por %p513, %p514
      %p516 = scmp.ne.s32.totalorder %s505, %s508
      %p517 = scmp.eq.s32.totalorder %s76, 1
      %p518 = por %p516, %p517
      %p519 = scmp.ne.s32.totalorder %s508, %s509
      %p520 = scmp.eq.s32.totalorder %s76, 0
      %p521 = por %p519, %p520
      %p522 = scmp.ne.s32.totalorder %s508, %s509
      %p523 = scmp.eq.s32.totalorder %s77, 1
      %p524 = por %p522, %p523
      %p526 = scmp.ne.s32.totalorder %s509, %s525
      %p527 = scmp.eq.s32.totalorder %s77, 0
      %p528 = por %p526, %p527
      %s529 = ssub.s32 %s71, %s78
      %p530 = scmp.eq.s32.totalorder %s529, 0
      %s532 = sadd.s32 %s531, 1
      %s533 = scalar_select %p530, %s531, %s532
      %p536 = pneg %p530
      %p537 = scmp.eq.s32.totalorder %s71, 1
      %p538 = por %p536, %p537
      %p539 = scmp.ne.s32.totalorder %s531, %s534
      %p540 = scmp.eq.s32.totalorder %s71, 0
      %p541 = por %p539, %p540
      %p542 = scmp.ne.s32.totalorder %s531, %s534
      %p543 = scmp.eq.s32.totalorder %s76, 1
      %p544 = por %p542, %p543
      %p545 = scmp.ne.s32.totalorder %s534, %s535
      %p546 = scmp.eq.s32.totalorder %s76, 0
      %p547 = por %p545, %p546
      %p548 = scmp.ne.s32.totalorder %s534, %s535
      %p549 = scmp.eq.s32.totalorder %s77, 1
      %p550 = por %p548, %p549
      %p552 = scmp.ne.s32.totalorder %s535, %s551
      %p553 = scmp.eq.s32.totalorder %s77, 0
      %p554 = por %p552, %p553
      %s555 = ssub.s32 %s71, %s78
      %p556 = scmp.eq.s32.totalorder %s555, 0
      %s558 = sadd.s32 %s557, 1
      %s559 = scalar_select %p556, %s557, %s558
      %p562 = pneg %p556
      %p563 = scmp.eq.s32.totalorder %s71, 1
      %p564 = por %p562, %p563
      %p565 = scmp.ne.s32.totalorder %s557, %s560
      %p566 = scmp.eq.s32.totalorder %s71, 0
      %p567 = por %p565, %p566
      %p568 = scmp.ne.s32.totalorder %s557, %s560
      %p569 = scmp.eq.s32.totalorder %s76, 1
      %p570 = por %p568, %p569
      %p571 = scmp.ne.s32.totalorder %s560, %s561
      %p572 = scmp.eq.s32.totalorder %s76, 0
      %p573 = por %p571, %p572
      %p574 = scmp.ne.s32.totalorder %s560, %s561
      %p575 = scmp.eq.s32.totalorder %s77, 1
      %p576 = por %p574, %p575
      %p578 = scmp.ne.s32.totalorder %s561, %s577
      %p579 = scmp.eq.s32.totalorder %s77, 0
      %p580 = por %p578, %p579
      %s581 = ssub.s32 %s71, %s78
      %p582 = scmp.eq.s32.totalorder %s581, 0
      %s584 = sadd.s32 %s583, 1
      %s585 = scalar_select %p582, %s583, %s584
      %p588 = pneg %p582
      %p589 = scmp.eq.s32.totalorder %s71, 1
      %p590 = por %p588, %p589
      %p591 = scmp.ne.s32.totalorder %s583, %s586
      %p592 = scmp.eq.s32.totalorder %s71, 0
      %p593 = por %p591, %p592
      %p594 = scmp.ne.s32.totalorder %s583, %s586
      %p595 = scmp.eq.s32.totalorder %s76, 1
      %p596 = por %p594, %p595
      %p597 = scmp.ne.s32.totalorder %s586, %s587
      %p598 = scmp.eq.s32.totalorder %s76, 0
      %p599 = por %p597, %p598
      %p600 = scmp.ne.s32.totalorder %s586, %s587
      %p601 = scmp.eq.s32.totalorder %s77, 1
      %p602 = por %p600, %p601
      %p604 = scmp.ne.s32.totalorder %s587, %s603
      %p605 = scmp.eq.s32.totalorder %s77, 0
      %p606 = por %p604, %p605
      %s607 = ssub.s32 %s71, %s78
      %p608 = scmp.eq.s32.totalorder %s607, 0
      %s610 = sadd.s32 %s609, 1
      %s611 = scalar_select %p608, %s609, %s610
      %p614 = pneg %p608
      %p615 = scmp.eq.s32.totalorder %s71, 1
      %p616 = por %p614, %p615
      %p617 = scmp.ne.s32.totalorder %s609, %s612
      %p618 = scmp.eq.s32.totalorder %s71, 0
      %p619 = por %p617, %p618
      %p620 = scmp.ne.s32.totalorder %s609, %s612
      %p621 = scmp.eq.s32.totalorder %s76, 1
      %p622 = por %p620, %p621
      %p623 = scmp.ne.s32.totalorder %s612, %s613
      %p624 = scmp.eq.s32.totalorder %s76, 0
      %p625 = por %p623, %p624
      %p626 = scmp.ne.s32.totalorder %s612, %s613
      %p627 = scmp.eq.s32.totalorder %s77, 1
      %p628 = por %p626, %p627
      %p630 = scmp.ne.s32.totalorder %s613, %s629
      %p631 = scmp.eq.s32.totalorder %s77, 0
      %p632 = por %p630, %p631
      %s633 = ssub.s32 %s71, %s78
      %p634 = scmp.eq.s32.totalorder %s633, 0
      %s636 = sadd.s32 %s635, 1
      %s637 = scalar_select %p634, %s635, %s636
      %p640 = pneg %p634
      %p641 = scmp.eq.s32.totalorder %s71, 1
      %p642 = por %p640, %p641
      %p643 = scmp.ne.s32.totalorder %s635, %s638
      %p644 = scmp.eq.s32.totalorder %s71, 0
      %p645 = por %p643, %p644
      %p646 = scmp.ne.s32.totalorder %s635, %s638
      %p647 = scmp.eq.s32.totalorder %s76, 1
      %p648 = por %p646, %p647
      %p649 = scmp.ne.s32.totalorder %s638, %s639
      %p650 = scmp.eq.s32.totalorder %s76, 0
      %p651 = por %p649, %p650
      %p652 = scmp.ne.s32.totalorder %s638, %s639
      %p653 = scmp.eq.s32.totalorder %s77, 1
      %p654 = por %p652, %p653
      %p656 = scmp.ne.s32.totalorder %s639, %s655
      %p657 = scmp.eq.s32.totalorder %s77, 0
      %p658 = por %p656, %p657
      %s659 = ssub.s32 %s71, %s78
      %p660 = scmp.eq.s32.totalorder %s659, 0
      %s662 = sadd.s32 %s661, 1
      %s663 = scalar_select %p660, %s661, %s662
      %p666 = pneg %p660
      %p667 = scmp.eq.s32.totalorder %s71, 1
      %p668 = por %p666, %p667
      %p669 = scmp.ne.s32.totalorder %s661, %s664
      %p670 = scmp.eq.s32.totalorder %s71, 0
      %p671 = por %p669, %p670
      %p672 = scmp.ne.s32.totalorder %s661, %s664
      %p673 = scmp.eq.s32.totalorder %s76, 1
      %p674 = por %p672, %p673
      %p675 = scmp.ne.s32.totalorder %s664, %s665
      %p676 = scmp.eq.s32.totalorder %s76, 0
      %p677 = por %p675, %p676
      %p678 = scmp.ne.s32.totalorder %s664, %s665
      %p679 = scmp.eq.s32.totalorder %s77, 1
      %p680 = por %p678, %p679
      %p682 = scmp.ne.s32.totalorder %s665, %s681
      %p683 = scmp.eq.s32.totalorder %s77, 0
      %p684 = por %p682, %p683
      %s686 = sadd.s32 %s685, 1
      %p689 = scmp.eq.s32.totalorder %s71, 1
      %p690 = scmp.ne.s32.totalorder %s685, %s687
      %p691 = scmp.eq.s32.totalorder %s71, 0
      %p692 = por %p690, %p691
      %p693 = scmp.ne.s32.totalorder %s685, %s687
      %p694 = scmp.eq.s32.totalorder %s76, 1
      %p695 = por %p693, %p694
      %p696 = scmp.ne.s32.totalorder %s687, %s688
      %p697 = scmp.eq.s32.totalorder %s76, 0
      %p698 = por %p696, %p697
      %p699 = scmp.ne.s32.totalorder %s687, %s688
      %p700 = scmp.eq.s32.totalorder %s77, 1
      %p701 = por %p699, %p700
      %p703 = scmp.ne.s32.totalorder %s688, %s702
      %p704 = scmp.eq.s32.totalorder %s77, 0
      %p705 = por %p703, %p704
      %s707 = sadd.s32 %s706, 1
      %p710 = scmp.eq.s32.totalorder %s71, 1
      %p711 = scmp.ne.s32.totalorder %s706, %s708
      %p712 = scmp.eq.s32.totalorder %s71, 0
      %p713 = por %p711, %p712
      %p714 = scmp.ne.s32.totalorder %s706, %s708
      %p715 = scmp.eq.s32.totalorder %s76, 1
      %p716 = por %p714, %p715
      %p717 = scmp.ne.s32.totalorder %s708, %s709
      %p718 = scmp.eq.s32.totalorder %s76, 0
      %p719 = por %p717, %p718
      %p720 = scmp.ne.s32.totalorder %s708, %s709
      %p721 = scmp.eq.s32.totalorder %s77, 1
      %p722 = por %p720, %p721
      %p724 = scmp.ne.s32.totalorder %s709, %s723
      %p725 = scmp.eq.s32.totalorder %s77, 0
      %p726 = por %p724, %p725
      %s728 = sadd.s32 %s727, 1
      %p731 = scmp.eq.s32.totalorder %s71, 1
      %p732 = scmp.ne.s32.totalorder %s727, %s729
      %p733 = scmp.eq.s32.totalorder %s71, 0
      %p734 = por %p732, %p733
      %p735 = scmp.ne.s32.totalorder %s727, %s729
      %p736 = scmp.eq.s32.totalorder %s76, 1
      %p737 = por %p735, %p736
      %p738 = scmp.ne.s32.totalorder %s729, %s730
      %p739 = scmp.eq.s32.totalorder %s76, 0
      %p740 = por %p738, %p739
      %p741 = scmp.ne.s32.totalorder %s729, %s730
      %p742 = scmp.eq.s32.totalorder %s77, 1
      %p743 = por %p741, %p742
      %p745 = scmp.ne.s32.totalorder %s730, %s744
      %p746 = scmp.eq.s32.totalorder %s77, 0
      %p747 = por %p745, %p746
      %s749 = sadd.s32 %s748, 1
      %p752 = scmp.eq.s32.totalorder %s71, 1
      %p753 = scmp.ne.s32.totalorder %s748, %s750
      %p754 = scmp.eq.s32.totalorder %s71, 0
      %p755 = por %p753, %p754
      %p756 = scmp.ne.s32.totalorder %s748, %s750
      %p757 = scmp.eq.s32.totalorder %s76, 1
      %p758 = por %p756, %p757
      %p759 = scmp.ne.s32.totalorder %s750, %s751
      %p760 = scmp.eq.s32.totalorder %s76, 0
      %p761 = por %p759, %p760
      %p762 = scmp.ne.s32.totalorder %s750, %s751
      %p763 = scmp.eq.s32.totalorder %s77, 1
      %p764 = por %p762, %p763
      %p766 = scmp.ne.s32.totalorder %s751, %s765
      %p767 = scmp.eq.s32.totalorder %s77, 0
      %p768 = por %p766, %p767
      %p769 = scmp.le.s32.totalorder 1, %s71
      %p770 = scmp.lt.s32.totalorder %s71, 3
      %p771 = pnand %p769, %p770
      %p772 = pneg %p771
      // Predicated region
      $region9: #{run.1} parent=5 // pred_check
        _
      $region10: #{run.1} parent=5 // pred_check_branch
        %774 = sbr.rel (%p771) target = $region12
      $region11: #{run.1} parent=5 // pred_region
        %s775 = ssub.s32 %s71, 1
        // Predicated region
        $region13: #{run.1} parent=11 // pred_check
          %p776 = pneg %p92
        $region14: #{run.1} parent=11 // pred_check_branch
          %778 = sbr.rel (%p776) target = $region16
        $region15: #{run.1} parent=11 // pred_region
          _
        $region16: #{run.1} parent=11 // pred_fallthru
          _
        // Predicated region
        $region17: #{run.1} parent=11 // pred_check
          %p779 = pneg %p113
        $region18: #{run.1} parent=11 // pred_check_branch
          %781 = sbr.rel (%p779) target = $region20
        $region19: #{run.1} parent=11 // pred_region
          _
        $region20: #{run.1} parent=11 // pred_fallthru
          _
        // Predicated region
        $region21: #{run.1} parent=11 // pred_check
          %p782 = pneg %p134
        $region22: #{run.1} parent=11 // pred_check_branch
          %784 = sbr.rel (%p782) target = $region24
        $region23: #{run.1} parent=11 // pred_region
          _
        $region24: #{run.1} parent=11 // pred_fallthru
          _
        // Predicated region
        $region25: #{run.1} parent=11 // pred_check
          %p785 = pneg %p155
        $region26: #{run.1} parent=11 // pred_check_branch
          %787 = sbr.rel (%p785) target = $region28
        $region27: #{run.1} parent=11 // pred_region
          _
        $region28: #{run.1} parent=11 // pred_fallthru
          _
        // Predicated region
        $region29: #{run.1} parent=11 // pred_check
          %p788 = pneg %p176
        $region30: #{run.1} parent=11 // pred_check_branch
          %790 = sbr.rel (%p788) target = $region32
        $region31: #{run.1} parent=11 // pred_region
          _
        $region32: #{run.1} parent=11 // pred_fallthru
          _
        // Predicated region
        $region33: #{run.1} parent=11 // pred_check
          %p791 = pneg %p197
        $region34: #{run.1} parent=11 // pred_check_branch
          %793 = sbr.rel (%p791) target = $region36
        $region35: #{run.1} parent=11 // pred_region
          _
        $region36: #{run.1} parent=11 // pred_fallthru
          _
        // Predicated region
        $region37: #{run.1} parent=11 // pred_check
          %p794 = pneg %p218
        $region38: #{run.1} parent=11 // pred_check_branch
          %796 = sbr.rel (%p794) target = $region40
        $region39: #{run.1} parent=11 // pred_region
          _
        $region40: #{run.1} parent=11 // pred_fallthru
          _
        // Predicated region
        $region41: #{run.1} parent=11 // pred_check
          %p797 = pneg %p239
        $region42: #{run.1} parent=11 // pred_check_branch
          %799 = sbr.rel (%p797) target = $region44
        $region43: #{run.1} parent=11 // pred_region
          _
        $region44: #{run.1} parent=11 // pred_fallthru
          _
        // Predicated region
        $region45: #{run.1} parent=11 // pred_check
          %p800 = pneg %p260
        $region46: #{run.1} parent=11 // pred_check_branch
          %802 = sbr.rel (%p800) target = $region48
        $region47: #{run.1} parent=11 // pred_region
          _
        $region48: #{run.1} parent=11 // pred_fallthru
          _
        // Predicated region
        $region49: #{run.1} parent=11 // pred_check
          %p803 = pneg %p281
        $region50: #{run.1} parent=11 // pred_check_branch
          %805 = sbr.rel (%p803) target = $region52
        $region51: #{run.1} parent=11 // pred_region
          _
        $region52: #{run.1} parent=11 // pred_fallthru
          _
        // Predicated region
        $region53: #{run.1} parent=11 // pred_check
          %p806 = pneg %p302
        $region54: #{run.1} parent=11 // pred_check_branch
          %808 = sbr.rel (%p806) target = $region56
        $region55: #{run.1} parent=11 // pred_region
          _
        $region56: #{run.1} parent=11 // pred_fallthru
          _
        // Predicated region
        $region57: #{run.1} parent=11 // pred_check
          %p809 = pneg %p323
        $region58: #{run.1} parent=11 // pred_check_branch
          %811 = sbr.rel (%p809) target = $region60
        $region59: #{run.1} parent=11 // pred_region
          _
        $region60: #{run.1} parent=11 // pred_fallthru
          _
        // Predicated region
        $region61: #{run.1} parent=11 // pred_check
          %p812 = pneg %p344
        $region62: #{run.1} parent=11 // pred_check_branch
          %814 = sbr.rel (%p812) target = $region64
        $region63: #{run.1} parent=11 // pred_region
          _
        $region64: #{run.1} parent=11 // pred_fallthru
          _
        // Predicated region
        $region65: #{run.1} parent=11 // pred_check
          %p815 = pneg %p365
        $region66: #{run.1} parent=11 // pred_check_branch
          %817 = sbr.rel (%p815) target = $region68
        $region67: #{run.1} parent=11 // pred_region
          _
        $region68: #{run.1} parent=11 // pred_fallthru
          _
        // Predicated region
        $region69: #{run.1} parent=11 // pred_check
          %p818 = pneg %p698
        $region70: #{run.1} parent=11 // pred_check_branch
          %820 = sbr.rel (%p818) target = $region72
        $region71: #{run.1} parent=11 // pred_region
          _
        $region72: #{run.1} parent=11 // pred_fallthru
          _
        // Predicated region
        $region73: #{run.1} parent=11 // pred_check
          %p821 = pneg %p719
        $region74: #{run.1} parent=11 // pred_check_branch
          %823 = sbr.rel (%p821) target = $region76
        $region75: #{run.1} parent=11 // pred_region
          %s825 = ssub.s32 16, 16
          %826 = vsyncadd [#allocation6], %s825
          %s828 = sshll.u32 [#allocation7], 4
          %s829 = int_to_ptr.vmem [resolvable:$true] %s828
          %831 = dma.hbm_to_vmem [thread:$0]  %s55, 16, %s829, [#allocation6]
        $region76: #{run.1} parent=11 // pred_fallthru
          _
        // Predicated region
        $region77: #{run.1} parent=11 // pred_check
          %p832 = pneg %p740
        $region78: #{run.1} parent=11 // pred_check_branch
          %834 = sbr.rel (%p832) target = $region80
        $region79: #{run.1} parent=11 // pred_region
          _
        $region80: #{run.1} parent=11 // pred_fallthru
          _
      $region12: #{run.1} parent=5 // pred_fallthru
        _
      %p835 = scmp.lt.s32.totalorder %s71, 2
      // Predicated region
      $region81: #{run.1} parent=5 // pred_check
        %p836 = pneg %p835
      $region82: #{run.1} parent=5 // pred_check_branch
        %838 = sbr.rel (%p836) target = $region84
      $region83: #{run.1} parent=5 // pred_region
        // Predicated region
        $region85: #{run.1} parent=83 // pred_check
          %p839 = pneg %p385
        $region86: #{run.1} parent=83 // pred_check_branch
          %841 = sbr.rel (%p839) target = $region88
        $region87: #{run.1} parent=83 // pred_region
          %p842 = scmp.lt.s32.totalorder %s71, 1
          %s843 = scalar_select %p842, %s71, 1
          %s844 = smul.addr %s843, 4
          %s845 = smul.addr %s844, 8
          %s846 = scalar_lea.vmem %s29, %s845
        $region88: #{run.1} parent=83 // pred_fallthru
          _
        // Predicated region
        $region89: #{run.1} parent=83 // pred_check
          %p847 = pneg %p411
        $region90: #{run.1} parent=83 // pred_check_branch
          %849 = sbr.rel (%p847) target = $region92
        $region91: #{run.1} parent=83 // pred_region
          %p850 = scmp.lt.s32.totalorder %s71, 1
          %s851 = scalar_select %p850, %s71, 1
          %s852 = scalar_lea.vmem %s31, %s851
        $region92: #{run.1} parent=83 // pred_fallthru
          _
        // Predicated region
        $region93: #{run.1} parent=83 // pred_check
          %p853 = pneg %p437
        $region94: #{run.1} parent=83 // pred_check_branch
          %855 = sbr.rel (%p853) target = $region96
        $region95: #{run.1} parent=83 // pred_region
          %p856 = scmp.lt.s32.totalorder %s71, 1
          %s857 = scalar_select %p856, %s71, 1
          %s858 = smul.addr %s857, 4
          %s859 = smul.addr %s858, 8
          %s860 = scalar_lea.vmem %s33, %s859
        $region96: #{run.1} parent=83 // pred_fallthru
          _
        // Predicated region
        $region97: #{run.1} parent=83 // pred_check
          %p861 = pneg %p463
        $region98: #{run.1} parent=83 // pred_check_branch
          %863 = sbr.rel (%p861) target = $region100
        $region99: #{run.1} parent=83 // pred_region
          %p864 = scmp.lt.s32.totalorder %s71, 1
          %s865 = scalar_select %p864, %s71, 1
          %s866 = scalar_lea.vmem %s35, %s865
        $region100: #{run.1} parent=83 // pred_fallthru
          _
        // Predicated region
        $region101: #{run.1} parent=83 // pred_check
          %p867 = pneg %p489
        $region102: #{run.1} parent=83 // pred_check_branch
          %869 = sbr.rel (%p867) target = $region104
        $region103: #{run.1} parent=83 // pred_region
          %p870 = scmp.lt.s32.totalorder %s71, 1
          %s871 = scalar_select %p870, %s71, 1
          %s872 = scalar_lea.vmem %s37, %s871
        $region104: #{run.1} parent=83 // pred_fallthru
          _
        // Predicated region
        $region105: #{run.1} parent=83 // pred_check
          %p873 = pneg %p515
        $region106: #{run.1} parent=83 // pred_check_branch
          %875 = sbr.rel (%p873) target = $region108
        $region107: #{run.1} parent=83 // pred_region
          %p876 = scmp.lt.s32.totalorder %s71, 1
          %s877 = scalar_select %p876, %s71, 1
          %s878 = scalar_lea.vmem %s39, %s877
        $region108: #{run.1} parent=83 // pred_fallthru
          _
        // Predicated region
        $region109: #{run.1} parent=83 // pred_check
          %p879 = pneg %p541
        $region110: #{run.1} parent=83 // pred_check_branch
          %881 = sbr.rel (%p879) target = $region112
        $region111: #{run.1} parent=83 // pred_region
          %p882 = scmp.lt.s32.totalorder %s71, 1
          %s883 = scalar_select %p882, %s71, 1
          %s884 = smul.addr %s883, 4
          %s885 = smul.addr %s884, 8
          %s886 = scalar_lea.vmem %s41, %s885
        $region112: #{run.1} parent=83 // pred_fallthru
          _
        // Predicated region
        $region113: #{run.1} parent=83 // pred_check
          %p887 = pneg %p567
        $region114: #{run.1} parent=83 // pred_check_branch
          %889 = sbr.rel (%p887) target = $region116
        $region115: #{run.1} parent=83 // pred_region
          %s890 = sand.u32 %s557, 1
          %s891 = scalar_lea.sflag [#allocation4], %s890
          %s892 = sand.u32 %s557, 1
          %s893 = scalar_lea.vmem [#allocation3], %s892
          %s895 = ssub.s32 16, 16
          %896 = vsyncadd %s891, %s895
          %s897 = smul.addr %s71, 16
          %s898 = scalar_lea.hbm %s43, %s897
          %s900 = sshll.u32 %s893, 4
          %s901 = int_to_ptr.vmem [resolvable:$true] %s900
          %903 = dma.hbm_to_vmem [thread:$0]  %s898, 16, %s901, %s891
        $region116: #{run.1} parent=83 // pred_fallthru
          _
        // Predicated region
        $region117: #{run.1} parent=83 // pred_check
          %p904 = pneg %p593
        $region118: #{run.1} parent=83 // pred_check_branch
          %906 = sbr.rel (%p904) target = $region120
        $region119: #{run.1} parent=83 // pred_region
          %p907 = scmp.lt.s32.totalorder %s71, 1
          %s908 = scalar_select %p907, %s71, 1
          %s909 = smul.addr %s908, 8
          %s910 = smul.addr %s909, 8
          %s911 = scalar_lea.vmem %s45, %s910
        $region120: #{run.1} parent=83 // pred_fallthru
          _
        // Predicated region
        $region121: #{run.1} parent=83 // pred_check
          %p912 = pneg %p619
        $region122: #{run.1} parent=83 // pred_check_branch
          %914 = sbr.rel (%p912) target = $region124
        $region123: #{run.1} parent=83 // pred_region
          %s915 = sand.u32 %s71, 1
          %s916 = scalar_lea.sflag [#allocation6], %s915
          %s917 = sand.u32 %s609, 1
          %s918 = scalar_lea.vmem [#allocation5], %s917
          %s920 = ssub.s32 16, 16
          %921 = vsyncadd %s916, %s920
          %s922 = smul.addr %s71, 16
          %s923 = scalar_lea.hbm %s47, %s922
          %s925 = sshll.u32 %s918, 4
          %s926 = int_to_ptr.vmem [resolvable:$true] %s925
          %928 = dma.hbm_to_vmem [thread:$0]  %s923, 16, %s926, %s916
        $region124: #{run.1} parent=83 // pred_fallthru
          _
        // Predicated region
        $region125: #{run.1} parent=83 // pred_check
          %p929 = pneg %p645
        $region126: #{run.1} parent=83 // pred_check_branch
          %931 = sbr.rel (%p929) target = $region128
        $region127: #{run.1} parent=83 // pred_region
          %p932 = scmp.lt.s32.totalorder %s71, 1
          %s933 = scalar_select %p932, %s71, 1
          %s934 = scalar_lea.vmem %s49, %s933
        $region128: #{run.1} parent=83 // pred_fallthru
          _
        // Predicated region
        $region129: #{run.1} parent=83 // pred_check
          %p935 = pneg %p671
        $region130: #{run.1} parent=83 // pred_check_branch
          %937 = sbr.rel (%p935) target = $region132
        $region131: #{run.1} parent=83 // pred_region
          %p938 = scmp.lt.s32.totalorder %s71, 1
          %s939 = scalar_select %p938, %s71, 1
          %s940 = scalar_lea.vmem %s51, %s939
        $region132: #{run.1} parent=83 // pred_fallthru
          _
      $region84: #{run.1} parent=5 // pred_fallthru
        _
      %p941 = scmp.le.s32.totalorder 1, %s71
      %p942 = scmp.lt.s32.totalorder %s71, 3
      %p943 = pnand %p941, %p942
      %p944 = pneg %p943
      // Predicated region
      $region133: #{run.1} parent=5 // pred_check
        _
      $region134: #{run.1} parent=5 // pred_check_branch
        %946 = sbr.rel (%p943) target = $region136
      $region135: #{run.1} parent=5 // pred_region
        %s947 = ssub.s32 %s71, 1
        %s948 = sand.u32 %s560, 1
        %s949 = scalar_lea.sflag [#allocation4], %s948
        %s950 = sand.u32 %s560, 1
        %s951 = scalar_lea.vmem [#allocation3], %s950
        // Predicated region
        $region137: #{run.1} parent=135 // pred_check
          %p952 = pneg %p573
        $region138: #{run.1} parent=135 // pred_check_branch
          %954 = sbr.rel (%p952) target = $region140
        $region139: #{run.1} parent=135 // pred_region
          %955 = dma.done %s949, 16
        $region140: #{run.1} parent=135 // pred_fallthru
          _
        %s956 = sand.u32 %s76, 1
        %s957 = scalar_lea.sflag [#allocation6], %s956
        %s958 = sand.u32 %s612, 1
        %s959 = scalar_lea.vmem [#allocation5], %s958
        // Predicated region
        $region141: #{run.1} parent=135 // pred_check
          %p960 = pneg %p625
        $region142: #{run.1} parent=135 // pred_check_branch
          %962 = sbr.rel (%p960) target = $region144
        $region143: #{run.1} parent=135 // pred_region
          %963 = dma.done %s957, 16
        $region144: #{run.1} parent=135 // pred_fallthru
          _
        // Predicated region
        $region145: #{run.1} parent=135 // pred_check
          %p964 = pneg %p719
        $region146: #{run.1} parent=135 // pred_check_branch
          %966 = sbr.rel (%p964) target = $region148
        $region147: #{run.1} parent=135 // pred_region
          %967 = dma.done [#allocation6], 16
        $region148: #{run.1} parent=135 // pred_fallthru
          _
        %p968 = pneg %p92
        %p969 = pneg %p89
        %p970 = pneg %p113
        %p971 = pneg %p110
        %p972 = pneg %p134
        %p973 = pneg %p131
        %p974 = pneg %p155
        %p975 = pneg %p152
        %p976 = pneg %p176
        %p977 = pneg %p173
        %p978 = pneg %p197
        %p979 = pneg %p194
        %p980 = pneg %p218
        %p981 = pneg %p215
        %p982 = pneg %p239
        %p983 = pneg %p236
        %p984 = pneg %p260
        %p985 = pneg %p257
        %p986 = pneg %p281
        %p987 = pneg %p278
        %p988 = pneg %p302
        %p989 = pneg %p299
        %p990 = pneg %p323
        %p991 = pneg %p320
        %p992 = pneg %p344
        %p993 = pneg %p341
        %p994 = pneg %p365
        %p995 = pneg %p362
        %p996 = scmp.lt.s32.totalorder %s76, 1
        %s997 = scalar_select %p996, %s76, 1
        %s998 = smul.addr %s997, 4
        %s999 = smul.addr %s998, 8
        %s1000 = scalar_lea.vmem %s29, %s999
        %p1001 = pneg %p391
        %p1002 = pneg %p388
        %p1003 = scmp.lt.s32.totalorder %s76, 1
        %s1004 = scalar_select %p1003, %s76, 1
        %s1005 = scalar_lea.vmem %s31, %s1004
        %p1006 = pneg %p417
        %p1007 = pneg %p414
        %p1008 = scmp.lt.s32.totalorder %s76, 1
        %s1009 = scalar_select %p1008, %s76, 1
        %s1010 = smul.addr %s1009, 4
        %s1011 = smul.addr %s1010, 8
        %s1012 = scalar_lea.vmem %s33, %s1011
        %p1013 = pneg %p443
        %p1014 = pneg %p440
        %p1015 = scmp.lt.s32.totalorder %s76, 1
        %s1016 = scalar_select %p1015, %s76, 1
        %s1017 = scalar_lea.vmem %s35, %s1016
        %p1018 = pneg %p469
        %p1019 = pneg %p466
        %p1020 = scmp.lt.s32.totalorder %s76, 1
        %s1021 = scalar_select %p1020, %s76, 1
        %s1022 = scalar_lea.vmem %s37, %s1021
        %p1023 = pneg %p495
        %p1024 = pneg %p492
        %p1025 = scmp.lt.s32.totalorder %s76, 1
        %s1026 = scalar_select %p1025, %s76, 1
        %s1027 = scalar_lea.vmem %s39, %s1026
        %p1028 = pneg %p521
        %p1029 = pneg %p518
        %p1030 = scmp.lt.s32.totalorder %s76, 1
        %s1031 = scalar_select %p1030, %s76, 1
        %s1032 = smul.addr %s1031, 4
        %s1033 = smul.addr %s1032, 8
        %s1034 = scalar_lea.vmem %s41, %s1033
        %p1035 = pneg %p547
        %p1036 = pneg %p544
        %s1037 = sand.u32 %s560, 1
        %s1038 = scalar_lea.sflag [#allocation4], %s1037
        %s1039 = sand.u32 %s560, 1
        %s1040 = scalar_lea.vmem [#allocation3], %s1039
        %p1041 = pneg %p573
        %p1042 = pneg %p570
        %p1043 = scmp.lt.s32.totalorder %s76, 1
        %s1044 = scalar_select %p1043, %s76, 1
        %s1045 = smul.addr %s1044, 8
        %s1046 = smul.addr %s1045, 8
        %s1047 = scalar_lea.vmem %s45, %s1046
        %p1048 = pneg %p599
        %p1049 = pneg %p596
        %s1050 = sand.u32 %s76, 1
        %s1051 = scalar_lea.sflag [#allocation6], %s1050
        %s1052 = sand.u32 %s612, 1
        %s1053 = scalar_lea.vmem [#allocation5], %s1052
        %p1054 = pneg %p625
        %p1055 = pneg %p622
        %p1056 = scmp.lt.s32.totalorder %s76, 1
        %s1057 = scalar_select %p1056, %s76, 1
        %s1058 = scalar_lea.vmem %s49, %s1057
        %p1059 = pneg %p651
        %p1060 = pneg %p648
        %p1061 = scmp.lt.s32.totalorder %s76, 1
        %s1062 = scalar_select %p1061, %s76, 1
        %s1063 = scalar_lea.vmem %s51, %s1062
        %p1064 = pneg %p677
        %p1065 = pneg %p674
        %p1066 = pneg %p698
        %p1067 = pneg %p695
        %p1068 = pneg %p719
        %p1069 = pneg %p716
        %p1070 = pneg %p740
        %p1071 = pneg %p737
        %p1072 = pneg %p761
        %p1073 = pneg %p758
        %p1074 = scmp.lt.s32.totalorder %s76, 1
        %s1075 = scalar_select %p1074, %s76, 1
        %s1076 = smul.addr %s1075, 4
        %s1077 = smul.addr %s1076, 8
        %s1078 = scalar_lea.vmem %s29, %s1077
        %p1079 = scmp.lt.s32.totalorder %s76, 1
        %s1080 = scalar_select %p1079, %s76, 1
        %s1081 = scalar_lea.vmem %s31, %s1080
        %p1082 = scmp.lt.s32.totalorder %s76, 1
        %s1083 = scalar_select %p1082, %s76, 1
        %s1084 = smul.addr %s1083, 4
        %s1085 = smul.addr %s1084, 8
        %s1086 = scalar_lea.vmem %s33, %s1085
        %p1087 = scmp.lt.s32.totalorder %s76, 1
        %s1088 = scalar_select %p1087, %s76, 1
        %s1089 = scalar_lea.vmem %s35, %s1088
        %p1090 = scmp.lt.s32.totalorder %s76, 1
        %s1091 = scalar_select %p1090, %s76, 1
        %s1092 = scalar_lea.vmem %s37, %s1091
        %p1093 = scmp.lt.s32.totalorder %s76, 1
        %s1094 = scalar_select %p1093, %s76, 1
        %s1095 = scalar_lea.vmem %s39, %s1094
        %p1096 = scmp.lt.s32.totalorder %s76, 1
        %s1097 = scalar_select %p1096, %s76, 1
        %s1098 = smul.addr %s1097, 4
        %s1099 = smul.addr %s1098, 8
        %s1100 = scalar_lea.vmem %s41, %s1099
        %p1101 = scmp.lt.s32.totalorder %s76, 1
        %s1102 = scalar_select %p1101, %s76, 1
        %s1103 = smul.addr %s1102, 8
        %s1104 = smul.addr %s1103, 8
        %s1105 = scalar_lea.vmem %s45, %s1104
        %p1106 = scmp.lt.s32.totalorder %s76, 1
        %s1107 = scalar_select %p1106, %s76, 1
        %s1108 = scalar_lea.vmem %s49, %s1107
        %p1109 = scmp.lt.s32.totalorder %s76, 1
        %s1110 = scalar_select %p1109, %s76, 1
        %s1111 = scalar_lea.vmem %s51, %s1110
        %p1112 = scmp.eq.s32.totalorder %s76, 0
        // Predicated region
        $region149: #{run.1} parent=135 // pred_check
          %p1113 = pneg %p1112
        $region150: #{run.1} parent=135 // pred_check_branch
          %1115 = sbr.rel (%p1113) target = $region152
        $region151: #{run.1} parent=135 // pred_region
          %v1116 = vld [vmem:[%s9] sm:$0xff]
          %v1117 = vld [vmem:[%s9 + $0x8] sm:$0x1]
          %v1118 = vld [vmem:[%s5] sm:$0x3]
          %v1119 = vld [vmem:[%s17] sm:$0xff]
          %v1120 = vld [vmem:[%s17 + $0x8] sm:$0xff]
          %v1121 = vld [vmem:[%s17 + $0x10] sm:$0xff]
          %v1122 = vld [vmem:[%s17 + $0x18] sm:$0xff]
          %v1123 = vld [vmem:[%s19] sm:$0x1]
          %v1125 = vlaneseq
          %v1126 = vshrl.u32 %v1125, 7
          %v1127 = vsub.s32 0, %v1126
          %v1128 = vrot.slane %v1123, %v1127
          %vm1130 = vcmask 261120
          %v1132 = vsel %vm1130, %v1118, 0
          %1134 = vmatprep.subr.mxu0 0.0
          %1135 = vmatpush1.msra.mxu0 0.0
          %1136 = vmatprep.subr.mxu0 0.0
          %1137 = vmatpush1.msra.mxu0 0.0
          %1138 = vmatprep.subr.mxu0 0.0
          %1139 = vmatpush1.msra.mxu0 0.0
          %1140 = vmatprep.subr.mxu0 0.0
          %1141 = vmatpush1.msra.mxu0 0.0
          %1142 = vmatprep.subr.mxu0 0.0
          %1143 = vmatpush1.msra.mxu0 0.0
          %1144 = vmatprep.subr.mxu0 0.0
          %1145 = vmatpush1.msra.mxu0 0.0
          %1146 = vmatprep.subr.mxu0 0.0
          %1147 = vmatpush1.msra.mxu0 0.0
          %1148 = vmatprep.subr.mxu0 0.0
          %1149 = vmatpush1.msra.mxu0 0.0
          %1150 = vmatprep.subr.mxu0 0.0
          %1151 = vmatpush1.msra.mxu0 0.0
          %1152 = vmatprep.subr.mxu0 0.0
          %1153 = vmatpush1.msra.mxu0 0.0
          %1154 = vmatprep.subr.mxu0 0.0
          %1155 = vmatpush1.msra.mxu0 0.0
          %1156 = vmatprep.subr.mxu0 0.0
          %1157 = vmatpush1.msra.mxu0 0.0
          %1158 = vmatprep.subr.mxu0 0.0
          %1159 = vmatpush1.msra.mxu0 %v1122
          %1160 = vmatprep.subr.mxu0 0.0
          %1161 = vmatpush1.msra.mxu0 %v1121
          %1162 = vmatprep.subr.mxu0 0.0
          %1163 = vmatpush1.msra.mxu0 %v1120
          %1164 = vmatprep.subr.mxu0 0.0
          %1165 = vmatpush1.msra.mxu0 %v1119
          %1166 = vmatprep.subr.mxu0 0.0
          %1167 = vmatpush2.msra.mxu0 0.0
          %1168 = vmatprep.subr.mxu0 0.0
          %1169 = vmatpush2.msra.mxu0 0.0
          %1170 = vmatprep.subr.mxu0 0.0
          %1171 = vmatpush2.msra.mxu0 0.0
          %1172 = vmatprep.subr.mxu0 0.0
          %1173 = vmatpush2.msra.mxu0 0.0
          %1174 = vmatprep.subr.mxu0 0.0
          %1175 = vmatpush2.msra.mxu0 0.0
          %1176 = vmatprep.subr.mxu0 0.0
          %1177 = vmatpush2.msra.mxu0 0.0
          %1178 = vmatprep.subr.mxu0 0.0
          %1179 = vmatpush2.msra.mxu0 0.0
          %1180 = vmatprep.subr.mxu0 0.0
          %1181 = vmatpush2.msra.mxu0 0.0
          %1182 = vmatprep.subr.mxu0 0.0
          %1183 = vmatpush2.msra.mxu0 0.0
          %1184 = vmatprep.subr.mxu0 0.0
          %1185 = vmatpush2.msra.mxu0 0.0
          %1186 = vmatprep.subr.mxu0 0.0
          %1187 = vmatpush2.msra.mxu0 0.0
          %1188 = vmatprep.subr.mxu0 0.0
          %1189 = vmatpush2.msra.mxu0 0.0
          %1190 = vmatprep.subr.mxu0 0.0
          %1191 = vmatpush2.msra.mxu0 0.0
          %1192 = vmatprep.subr.mxu0 0.0
          %1193 = vmatpush2.msra.mxu0 0.0
          %1194 = vmatprep.subr.mxu0 0.0
          %1195 = vmatpush2.msra.mxu0 0.0
          %1196 = vmatprep.subr.mxu0 0.0
          %1197 = vmatpush2.msra.mxu0 0.0
          %1198 = vmatprep.mubr.f32.mxu0 0.0
          %1199 = vmatmul.mubr.f32.gmra.mxu0 %v1132
          %v1200 = vpop.f32.mrf.mxu0
          %v1201 = vadd.f32 %v1128, %v1200
          %v1202 = vpop.f32.mrf.mxu0
          %1203 = vdwg.mxu0
          %v1204 = vxor.u32 %v1201, 2147483648
          %v1205 = vmul.f32 %v1204, 1.442695
          %v1206 = vpow.pop %v1205
          %v1207 = vadd.f32 %v1206, 1.0
          %v1208 = vrcp.pop %v1207
          %v1209 = vmul.f32 1.0, %v1208
          %v1210 = vmul.f32 %v1201, %v1209
          %v1211 = vld [vmem:[%s21] sm:$0xff]
          %v1212 = vld [vmem:[%s21 + $0x8] sm:$0xff]
          %v1213 = vld [vmem:[%s21 + $0x10] sm:$0xff]
          %v1214 = vld [vmem:[%s21 + $0x18] sm:$0xff]
          %v1215 = vld [vmem:[%s23] sm:$0x1]
          %v1217 = vlaneseq
          %v1218 = vshrl.u32 %v1217, 7
          %v1219 = vsub.s32 0, %v1218
          %v1220 = vrot.slane %v1215, %v1219
          %v1223 = vsel %vm1130, %v1210, 0
          %1225 = vmatprep.subr.mxu0 0.0
          %1226 = vmatpush1.msra.mxu0 0.0
          %1227 = vmatprep.subr.mxu0 0.0
          %1228 = vmatpush1.msra.mxu0 0.0
          %1229 = vmatprep.subr.mxu0 0.0
          %1230 = vmatpush1.msra.mxu0 0.0
          %1231 = vmatprep.subr.mxu0 0.0
          %1232 = vmatpush1.msra.mxu0 0.0
          %1233 = vmatprep.subr.mxu0 0.0
          %1234 = vmatpush1.msra.mxu0 0.0
          %1235 = vmatprep.subr.mxu0 0.0
          %1236 = vmatpush1.msra.mxu0 0.0
          %1237 = vmatprep.subr.mxu0 0.0
          %1238 = vmatpush1.msra.mxu0 0.0
          %1239 = vmatprep.subr.mxu0 0.0
          %1240 = vmatpush1.msra.mxu0 0.0
          %1241 = vmatprep.subr.mxu0 0.0
          %1242 = vmatpush1.msra.mxu0 0.0
          %1243 = vmatprep.subr.mxu0 0.0
          %1244 = vmatpush1.msra.mxu0 0.0
          %1245 = vmatprep.subr.mxu0 0.0
          %1246 = vmatpush1.msra.mxu0 0.0
          %1247 = vmatprep.subr.mxu0 0.0
          %1248 = vmatpush1.msra.mxu0 0.0
          %1249 = vmatprep.subr.mxu0 0.0
          %1250 = vmatpush1.msra.mxu0 %v1214
          %1251 = vmatprep.subr.mxu0 0.0
          %1252 = vmatpush1.msra.mxu0 %v1213
          %1253 = vmatprep.subr.mxu0 0.0
          %1254 = vmatpush1.msra.mxu0 %v1212
          %1255 = vmatprep.subr.mxu0 0.0
          %1256 = vmatpush1.msra.mxu0 %v1211
          %1257 = vmatprep.subr.mxu0 0.0
          %1258 = vmatpush2.msra.mxu0 0.0
          %1259 = vmatprep.subr.mxu0 0.0
          %1260 = vmatpush2.msra.mxu0 0.0
          %1261 = vmatprep.subr.mxu0 0.0
          %1262 = vmatpush2.msra.mxu0 0.0
          %1263 = vmatprep.subr.mxu0 0.0
          %1264 = vmatpush2.msra.mxu0 0.0
          %1265 = vmatprep.subr.mxu0 0.0
          %1266 = vmatpush2.msra.mxu0 0.0
          %1267 = vmatprep.subr.mxu0 0.0
          %1268 = vmatpush2.msra.mxu0 0.0
          %1269 = vmatprep.subr.mxu0 0.0
          %1270 = vmatpush2.msra.mxu0 0.0
          %1271 = vmatprep.subr.mxu0 0.0
          %1272 = vmatpush2.msra.mxu0 0.0
          %1273 = vmatprep.subr.mxu0 0.0
          %1274 = vmatpush2.msra.mxu0 0.0
          %1275 = vmatprep.subr.mxu0 0.0
          %1276 = vmatpush2.msra.mxu0 0.0
          %1277 = vmatprep.subr.mxu0 0.0
          %1278 = vmatpush2.msra.mxu0 0.0
          %1279 = vmatprep.subr.mxu0 0.0
          %1280 = vmatpush2.msra.mxu0 0.0
          %1281 = vmatprep.subr.mxu0 0.0
          %1282 = vmatpush2.msra.mxu0 0.0
          %1283 = vmatprep.subr.mxu0 0.0
          %1284 = vmatpush2.msra.mxu0 0.0
          %1285 = vmatprep.subr.mxu0 0.0
          %1286 = vmatpush2.msra.mxu0 0.0
          %1287 = vmatprep.subr.mxu0 0.0
          %1288 = vmatpush2.msra.mxu0 0.0
          %1289 = vmatprep.mubr.f32.mxu0 0.0
          %1290 = vmatmul.mubr.f32.gmra.mxu0 %v1223
          %v1291 = vpop.f32.mrf.mxu0
          %v1292 = vadd.f32 %v1220, %v1291
          %v1293 = vpop.f32.mrf.mxu0
          %1294 = vdwg.mxu0
          %v1295 = vld [vmem:[%s7] sm:$0x3]
          %v1296 = vld [vmem:[%s25] sm:$0xff]
          %v1297 = vld [vmem:[%s25 + $0x8] sm:$0xff]
          %v1298 = vld [vmem:[%s25 + $0x10] sm:$0xff]
          %v1299 = vld [vmem:[%s25 + $0x18] sm:$0xff]
          %v1301 = vsel %vm1130, %v1295, 0
          %1303 = vmatprep.subr.mxu0 0.0
          %1304 = vmatpush1.msra.mxu0 0.0
          %1305 = vmatprep.subr.mxu0 0.0
          %1306 = vmatpush1.msra.mxu0 0.0
          %1307 = vmatprep.subr.mxu0 0.0
          %1308 = vmatpush1.msra.mxu0 0.0
          %1309 = vmatprep.subr.mxu0 0.0
          %1310 = vmatpush1.msra.mxu0 0.0
          %1311 = vmatprep.subr.mxu0 0.0
          %1312 = vmatpush1.msra.mxu0 0.0
          %1313 = vmatprep.subr.mxu0 0.0
          %1314 = vmatpush1.msra.mxu0 0.0
          %1315 = vmatprep.subr.mxu0 0.0
          %1316 = vmatpush1.msra.mxu0 0.0
          %1317 = vmatprep.subr.mxu0 0.0
          %1318 = vmatpush1.msra.mxu0 0.0
          %1319 = vmatprep.subr.mxu0 0.0
          %1320 = vmatpush1.msra.mxu0 0.0
          %1321 = vmatprep.subr.mxu0 0.0
          %1322 = vmatpush1.msra.mxu0 0.0
          %1323 = vmatprep.subr.mxu0 0.0
          %1324 = vmatpush1.msra.mxu0 0.0
          %1325 = vmatprep.subr.mxu0 0.0
          %1326 = vmatpush1.msra.mxu0 0.0
          %1327 = vmatprep.subr.mxu0 0.0
          %1328 = vmatpush1.msra.mxu0 %v1299
          %1329 = vmatprep.subr.mxu0 0.0
          %1330 = vmatpush1.msra.mxu0 %v1298
          %1331 = vmatprep.subr.mxu0 0.0
          %1332 = vmatpush1.msra.mxu0 %v1297
          %1333 = vmatprep.subr.mxu0 0.0
          %1334 = vmatpush1.msra.mxu0 %v1296
          %1335 = vmatprep.subr.mxu0 0.0
          %1336 = vmatpush2.msra.mxu0 0.0
          %1337 = vmatprep.subr.mxu0 0.0
          %1338 = vmatpush2.msra.mxu0 0.0
          %1339 = vmatprep.subr.mxu0 0.0
          %1340 = vmatpush2.msra.mxu0 0.0
          %1341 = vmatprep.subr.mxu0 0.0
          %1342 = vmatpush2.msra.mxu0 0.0
          %1343 = vmatprep.subr.mxu0 0.0
          %1344 = vmatpush2.msra.mxu0 0.0
          %1345 = vmatprep.subr.mxu0 0.0
          %1346 = vmatpush2.msra.mxu0 0.0
          %1347 = vmatprep.subr.mxu0 0.0
          %1348 = vmatpush2.msra.mxu0 0.0
          %1349 = vmatprep.subr.mxu0 0.0
          %1350 = vmatpush2.msra.mxu0 0.0
          %1351 = vmatprep.subr.mxu0 0.0
          %1352 = vmatpush2.msra.mxu0 0.0
          %1353 = vmatprep.subr.mxu0 0.0
          %1354 = vmatpush2.msra.mxu0 0.0
          %1355 = vmatprep.subr.mxu0 0.0
          %1356 = vmatpush2.msra.mxu0 0.0
          %1357 = vmatprep.subr.mxu0 0.0
          %1358 = vmatpush2.msra.mxu0 0.0
          %1359 = vmatprep.subr.mxu0 0.0
          %1360 = vmatpush2.msra.mxu0 0.0
          %1361 = vmatprep.subr.mxu0 0.0
          %1362 = vmatpush2.msra.mxu0 0.0
          %1363 = vmatprep.subr.mxu0 0.0
          %1364 = vmatpush2.msra.mxu0 0.0
          %1365 = vmatprep.subr.mxu0 0.0
          %1366 = vmatpush2.msra.mxu0 0.0
          %1367 = vmatprep.mubr.f32.mxu0 0.0
          %1368 = vmatmul.mubr.f32.gmra.mxu0 %v1301
          %v1369 = vpop.f32.mrf.mxu0
          %v1370 = vadd.f32 0.0, %v1369
          %v1371 = vpop.f32.mrf.mxu0
          %1372 = vdwg.mxu0
          %v1373 = vadd.f32 %v1292, %v1370
          %v1374 = vld [vmem:[%s27] sm:$0x1]
          %v1376 = vlaneseq
          %v1377 = vshrl.u32 %v1376, 7
          %v1378 = vsub.s32 0, %v1377
          %v1379 = vrot.slane %v1374, %v1378
          %v1381 = vadd.f32 %v1373, %v1379
          %v1382 = vlaneseq
          %v1383 = vshrl.u32 %v1382, 7
          %v1384 = vsub.s32 0, %v1383
          %v1385 = vrot.slane %v1116, %v1384
          %v1386 = vadd.f32 %v1381, %v1385
          %v1387 = vld [vmem:[%s1] sm:$0xff]
          %v1388 = vld [vmem:[%s1 + $0x8] sm:$0xff]
          %v1389 = vld [vmem:[%s1 + $0x10] sm:$0xff]
          %v1390 = vld [vmem:[%s1 + $0x18] sm:$0xff]
          %v1391 = vld [vmem:[%s3] sm:$0xff]
          %v1392 = vld [vmem:[%s3 + $0x8] sm:$0xff]
          %v1393 = vld [vmem:[%s3 + $0x10] sm:$0xff]
          %v1394 = vld [vmem:[%s3 + $0x18] sm:$0x3]
          %v1395 = vld [vmem:[%s3 + $0x20] sm:$0xff]
          %v1396 = vld [vmem:[%s3 + $0x28] sm:$0xff]
          %v1397 = vld [vmem:[%s3 + $0x30] sm:$0xff]
          %v1398 = vld [vmem:[%s3 + $0x38] sm:$0x3]
          %v1399 = vld [vmem:[%s11] sm:$0xff]
          %v1400 = vld [vmem:[%s11 + $0x8] sm:$0xff]
          %v1401 = vld [vmem:[%s13] sm:$0xff]
          %v1402 = vld [vmem:[%s13 + $0x8] sm:$0xff]
          %v1403 = vld [vmem:[%s13 + $0x10] sm:$0xff]
          %v1404 = vld [vmem:[%s13 + $0x18] sm:$0x3]
          %1405 = vxpose.xlu0.b32.start [1/16] %v1391, 128
          %1406 = vxpose.xlu0.b32.cont [2/16] %v1392, 128
          %1407 = vxpose.xlu0.b32.cont [3/16] %v1393, 128
          %1408 = vxpose.xlu0.b32.cont [4/16] %v1394, 128
          %1409 = vxpose.xlu0.b32.cont [5/16] 0.0, 128
          %1410 = vxpose.xlu0.b32.cont [6/16] 0.0, 128
          %1411 = vxpose.xlu0.b32.cont [7/16] 0.0, 128
          %1412 = vxpose.xlu0.b32.cont [8/16] 0.0, 128
          %1413 = vxpose.xlu0.b32.cont [9/16] 0.0, 128
          %1414 = vxpose.xlu0.b32.cont [10/16] 0.0, 128
          %1415 = vxpose.xlu0.b32.cont [11/16] 0.0, 128
          %1416 = vxpose.xlu0.b32.cont [12/16] 0.0, 128
          %1417 = vxpose.xlu0.b32.cont [13/16] 0.0, 128
          %1418 = vxpose.xlu0.b32.cont [14/16] 0.0, 128
          %1419 = vxpose.xlu0.b32.cont [15/16] 0.0, 128
          %1420 = vxpose.xlu0.b32.end [16/16] 0.0, 128
          %v1421 = vpop.trf.xlu0
          %v1422 = vpop.trf.xlu0
          %v1423 = vpop.trf.xlu0
          %v1424 = vpop.trf.xlu0
          %v1425 = vpop.trf.xlu0
          %v1426 = vpop.trf.xlu0
          %v1427 = vpop.trf.xlu0
          %v1428 = vpop.trf.xlu0
          %v1429 = vpop.trf.xlu0
          %v1430 = vpop.trf.xlu0
          %v1431 = vpop.trf.xlu0
          %v1432 = vpop.trf.xlu0
          %v1433 = vpop.trf.xlu0
          %v1434 = vpop.trf.xlu0
          %v1435 = vpop.trf.xlu0
          %v1436 = vpop.trf.xlu0
          %vm1437 = vcmask 211968
          %v1439 = vsel %vm1437, %v1421, 0
          %vm1441 = vcmask 1041408
          %v1443 = vsel %vm1441, %v1404, 0
          %1445 = vmatprep.subr.mxu0 0.0
          %1446 = vmatpush1.msra.mxu0 0.0
          %1447 = vmatprep.subr.mxu0 0.0
          %1448 = vmatpush1.msra.mxu0 0.0
          %1449 = vmatprep.subr.mxu0 0.0
          %1450 = vmatpush1.msra.mxu0 0.0
          %1451 = vmatprep.subr.mxu0 0.0
          %1452 = vmatpush1.msra.mxu0 0.0
          %1453 = vmatprep.subr.mxu0 0.0
          %1454 = vmatpush1.msra.mxu0 0.0
          %1455 = vmatprep.subr.mxu0 0.0
          %1456 = vmatpush1.msra.mxu0 0.0
          %1457 = vmatprep.subr.mxu0 0.0
          %1458 = vmatpush1.msra.mxu0 0.0
          %1459 = vmatprep.subr.mxu0 0.0
          %1460 = vmatpush1.msra.mxu0 0.0
          %1461 = vmatprep.subr.mxu0 0.0
          %1462 = vmatpush1.msra.mxu0 0.0
          %1463 = vmatprep.subr.mxu0 0.0
          %1464 = vmatpush1.msra.mxu0 0.0
          %1465 = vmatprep.subr.mxu0 0.0
          %1466 = vmatpush1.msra.mxu0 0.0
          %1467 = vmatprep.subr.mxu0 0.0
          %1468 = vmatpush1.msra.mxu0 0.0
          %1469 = vmatprep.subr.mxu0 0.0
          %1470 = vmatpush1.msra.mxu0 %v1443
          %1471 = vmatprep.subr.mxu0 0.0
          %1472 = vmatpush1.msra.mxu0 %v1403
          %1473 = vmatprep.subr.mxu0 0.0
          %1474 = vmatpush1.msra.mxu0 %v1402
          %1475 = vmatprep.subr.mxu0 0.0
          %1476 = vmatpush1.msra.mxu0 %v1401
          %1477 = vmatprep.subr.mxu0 0.0
          %1478 = vmatpush2.msra.mxu0 0.0
          %1479 = vmatprep.subr.mxu0 0.0
          %1480 = vmatpush2.msra.mxu0 0.0
          %1481 = vmatprep.subr.mxu0 0.0
          %1482 = vmatpush2.msra.mxu0 0.0
          %1483 = vmatprep.subr.mxu0 0.0
          %1484 = vmatpush2.msra.mxu0 0.0
          %1485 = vmatprep.subr.mxu0 0.0
          %1486 = vmatpush2.msra.mxu0 0.0
          %1487 = vmatprep.subr.mxu0 0.0
          %1488 = vmatpush2.msra.mxu0 0.0
          %1489 = vmatprep.subr.mxu0 0.0
          %1490 = vmatpush2.msra.mxu0 0.0
          %1491 = vmatprep.subr.mxu0 0.0
          %1492 = vmatpush2.msra.mxu0 0.0
          %1493 = vmatprep.subr.mxu0 0.0
          %1494 = vmatpush2.msra.mxu0 0.0
          %1495 = vmatprep.subr.mxu0 0.0
          %1496 = vmatpush2.msra.mxu0 0.0
          %1497 = vmatprep.subr.mxu0 0.0
          %1498 = vmatpush2.msra.mxu0 0.0
          %1499 = vmatprep.subr.mxu0 0.0
          %1500 = vmatpush2.msra.mxu0 0.0
          %1501 = vmatprep.subr.mxu0 0.0
          %1502 = vmatpush2.msra.mxu0 0.0
          %1503 = vmatprep.subr.mxu0 0.0
          %1504 = vmatpush2.msra.mxu0 0.0
          %1505 = vmatprep.subr.mxu0 0.0
          %1506 = vmatpush2.msra.mxu0 0.0
          %1507 = vmatprep.subr.mxu0 0.0
          %1508 = vmatpush2.msra.mxu0 0.0
          %1509 = vmatprep.mubr.f32.mxu0 0.0
          %1510 = vmatmul.mubr.f32.gmra.mxu0 %v1439
          %v1511 = vpop.f32.mrf.mxu0
          %v1512 = vadd.f32 0.0, %v1511
          %v1513 = vpop.f32.mrf.mxu0
          %1514 = vdwg.mxu0
          %1515 = vxpose.xlu0.b32.start [1/16] %v1387, 128
          %1516 = vxpose.xlu0.b32.cont [2/16] %v1388, 128
          %1517 = vxpose.xlu0.b32.cont [3/16] 0.0, 128
          %1518 = vxpose.xlu0.b32.cont [4/16] 0.0, 128
          %1519 = vxpose.xlu0.b32.cont [5/16] 0.0, 128
          %1520 = vxpose.xlu0.b32.cont [6/16] 0.0, 128
          %1521 = vxpose.xlu0.b32.cont [7/16] 0.0, 128
          %1522 = vxpose.xlu0.b32.cont [8/16] 0.0, 128
          %1523 = vxpose.xlu0.b32.cont [9/16] 0.0, 128
          %1524 = vxpose.xlu0.b32.cont [10/16] 0.0, 128
          %1525 = vxpose.xlu0.b32.cont [11/16] 0.0, 128
          %1526 = vxpose.xlu0.b32.cont [12/16] 0.0, 128
          %1527 = vxpose.xlu0.b32.cont [13/16] 0.0, 128
          %1528 = vxpose.xlu0.b32.cont [14/16] 0.0, 128
          %1529 = vxpose.xlu0.b32.cont [15/16] 0.0, 128
          %1530 = vxpose.xlu0.b32.end [16/16] 0.0, 128
          %v1531 = vpop.trf.xlu0
          %v1532 = vpop.trf.xlu0
          %v1533 = vpop.trf.xlu0
          %v1534 = vpop.trf.xlu0
          %v1535 = vpop.trf.xlu0
          %v1536 = vpop.trf.xlu0
          %v1537 = vpop.trf.xlu0
          %v1538 = vpop.trf.xlu0
          %v1539 = vpop.trf.xlu0
          %v1540 = vpop.trf.xlu0
          %v1541 = vpop.trf.xlu0
          %v1542 = vpop.trf.xlu0
          %v1543 = vpop.trf.xlu0
          %v1544 = vpop.trf.xlu0
          %v1545 = vpop.trf.xlu0
          %v1546 = vpop.trf.xlu0
          %vm1547 = vcmask 130048
          %v1549 = vsel %vm1547, %v1531, 0
          %1551 = vmatprep.subr.mxu0 0.0
          %1552 = vmatpush1.msra.mxu0 0.0
          %1553 = vmatprep.subr.mxu0 0.0
          %1554 = vmatpush1.msra.mxu0 0.0
          %1555 = vmatprep.subr.mxu0 0.0
          %1556 = vmatpush1.msra.mxu0 0.0
          %1557 = vmatprep.subr.mxu0 0.0
          %1558 = vmatpush1.msra.mxu0 0.0
          %1559 = vmatprep.subr.mxu0 0.0
          %1560 = vmatpush1.msra.mxu0 0.0
          %1561 = vmatprep.subr.mxu0 0.0
          %1562 = vmatpush1.msra.mxu0 0.0
          %1563 = vmatprep.subr.mxu0 0.0
          %1564 = vmatpush1.msra.mxu0 0.0
          %1565 = vmatprep.subr.mxu0 0.0
          %1566 = vmatpush1.msra.mxu0 0.0
          %1567 = vmatprep.subr.mxu0 0.0
          %1568 = vmatpush1.msra.mxu0 0.0
          %1569 = vmatprep.subr.mxu0 0.0
          %1570 = vmatpush1.msra.mxu0 0.0
          %1571 = vmatprep.subr.mxu0 0.0
          %1572 = vmatpush1.msra.mxu0 0.0
          %1573 = vmatprep.subr.mxu0 0.0
          %1574 = vmatpush1.msra.mxu0 0.0
          %1575 = vmatprep.subr.mxu0 0.0
          %1576 = vmatpush1.msra.mxu0 0.0
          %1577 = vmatprep.subr.mxu0 0.0
          %1578 = vmatpush1.msra.mxu0 0.0
          %1579 = vmatprep.subr.mxu0 0.0
          %1580 = vmatpush1.msra.mxu0 %v1400
          %1581 = vmatprep.subr.mxu0 0.0
          %1582 = vmatpush1.msra.mxu0 %v1399
          %1583 = vmatprep.subr.mxu0 0.0
          %1584 = vmatpush2.msra.mxu0 0.0
          %1585 = vmatprep.subr.mxu0 0.0
          %1586 = vmatpush2.msra.mxu0 0.0
          %1587 = vmatprep.subr.mxu0 0.0
          %1588 = vmatpush2.msra.mxu0 0.0
          %1589 = vmatprep.subr.mxu0 0.0
          %1590 = vmatpush2.msra.mxu0 0.0
          %1591 = vmatprep.subr.mxu0 0.0
          %1592 = vmatpush2.msra.mxu0 0.0
          %1593 = vmatprep.subr.mxu0 0.0
          %1594 = vmatpush2.msra.mxu0 0.0
          %1595 = vmatprep.subr.mxu0 0.0
          %1596 = vmatpush2.msra.mxu0 0.0
          %1597 = vmatprep.subr.mxu0 0.0
          %1598 = vmatpush2.msra.mxu0 0.0
          %1599 = vmatprep.subr.mxu0 0.0
          %1600 = vmatpush2.msra.mxu0 0.0
          %1601 = vmatprep.subr.mxu0 0.0
          %1602 = vmatpush2.msra.mxu0 0.0
          %1603 = vmatprep.subr.mxu0 0.0
          %1604 = vmatpush2.msra.mxu0 0.0
          %1605 = vmatprep.subr.mxu0 0.0
          %1606 = vmatpush2.msra.mxu0 0.0
          %1607 = vmatprep.subr.mxu0 0.0
          %1608 = vmatpush2.msra.mxu0 0.0
          %1609 = vmatprep.subr.mxu0 0.0
          %1610 = vmatpush2.msra.mxu0 0.0
          %1611 = vmatprep.subr.mxu0 0.0
          %1612 = vmatpush2.msra.mxu0 0.0
          %1613 = vmatprep.subr.mxu0 0.0
          %1614 = vmatpush2.msra.mxu0 0.0
          %1615 = vmatprep.mubr.f32.mxu0 0.0
          %1616 = vmatmul.mubr.f32.gmra.mxu0 %v1549
          %v1617 = vpop.f32.mrf.mxu0
          %v1618 = vadd.f32 %v1512, %v1617
          %v1619 = vpop.f32.mrf.mxu0
          %1620 = vdwg.mxu0
          %v1621 = vld [vmem:[%s15] sm:$0x1]
          %v1623 = vlaneseq
          %v1624 = vshrl.u32 %v1623, 7
          %v1625 = vsub.s32 0, %v1624
          %v1626 = vrot.slane %v1621, %v1625
          %v1628 = vadd.f32 %v1618, %v1626
          %vm1631 = vcmask 1046528
          %v1632 = vrot.slane %v1116, 1
          %v1633 = vrot.slane %v1117, 1
          %v1634 = vsel %vm1631, %v1632, %v1633
          %v1636 = vadd.f32 %v1628, %v1634
          %1637 = vxpose.xlu0.b32.start [1/16] %v1395, 128
          %1638 = vxpose.xlu0.b32.cont [2/16] %v1396, 128
          %1639 = vxpose.xlu0.b32.cont [3/16] %v1397, 128
          %1640 = vxpose.xlu0.b32.cont [4/16] %v1398, 128
          %1641 = vxpose.xlu0.b32.cont [5/16] 0.0, 128
          %1642 = vxpose.xlu0.b32.cont [6/16] 0.0, 128
          %1643 = vxpose.xlu0.b32.cont [7/16] 0.0, 128
          %1644 = vxpose.xlu0.b32.cont [8/16] 0.0, 128
          %1645 = vxpose.xlu0.b32.cont [9/16] 0.0, 128
          %1646 = vxpose.xlu0.b32.cont [10/16] 0.0, 128
          %1647 = vxpose.xlu0.b32.cont [11/16] 0.0, 128
          %1648 = vxpose.xlu0.b32.cont [12/16] 0.0, 128
          %1649 = vxpose.xlu0.b32.cont [13/16] 0.0, 128
          %1650 = vxpose.xlu0.b32.cont [14/16] 0.0, 128
          %1651 = vxpose.xlu0.b32.cont [15/16] 0.0, 128
          %1652 = vxpose.xlu0.b32.end [16/16] 0.0, 128
          %v1653 = vpop.trf.xlu0
          %v1654 = vpop.trf.xlu0
          %v1655 = vpop.trf.xlu0
          %v1656 = vpop.trf.xlu0
          %v1657 = vpop.trf.xlu0
          %v1658 = vpop.trf.xlu0
          %v1659 = vpop.trf.xlu0
          %v1660 = vpop.trf.xlu0
          %v1661 = vpop.trf.xlu0
          %v1662 = vpop.trf.xlu0
          %v1663 = vpop.trf.xlu0
          %v1664 = vpop.trf.xlu0
          %v1665 = vpop.trf.xlu0
          %v1666 = vpop.trf.xlu0
          %v1667 = vpop.trf.xlu0
          %v1668 = vpop.trf.xlu0
          %v1670 = vsel %vm1437, %v1653, 0
          %1672 = vmatprep.subr.mxu0 0.0
          %1673 = vmatpush1.msra.mxu0 0.0
          %1674 = vmatprep.subr.mxu0 0.0
          %1675 = vmatpush1.msra.mxu0 0.0
          %1676 = vmatprep.subr.mxu0 0.0
          %1677 = vmatpush1.msra.mxu0 0.0
          %1678 = vmatprep.subr.mxu0 0.0
          %1679 = vmatpush1.msra.mxu0 0.0
          %1680 = vmatprep.subr.mxu0 0.0
          %1681 = vmatpush1.msra.mxu0 0.0
          %1682 = vmatprep.subr.mxu0 0.0
          %1683 = vmatpush1.msra.mxu0 0.0
          %1684 = vmatprep.subr.mxu0 0.0
          %1685 = vmatpush1.msra.mxu0 0.0
          %1686 = vmatprep.subr.mxu0 0.0
          %1687 = vmatpush1.msra.mxu0 0.0
          %1688 = vmatprep.subr.mxu0 0.0
          %1689 = vmatpush1.msra.mxu0 0.0
          %1690 = vmatprep.subr.mxu0 0.0
          %1691 = vmatpush1.msra.mxu0 0.0
          %1692 = vmatprep.subr.mxu0 0.0
          %1693 = vmatpush1.msra.mxu0 0.0
          %1694 = vmatprep.subr.mxu0 0.0
          %1695 = vmatpush1.msra.mxu0 0.0
          %1696 = vmatprep.subr.mxu0 0.0
          %1697 = vmatpush1.msra.mxu0 %v1443
          %1698 = vmatprep.subr.mxu0 0.0
          %1699 = vmatpush1.msra.mxu0 %v1403
          %1700 = vmatprep.subr.mxu0 0.0
          %1701 = vmatpush1.msra.mxu0 %v1402
          %1702 = vmatprep.subr.mxu0 0.0
          %1703 = vmatpush1.msra.mxu0 %v1401
          %1704 = vmatprep.subr.mxu0 0.0
          %1705 = vmatpush2.msra.mxu0 0.0
          %1706 = vmatprep.subr.mxu0 0.0
          %1707 = vmatpush2.msra.mxu0 0.0
          %1708 = vmatprep.subr.mxu0 0.0
          %1709 = vmatpush2.msra.mxu0 0.0
          %1710 = vmatprep.subr.mxu0 0.0
          %1711 = vmatpush2.msra.mxu0 0.0
          %1712 = vmatprep.subr.mxu0 0.0
          %1713 = vmatpush2.msra.mxu0 0.0
          %1714 = vmatprep.subr.mxu0 0.0
          %1715 = vmatpush2.msra.mxu0 0.0
          %1716 = vmatprep.subr.mxu0 0.0
          %1717 = vmatpush2.msra.mxu0 0.0
          %1718 = vmatprep.subr.mxu0 0.0
          %1719 = vmatpush2.msra.mxu0 0.0
          %1720 = vmatprep.subr.mxu0 0.0
          %1721 = vmatpush2.msra.mxu0 0.0
          %1722 = vmatprep.subr.mxu0 0.0
          %1723 = vmatpush2.msra.mxu0 0.0
          %1724 = vmatprep.subr.mxu0 0.0
          %1725 = vmatpush2.msra.mxu0 0.0
          %1726 = vmatprep.subr.mxu0 0.0
          %1727 = vmatpush2.msra.mxu0 0.0
          %1728 = vmatprep.subr.mxu0 0.0
          %1729 = vmatpush2.msra.mxu0 0.0
          %1730 = vmatprep.subr.mxu0 0.0
          %1731 = vmatpush2.msra.mxu0 0.0
          %1732 = vmatprep.subr.mxu0 0.0
          %1733 = vmatpush2.msra.mxu0 0.0
          %1734 = vmatprep.subr.mxu0 0.0
          %1735 = vmatpush2.msra.mxu0 0.0
          %1736 = vmatprep.mubr.f32.mxu0 0.0
          %1737 = vmatmul.mubr.f32.gmra.mxu0 %v1670
          %v1738 = vpop.f32.mrf.mxu0
          %v1739 = vadd.f32 0.0, %v1738
          %v1740 = vpop.f32.mrf.mxu0
          %1741 = vdwg.mxu0
          %1742 = vxpose.xlu0.b32.start [1/16] %v1389, 128
          %1743 = vxpose.xlu0.b32.cont [2/16] %v1390, 128
          %1744 = vxpose.xlu0.b32.cont [3/16] 0.0, 128
          %1745 = vxpose.xlu0.b32.cont [4/16] 0.0, 128
          %1746 = vxpose.xlu0.b32.cont [5/16] 0.0, 128
          %1747 = vxpose.xlu0.b32.cont [6/16] 0.0, 128
          %1748 = vxpose.xlu0.b32.cont [7/16] 0.0, 128
          %1749 = vxpose.xlu0.b32.cont [8/16] 0.0, 128
          %1750 = vxpose.xlu0.b32.cont [9/16] 0.0, 128
          %1751 = vxpose.xlu0.b32.cont [10/16] 0.0, 128
          %1752 = vxpose.xlu0.b32.cont [11/16] 0.0, 128
          %1753 = vxpose.xlu0.b32.cont [12/16] 0.0, 128
          %1754 = vxpose.xlu0.b32.cont [13/16] 0.0, 128
          %1755 = vxpose.xlu0.b32.cont [14/16] 0.0, 128
          %1756 = vxpose.xlu0.b32.cont [15/16] 0.0, 128
          %1757 = vxpose.xlu0.b32.end [16/16] 0.0, 128
          %v1758 = vpop.trf.xlu0
          %v1759 = vpop.trf.xlu0
          %v1760 = vpop.trf.xlu0
          %v1761 = vpop.trf.xlu0
          %v1762 = vpop.trf.xlu0
          %v1763 = vpop.trf.xlu0
          %v1764 = vpop.trf.xlu0
          %v1765 = vpop.trf.xlu0
          %v1766 = vpop.trf.xlu0
          %v1767 = vpop.trf.xlu0
          %v1768 = vpop.trf.xlu0
          %v1769 = vpop.trf.xlu0
          %v1770 = vpop.trf.xlu0
          %v1771 = vpop.trf.xlu0
          %v1772 = vpop.trf.xlu0
          %v1773 = vpop.trf.xlu0
          %v1775 = vsel %vm1547, %v1758, 0
          %1777 = vmatprep.subr.mxu0 0.0
          %1778 = vmatpush1.msra.mxu0 0.0
          %1779 = vmatprep.subr.mxu0 0.0
          %1780 = vmatpush1.msra.mxu0 0.0
          %1781 = vmatprep.subr.mxu0 0.0
          %1782 = vmatpush1.msra.mxu0 0.0
          %1783 = vmatprep.subr.mxu0 0.0
          %1784 = vmatpush1.msra.mxu0 0.0
          %1785 = vmatprep.subr.mxu0 0.0
          %1786 = vmatpush1.msra.mxu0 0.0
          %1787 = vmatprep.subr.mxu0 0.0
          %1788 = vmatpush1.msra.mxu0 0.0
          %1789 = vmatprep.subr.mxu0 0.0
          %1790 = vmatpush1.msra.mxu0 0.0
          %1791 = vmatprep.subr.mxu0 0.0
          %1792 = vmatpush1.msra.mxu0 0.0
          %1793 = vmatprep.subr.mxu0 0.0
          %1794 = vmatpush1.msra.mxu0 0.0
          %1795 = vmatprep.subr.mxu0 0.0
          %1796 = vmatpush1.msra.mxu0 0.0
          %1797 = vmatprep.subr.mxu0 0.0
          %1798 = vmatpush1.msra.mxu0 0.0
          %1799 = vmatprep.subr.mxu0 0.0
          %1800 = vmatpush1.msra.mxu0 0.0
          %1801 = vmatprep.subr.mxu0 0.0
          %1802 = vmatpush1.msra.mxu0 0.0
          %1803 = vmatprep.subr.mxu0 0.0
          %1804 = vmatpush1.msra.mxu0 0.0
          %1805 = vmatprep.subr.mxu0 0.0
          %1806 = vmatpush1.msra.mxu0 %v1400
          %1807 = vmatprep.subr.mxu0 0.0
          %1808 = vmatpush1.msra.mxu0 %v1399
          %1809 = vmatprep.subr.mxu0 0.0
          %1810 = vmatpush2.msra.mxu0 0.0
          %1811 = vmatprep.subr.mxu0 0.0
          %1812 = vmatpush2.msra.mxu0 0.0
          %1813 = vmatprep.subr.mxu0 0.0
          %1814 = vmatpush2.msra.mxu0 0.0
          %1815 = vmatprep.subr.mxu0 0.0
          %1816 = vmatpush2.msra.mxu0 0.0
          %1817 = vmatprep.subr.mxu0 0.0
          %1818 = vmatpush2.msra.mxu0 0.0
          %1819 = vmatprep.subr.mxu0 0.0
          %1820 = vmatpush2.msra.mxu0 0.0
          %1821 = vmatprep.subr.mxu0 0.0
          %1822 = vmatpush2.msra.mxu0 0.0
          %1823 = vmatprep.subr.mxu0 0.0
          %1824 = vmatpush2.msra.mxu0 0.0
          %1825 = vmatprep.subr.mxu0 0.0
          %1826 = vmatpush2.msra.mxu0 0.0
          %1827 = vmatprep.subr.mxu0 0.0
          %1828 = vmatpush2.msra.mxu0 0.0
          %1829 = vmatprep.subr.mxu0 0.0
          %1830 = vmatpush2.msra.mxu0 0.0
          %1831 = vmatprep.subr.mxu0 0.0
          %1832 = vmatpush2.msra.mxu0 0.0
          %1833 = vmatprep.subr.mxu0 0.0
          %1834 = vmatpush2.msra.mxu0 0.0
          %1835 = vmatprep.subr.mxu0 0.0
          %1836 = vmatpush2.msra.mxu0 0.0
          %1837 = vmatprep.subr.mxu0 0.0
          %1838 = vmatpush2.msra.mxu0 0.0
          %1839 = vmatprep.subr.mxu0 0.0
          %1840 = vmatpush2.msra.mxu0 0.0
          %1841 = vmatprep.mubr.f32.mxu0 0.0
          %1842 = vmatmul.mubr.f32.gmra.mxu0 %v1775
          %v1843 = vpop.f32.mrf.mxu0
          %v1844 = vadd.f32 %v1739, %v1843
          %v1845 = vpop.f32.mrf.mxu0
          %1846 = vdwg.mxu0
          %v1847 = vadd.f32 %v1844, %v1626
          %v1848 = vadd.f32 %v1847, %v1634
          %v1850 = vrot.slane %v1848, 7
          %vm1852 = vcmask 1040384
          %v1853 = vsel %vm1852, %v1386, %v1850
          %v1854 = vsel %vm1852, %v1850, %v1386
          %1855 = vst.msk [vmem:[#allocation2] sm:$0xff] %vm1130, %v1636
          %1856 = vst.msk [vmem:[#allocation2 + $0x8] sm:$0xff] %vm1130, %v1853
          %vm1857 = vcmask 254976
          %1858 = vst.msk [vmem:[#allocation2 + $0x10] sm:$0x3] %vm1857, %v1854
        $region152: #{run.1} parent=135 // pred_fallthru
          _
        %v1859 = vld [vmem:[#allocation2] sm:$0xff]
        %v1860 = vld [vmem:[#allocation2 + $0x8] sm:$0xff]
        %v1861 = vld [vmem:[#allocation2 + $0x10] sm:$0x3]
        %v1862 = vld [vmem:[%s1078] sm:$0xff]
        %v1863 = vld [vmem:[%s1078 + $0x8] sm:$0xff]
        %v1864 = vld [vmem:[%s1078 + $0x10] sm:$0xff]
        %v1865 = vld [vmem:[%s1078 + $0x18] sm:$0xff]
        %v1866 = vld [vmem:[%s1081] sm:$0x1]
        %v1868 = vlaneseq
        %v1869 = vshrl.u32 %v1868, 7
        %v1870 = vsub.s32 0, %v1869
        %v1871 = vrot.slane %v1866, %v1870
        %vm1873 = vcmask 261120
        %v1875 = vsel %vm1873, %v1859, 0
        %v1878 = vsel %vm1873, %v1860, 0
        %v1881 = vsel %vm1873, %v1861, 0
        %1883 = vmatprep.subr.mxu0 0.0
        %1884 = vmatpush1.msra.mxu0 0.0
        %1885 = vmatprep.subr.mxu0 0.0
        %1886 = vmatpush1.msra.mxu0 0.0
        %1887 = vmatprep.subr.mxu0 0.0
        %1888 = vmatpush1.msra.mxu0 0.0
        %1889 = vmatprep.subr.mxu0 0.0
        %1890 = vmatpush1.msra.mxu0 0.0
        %1891 = vmatprep.subr.mxu0 0.0
        %1892 = vmatpush1.msra.mxu0 0.0
        %1893 = vmatprep.subr.mxu0 0.0
        %1894 = vmatpush1.msra.mxu0 0.0
        %1895 = vmatprep.subr.mxu0 0.0
        %1896 = vmatpush1.msra.mxu0 0.0
        %1897 = vmatprep.subr.mxu0 0.0
        %1898 = vmatpush1.msra.mxu0 0.0
        %1899 = vmatprep.subr.mxu0 0.0
        %1900 = vmatpush1.msra.mxu0 0.0
        %1901 = vmatprep.subr.mxu0 0.0
        %1902 = vmatpush1.msra.mxu0 0.0
        %1903 = vmatprep.subr.mxu0 0.0
        %1904 = vmatpush1.msra.mxu0 0.0
        %1905 = vmatprep.subr.mxu0 0.0
        %1906 = vmatpush1.msra.mxu0 0.0
        %1907 = vmatprep.subr.mxu0 0.0
        %1908 = vmatpush1.msra.mxu0 %v1865
        %1909 = vmatprep.subr.mxu0 0.0
        %1910 = vmatpush1.msra.mxu0 %v1864
        %1911 = vmatprep.subr.mxu0 0.0
        %1912 = vmatpush1.msra.mxu0 %v1863
        %1913 = vmatprep.subr.mxu0 0.0
        %1914 = vmatpush1.msra.mxu0 %v1862
        %1915 = vmatprep.subr.mxu0 0.0
        %1916 = vmatpush2.msra.mxu0 0.0
        %1917 = vmatprep.subr.mxu0 0.0
        %1918 = vmatpush2.msra.mxu0 0.0
        %1919 = vmatprep.subr.mxu0 0.0
        %1920 = vmatpush2.msra.mxu0 0.0
        %1921 = vmatprep.subr.mxu0 0.0
        %1922 = vmatpush2.msra.mxu0 0.0
        %1923 = vmatprep.subr.mxu0 0.0
        %1924 = vmatpush2.msra.mxu0 0.0
        %1925 = vmatprep.subr.mxu0 0.0
        %1926 = vmatpush2.msra.mxu0 0.0
        %1927 = vmatprep.subr.mxu0 0.0
        %1928 = vmatpush2.msra.mxu0 0.0
        %1929 = vmatprep.subr.mxu0 0.0
        %1930 = vmatpush2.msra.mxu0 0.0
        %1931 = vmatprep.subr.mxu0 0.0
        %1932 = vmatpush2.msra.mxu0 0.0
        %1933 = vmatprep.subr.mxu0 0.0
        %1934 = vmatpush2.msra.mxu0 0.0
        %1935 = vmatprep.subr.mxu0 0.0
        %1936 = vmatpush2.msra.mxu0 0.0
        %1937 = vmatprep.subr.mxu0 0.0
        %1938 = vmatpush2.msra.mxu0 0.0
        %1939 = vmatprep.subr.mxu0 0.0
        %1940 = vmatpush2.msra.mxu0 0.0
        %1941 = vmatprep.subr.mxu0 0.0
        %1942 = vmatpush2.msra.mxu0 0.0
        %1943 = vmatprep.subr.mxu0 0.0
        %1944 = vmatpush2.msra.mxu0 0.0
        %1945 = vmatprep.subr.mxu0 0.0
        %1946 = vmatpush2.msra.mxu0 0.0
        %1947 = vmatprep.mubr.f32.mxu0 0.0
        %1948 = vmatmul.mubr.f32.gmra.mxu0 %v1875
        %v1949 = vpop.f32.mrf.mxu0
        %v1950 = vadd.f32 %v1871, %v1949
        %v1951 = vpop.f32.mrf.mxu0
        %1952 = vmatprep.mubr.f32.mxu0 0.0
        %1953 = vmatmul.mubr.f32.gmra.mxu0 %v1878
        %v1954 = vpop.f32.mrf.mxu0
        %v1955 = vadd.f32 %v1871, %v1954
        %v1956 = vpop.f32.mrf.mxu0
        %1957 = vmatprep.mubr.f32.mxu0 0.0
        %1958 = vmatmul.mubr.f32.gmra.mxu0 %v1881
        %v1959 = vpop.f32.mrf.mxu0
        %v1960 = vadd.f32 %v1871, %v1959
        %v1961 = vpop.f32.mrf.mxu0
        %1962 = vdwg.mxu0
        %1965 = vrot.lane.b32.xlu0 %v1950, 120
        %v1966 = vpop.permute.xlu0 %1965
        %1967 = vrot.lane.b32.xlu0 %v1955, 120
        %v1968 = vpop.permute.xlu0 %1967
        %1969 = vrot.lane.b32.xlu0 %v1950, 112
        %v1970 = vpop.permute.xlu0 %1969
        %1971 = vrot.lane.b32.xlu0 %v1955, 112
        %v1972 = vpop.permute.xlu0 %1971
        %1973 = vrot.lane.b32.xlu0 %v1950, 104
        %v1974 = vpop.permute.xlu0 %1973
        %1975 = vrot.lane.b32.xlu0 %v1955, 104
        %v1976 = vpop.permute.xlu0 %1975
        %vm1978 = vcmask 1046528
        %v1979 = vrot.slane %v1955, 1
        %v1980 = vrot.slane %v1960, 1
        %v1981 = vsel %vm1978, %v1979, %v1980
        %1982 = vrot.lane.b32.xlu0 %v1981, 120
        %v1983 = vpop.permute.xlu0 %1982
        %1984 = vrot.lane.b32.xlu0 %v1980, 120
        %v1985 = vpop.permute.xlu0 %1984
        %1986 = vrot.lane.b32.xlu0 %v1981, 112
        %v1987 = vpop.permute.xlu0 %1986
        %1988 = vrot.lane.b32.xlu0 %v1980, 112
        %v1989 = vpop.permute.xlu0 %1988
        %1990 = vrot.lane.b32.xlu0 %v1981, 104
        %v1991 = vpop.permute.xlu0 %1990
        %1992 = vrot.lane.b32.xlu0 %v1980, 104
        %v1993 = vpop.permute.xlu0 %1992
        %1994 = vrot.lane.b32.xlu0 %v1950, 96
        %v1995 = vpop.permute.xlu0 %1994
        %1996 = vrot.lane.b32.xlu0 %v1955, 96
        %v1997 = vpop.permute.xlu0 %1996
        %vm1998 = vcmask 64512
        %v1999 = vsel %vm1998, %v1950, 0
        %v2001 = vsel %vm1998, %v1955, 0
        %v2003 = vsel %vm1998, %v1995, 0
        %v2005 = vsel %vm1998, %v1997, 0
        %2007 = vmatprep.subr.mxu0 0.0
        %2008 = vmatpush1.xpose.msra.mxu0 0.0
        %2009 = vmatprep.subr.mxu0 0.0
        %2010 = vmatpush1.xpose.msra.mxu0 0.0
        %2011 = vmatprep.subr.mxu0 0.0
        %2012 = vmatpush1.xpose.msra.mxu0 0.0
        %2013 = vmatprep.subr.mxu0 0.0
        %2014 = vmatpush1.xpose.msra.mxu0 0.0
        %2015 = vmatprep.subr.mxu0 0.0
        %2016 = vmatpush1.xpose.msra.mxu0 0.0
        %2017 = vmatprep.subr.mxu0 0.0
        %2018 = vmatpush1.xpose.msra.mxu0 0.0
        %2019 = vmatprep.subr.mxu0 0.0
        %2020 = vmatpush1.xpose.msra.mxu0 0.0
        %2021 = vmatprep.subr.mxu0 0.0
        %2022 = vmatpush1.xpose.msra.mxu0 0.0
        %2023 = vmatprep.subr.mxu0 0.0
        %2024 = vmatpush1.xpose.msra.mxu0 0.0
        %2025 = vmatprep.subr.mxu0 0.0
        %2026 = vmatpush1.xpose.msra.mxu0 0.0
        %2027 = vmatprep.subr.mxu0 0.0
        %2028 = vmatpush1.xpose.msra.mxu0 0.0
        %2029 = vmatprep.subr.mxu0 0.0
        %2030 = vmatpush1.xpose.msra.mxu0 0.0
        %2031 = vmatprep.subr.mxu0 0.0
        %2032 = vmatpush1.xpose.msra.mxu0 0.0
        %2033 = vmatprep.subr.mxu0 0.0
        %2034 = vmatpush1.xpose.msra.mxu0 0.0
        %2035 = vmatprep.subr.mxu0 0.0
        %2036 = vmatpush1.xpose.msra.mxu0 %v2005
        %2037 = vmatprep.subr.mxu0 0.0
        %2038 = vmatpush1.xpose.msra.mxu0 %v2003
        %2039 = vmatprep.subr.mxu0 0.0
        %2040 = vmatpush2.xpose.msra.mxu0 0.0
        %2041 = vmatprep.subr.mxu0 0.0
        %2042 = vmatpush2.xpose.msra.mxu0 0.0
        %2043 = vmatprep.subr.mxu0 0.0
        %2044 = vmatpush2.xpose.msra.mxu0 0.0
        %2045 = vmatprep.subr.mxu0 0.0
        %2046 = vmatpush2.xpose.msra.mxu0 0.0
        %2047 = vmatprep.subr.mxu0 0.0
        %2048 = vmatpush2.xpose.msra.mxu0 0.0
        %2049 = vmatprep.subr.mxu0 0.0
        %2050 = vmatpush2.xpose.msra.mxu0 0.0
        %2051 = vmatprep.subr.mxu0 0.0
        %2052 = vmatpush2.xpose.msra.mxu0 0.0
        %2053 = vmatprep.subr.mxu0 0.0
        %2054 = vmatpush2.xpose.msra.mxu0 0.0
        %2055 = vmatprep.subr.mxu0 0.0
        %2056 = vmatpush2.xpose.msra.mxu0 0.0
        %2057 = vmatprep.subr.mxu0 0.0
        %2058 = vmatpush2.xpose.msra.mxu0 0.0
        %2059 = vmatprep.subr.mxu0 0.0
        %2060 = vmatpush2.xpose.msra.mxu0 0.0
        %2061 = vmatprep.subr.mxu0 0.0
        %2062 = vmatpush2.xpose.msra.mxu0 0.0
        %2063 = vmatprep.subr.mxu0 0.0
        %2064 = vmatpush2.xpose.msra.mxu0 0.0
        %2065 = vmatprep.subr.mxu0 0.0
        %2066 = vmatpush2.xpose.msra.mxu0 0.0
        %2067 = vmatprep.subr.mxu0 0.0
        %2068 = vmatpush2.xpose.msra.mxu0 0.0
        %2069 = vmatprep.subr.mxu0 0.0
        %2070 = vmatpush2.xpose.msra.mxu0 0.0
        %2071 = vmatprep.mubr.f32.mxu0 0.0
        %2072 = vmatmul.mubr.f32.gmra.mxu0 %v1999
        %v2073 = vpop.f32.mrf.mxu0
        %v2074 = vadd.f32 0.0, %v2073
        %v2075 = vpop.f32.mrf.mxu0
        %2076 = vmatprep.mubr.f32.mxu0 0.0
        %2077 = vmatmul.mubr.f32.gmra.mxu0 %v2001
        %v2078 = vpop.f32.mrf.mxu0
        %v2079 = vadd.f32 0.0, %v2078
        %v2080 = vpop.f32.mrf.mxu0
        %2081 = vdwg.mxu0
        %2082 = vrot.lane.b32.xlu0 %v1966, 96
        %v2083 = vpop.permute.xlu0 %2082
        %2084 = vrot.lane.b32.xlu0 %v1968, 96
        %v2085 = vpop.permute.xlu0 %2084
        %v2086 = vsel %vm1998, %v1966, 0
        %v2088 = vsel %vm1998, %v1968, 0
        %v2090 = vsel %vm1998, %v2083, 0
        %v2092 = vsel %vm1998, %v2085, 0
        %2094 = vmatprep.subr.mxu0 0.0
        %2095 = vmatpush1.xpose.msra.mxu0 0.0
        %2096 = vmatprep.subr.mxu0 0.0
        %2097 = vmatpush1.xpose.msra.mxu0 0.0
        %2098 = vmatprep.subr.mxu0 0.0
        %2099 = vmatpush1.xpose.msra.mxu0 0.0
        %2100 = vmatprep.subr.mxu0 0.0
        %2101 = vmatpush1.xpose.msra.mxu0 0.0
        %2102 = vmatprep.subr.mxu0 0.0
        %2103 = vmatpush1.xpose.msra.mxu0 0.0
        %2104 = vmatprep.subr.mxu0 0.0
        %2105 = vmatpush1.xpose.msra.mxu0 0.0
        %2106 = vmatprep.subr.mxu0 0.0
        %2107 = vmatpush1.xpose.msra.mxu0 0.0
        %2108 = vmatprep.subr.mxu0 0.0
        %2109 = vmatpush1.xpose.msra.mxu0 0.0
        %2110 = vmatprep.subr.mxu0 0.0
        %2111 = vmatpush1.xpose.msra.mxu0 0.0
        %2112 = vmatprep.subr.mxu0 0.0
        %2113 = vmatpush1.xpose.msra.mxu0 0.0
        %2114 = vmatprep.subr.mxu0 0.0
        %2115 = vmatpush1.xpose.msra.mxu0 0.0
        %2116 = vmatprep.subr.mxu0 0.0
        %2117 = vmatpush1.xpose.msra.mxu0 0.0
        %2118 = vmatprep.subr.mxu0 0.0
        %2119 = vmatpush1.xpose.msra.mxu0 0.0
        %2120 = vmatprep.subr.mxu0 0.0
        %2121 = vmatpush1.xpose.msra.mxu0 0.0
        %2122 = vmatprep.subr.mxu0 0.0
        %2123 = vmatpush1.xpose.msra.mxu0 %v2092
        %2124 = vmatprep.subr.mxu0 0.0
        %2125 = vmatpush1.xpose.msra.mxu0 %v2090
        %2126 = vmatprep.subr.mxu0 0.0
        %2127 = vmatpush2.xpose.msra.mxu0 0.0
        %2128 = vmatprep.subr.mxu0 0.0
        %2129 = vmatpush2.xpose.msra.mxu0 0.0
        %2130 = vmatprep.subr.mxu0 0.0
        %2131 = vmatpush2.xpose.msra.mxu0 0.0
        %2132 = vmatprep.subr.mxu0 0.0
        %2133 = vmatpush2.xpose.msra.mxu0 0.0
        %2134 = vmatprep.subr.mxu0 0.0
        %2135 = vmatpush2.xpose.msra.mxu0 0.0
        %2136 = vmatprep.subr.mxu0 0.0
        %2137 = vmatpush2.xpose.msra.mxu0 0.0
        %2138 = vmatprep.subr.mxu0 0.0
        %2139 = vmatpush2.xpose.msra.mxu0 0.0
        %2140 = vmatprep.subr.mxu0 0.0
        %2141 = vmatpush2.xpose.msra.mxu0 0.0
        %2142 = vmatprep.subr.mxu0 0.0
        %2143 = vmatpush2.xpose.msra.mxu0 0.0
        %2144 = vmatprep.subr.mxu0 0.0
        %2145 = vmatpush2.xpose.msra.mxu0 0.0
        %2146 = vmatprep.subr.mxu0 0.0
        %2147 = vmatpush2.xpose.msra.mxu0 0.0
        %2148 = vmatprep.subr.mxu0 0.0
        %2149 = vmatpush2.xpose.msra.mxu0 0.0
        %2150 = vmatprep.subr.mxu0 0.0
        %2151 = vmatpush2.xpose.msra.mxu0 0.0
        %2152 = vmatprep.subr.mxu0 0.0
        %2153 = vmatpush2.xpose.msra.mxu0 0.0
        %2154 = vmatprep.subr.mxu0 0.0
        %2155 = vmatpush2.xpose.msra.mxu0 0.0
        %2156 = vmatprep.subr.mxu0 0.0
        %2157 = vmatpush2.xpose.msra.mxu0 0.0
        %2158 = vmatprep.mubr.f32.mxu0 0.0
        %2159 = vmatmul.mubr.f32.gmra.mxu0 %v2086
        %v2160 = vpop.f32.mrf.mxu0
        %v2161 = vadd.f32 0.0, %v2160
        %v2162 = vpop.f32.mrf.mxu0
        %2163 = vmatprep.mubr.f32.mxu0 0.0
        %2164 = vmatmul.mubr.f32.gmra.mxu0 %v2088
        %v2165 = vpop.f32.mrf.mxu0
        %v2166 = vadd.f32 0.0, %v2165
        %v2167 = vpop.f32.mrf.mxu0
        %2168 = vdwg.mxu0
        %2169 = vrot.lane.b32.xlu0 %v1970, 96
        %v2170 = vpop.permute.xlu0 %2169
        %2171 = vrot.lane.b32.xlu0 %v1972, 96
        %v2172 = vpop.permute.xlu0 %2171
        %v2173 = vsel %vm1998, %v1970, 0
        %v2175 = vsel %vm1998, %v1972, 0
        %v2177 = vsel %vm1998, %v2170, 0
        %v2179 = vsel %vm1998, %v2172, 0
        %2181 = vmatprep.subr.mxu0 0.0
        %2182 = vmatpush1.xpose.msra.mxu0 0.0
        %2183 = vmatprep.subr.mxu0 0.0
        %2184 = vmatpush1.xpose.msra.mxu0 0.0
        %2185 = vmatprep.subr.mxu0 0.0
        %2186 = vmatpush1.xpose.msra.mxu0 0.0
        %2187 = vmatprep.subr.mxu0 0.0
        %2188 = vmatpush1.xpose.msra.mxu0 0.0
        %2189 = vmatprep.subr.mxu0 0.0
        %2190 = vmatpush1.xpose.msra.mxu0 0.0
        %2191 = vmatprep.subr.mxu0 0.0
        %2192 = vmatpush1.xpose.msra.mxu0 0.0
        %2193 = vmatprep.subr.mxu0 0.0
        %2194 = vmatpush1.xpose.msra.mxu0 0.0
        %2195 = vmatprep.subr.mxu0 0.0
        %2196 = vmatpush1.xpose.msra.mxu0 0.0
        %2197 = vmatprep.subr.mxu0 0.0
        %2198 = vmatpush1.xpose.msra.mxu0 0.0
        %2199 = vmatprep.subr.mxu0 0.0
        %2200 = vmatpush1.xpose.msra.mxu0 0.0
        %2201 = vmatprep.subr.mxu0 0.0
        %2202 = vmatpush1.xpose.msra.mxu0 0.0
        %2203 = vmatprep.subr.mxu0 0.0
        %2204 = vmatpush1.xpose.msra.mxu0 0.0
        %2205 = vmatprep.subr.mxu0 0.0
        %2206 = vmatpush1.xpose.msra.mxu0 0.0
        %2207 = vmatprep.subr.mxu0 0.0
        %2208 = vmatpush1.xpose.msra.mxu0 0.0
        %2209 = vmatprep.subr.mxu0 0.0
        %2210 = vmatpush1.xpose.msra.mxu0 %v2179
        %2211 = vmatprep.subr.mxu0 0.0
        %2212 = vmatpush1.xpose.msra.mxu0 %v2177
        %2213 = vmatprep.subr.mxu0 0.0
        %2214 = vmatpush2.xpose.msra.mxu0 0.0
        %2215 = vmatprep.subr.mxu0 0.0
        %2216 = vmatpush2.xpose.msra.mxu0 0.0
        %2217 = vmatprep.subr.mxu0 0.0
        %2218 = vmatpush2.xpose.msra.mxu0 0.0
        %2219 = vmatprep.subr.mxu0 0.0
        %2220 = vmatpush2.xpose.msra.mxu0 0.0
        %2221 = vmatprep.subr.mxu0 0.0
        %2222 = vmatpush2.xpose.msra.mxu0 0.0
        %2223 = vmatprep.subr.mxu0 0.0
        %2224 = vmatpush2.xpose.msra.mxu0 0.0
        %2225 = vmatprep.subr.mxu0 0.0
        %2226 = vmatpush2.xpose.msra.mxu0 0.0
        %2227 = vmatprep.subr.mxu0 0.0
        %2228 = vmatpush2.xpose.msra.mxu0 0.0
        %2229 = vmatprep.subr.mxu0 0.0
        %2230 = vmatpush2.xpose.msra.mxu0 0.0
        %2231 = vmatprep.subr.mxu0 0.0
        %2232 = vmatpush2.xpose.msra.mxu0 0.0
        %2233 = vmatprep.subr.mxu0 0.0
        %2234 = vmatpush2.xpose.msra.mxu0 0.0
        %2235 = vmatprep.subr.mxu0 0.0
        %2236 = vmatpush2.xpose.msra.mxu0 0.0
        %2237 = vmatprep.subr.mxu0 0.0
        %2238 = vmatpush2.xpose.msra.mxu0 0.0
        %2239 = vmatprep.subr.mxu0 0.0
        %2240 = vmatpush2.xpose.msra.mxu0 0.0
        %2241 = vmatprep.subr.mxu0 0.0
        %2242 = vmatpush2.xpose.msra.mxu0 0.0
        %2243 = vmatprep.subr.mxu0 0.0
        %2244 = vmatpush2.xpose.msra.mxu0 0.0
        %2245 = vmatprep.mubr.f32.mxu0 0.0
        %2246 = vmatmul.mubr.f32.gmra.mxu0 %v2173
        %v2247 = vpop.f32.mrf.mxu0
        %v2248 = vadd.f32 0.0, %v2247
        %v2249 = vpop.f32.mrf.mxu0
        %2250 = vmatprep.mubr.f32.mxu0 0.0
        %2251 = vmatmul.mubr.f32.gmra.mxu0 %v2175
        %v2252 = vpop.f32.mrf.mxu0
        %v2253 = vadd.f32 0.0, %v2252
        %v2254 = vpop.f32.mrf.mxu0
        %2255 = vdwg.mxu0
        %2256 = vrot.lane.b32.xlu0 %v1974, 96
        %v2257 = vpop.permute.xlu0 %2256
        %2258 = vrot.lane.b32.xlu0 %v1976, 96
        %v2259 = vpop.permute.xlu0 %2258
        %v2260 = vsel %vm1998, %v1974, 0
        %v2262 = vsel %vm1998, %v1976, 0
        %v2264 = vsel %vm1998, %v2257, 0
        %v2266 = vsel %vm1998, %v2259, 0
        %2268 = vmatprep.subr.mxu0 0.0
        %2269 = vmatpush1.xpose.msra.mxu0 0.0
        %2270 = vmatprep.subr.mxu0 0.0
        %2271 = vmatpush1.xpose.msra.mxu0 0.0
        %2272 = vmatprep.subr.mxu0 0.0
        %2273 = vmatpush1.xpose.msra.mxu0 0.0
        %2274 = vmatprep.subr.mxu0 0.0
        %2275 = vmatpush1.xpose.msra.mxu0 0.0
        %2276 = vmatprep.subr.mxu0 0.0
        %2277 = vmatpush1.xpose.msra.mxu0 0.0
        %2278 = vmatprep.subr.mxu0 0.0
        %2279 = vmatpush1.xpose.msra.mxu0 0.0
        %2280 = vmatprep.subr.mxu0 0.0
        %2281 = vmatpush1.xpose.msra.mxu0 0.0
        %2282 = vmatprep.subr.mxu0 0.0
        %2283 = vmatpush1.xpose.msra.mxu0 0.0
        %2284 = vmatprep.subr.mxu0 0.0
        %2285 = vmatpush1.xpose.msra.mxu0 0.0
        %2286 = vmatprep.subr.mxu0 0.0
        %2287 = vmatpush1.xpose.msra.mxu0 0.0
        %2288 = vmatprep.subr.mxu0 0.0
        %2289 = vmatpush1.xpose.msra.mxu0 0.0
        %2290 = vmatprep.subr.mxu0 0.0
        %2291 = vmatpush1.xpose.msra.mxu0 0.0
        %2292 = vmatprep.subr.mxu0 0.0
        %2293 = vmatpush1.xpose.msra.mxu0 0.0
        %2294 = vmatprep.subr.mxu0 0.0
        %2295 = vmatpush1.xpose.msra.mxu0 0.0
        %2296 = vmatprep.subr.mxu0 0.0
        %2297 = vmatpush1.xpose.msra.mxu0 %v2266
        %2298 = vmatprep.subr.mxu0 0.0
        %2299 = vmatpush1.xpose.msra.mxu0 %v2264
        %2300 = vmatprep.subr.mxu0 0.0
        %2301 = vmatpush2.xpose.msra.mxu0 0.0
        %2302 = vmatprep.subr.mxu0 0.0
        %2303 = vmatpush2.xpose.msra.mxu0 0.0
        %2304 = vmatprep.subr.mxu0 0.0
        %2305 = vmatpush2.xpose.msra.mxu0 0.0
        %2306 = vmatprep.subr.mxu0 0.0
        %2307 = vmatpush2.xpose.msra.mxu0 0.0
        %2308 = vmatprep.subr.mxu0 0.0
        %2309 = vmatpush2.xpose.msra.mxu0 0.0
        %2310 = vmatprep.subr.mxu0 0.0
        %2311 = vmatpush2.xpose.msra.mxu0 0.0
        %2312 = vmatprep.subr.mxu0 0.0
        %2313 = vmatpush2.xpose.msra.mxu0 0.0
        %2314 = vmatprep.subr.mxu0 0.0
        %2315 = vmatpush2.xpose.msra.mxu0 0.0
        %2316 = vmatprep.subr.mxu0 0.0
        %2317 = vmatpush2.xpose.msra.mxu0 0.0
        %2318 = vmatprep.subr.mxu0 0.0
        %2319 = vmatpush2.xpose.msra.mxu0 0.0
        %2320 = vmatprep.subr.mxu0 0.0
        %2321 = vmatpush2.xpose.msra.mxu0 0.0
        %2322 = vmatprep.subr.mxu0 0.0
        %2323 = vmatpush2.xpose.msra.mxu0 0.0
        %2324 = vmatprep.subr.mxu0 0.0
        %2325 = vmatpush2.xpose.msra.mxu0 0.0
        %2326 = vmatprep.subr.mxu0 0.0
        %2327 = vmatpush2.xpose.msra.mxu0 0.0
        %2328 = vmatprep.subr.mxu0 0.0
        %2329 = vmatpush2.xpose.msra.mxu0 0.0
        %2330 = vmatprep.subr.mxu0 0.0
        %2331 = vmatpush2.xpose.msra.mxu0 0.0
        %2332 = vmatprep.mubr.f32.mxu0 0.0
        %2333 = vmatmul.mubr.f32.gmra.mxu0 %v2260
        %v2334 = vpop.f32.mrf.mxu0
        %v2335 = vadd.f32 0.0, %v2334
        %v2336 = vpop.f32.mrf.mxu0
        %2337 = vmatprep.mubr.f32.mxu0 0.0
        %2338 = vmatmul.mubr.f32.gmra.mxu0 %v2262
        %v2339 = vpop.f32.mrf.mxu0
        %v2340 = vadd.f32 0.0, %v2339
        %v2341 = vpop.f32.mrf.mxu0
        %2342 = vdwg.mxu0
        %2343 = vrot.lane.b32.xlu0 %v1981, 96
        %v2344 = vpop.permute.xlu0 %2343
        %2345 = vrot.lane.b32.xlu0 %v1980, 96
        %v2346 = vpop.permute.xlu0 %2345
        %v2347 = vsel %vm1998, %v1981, 0
        %v2349 = vsel %vm1998, %v1980, 0
        %v2351 = vsel %vm1998, %v2344, 0
        %v2353 = vsel %vm1998, %v2346, 0
        %2355 = vmatprep.subr.mxu0 0.0
        %2356 = vmatpush1.xpose.msra.mxu0 0.0
        %2357 = vmatprep.subr.mxu0 0.0
        %2358 = vmatpush1.xpose.msra.mxu0 0.0
        %2359 = vmatprep.subr.mxu0 0.0
        %2360 = vmatpush1.xpose.msra.mxu0 0.0
        %2361 = vmatprep.subr.mxu0 0.0
        %2362 = vmatpush1.xpose.msra.mxu0 0.0
        %2363 = vmatprep.subr.mxu0 0.0
        %2364 = vmatpush1.xpose.msra.mxu0 0.0
        %2365 = vmatprep.subr.mxu0 0.0
        %2366 = vmatpush1.xpose.msra.mxu0 0.0
        %2367 = vmatprep.subr.mxu0 0.0
        %2368 = vmatpush1.xpose.msra.mxu0 0.0
        %2369 = vmatprep.subr.mxu0 0.0
        %2370 = vmatpush1.xpose.msra.mxu0 0.0
        %2371 = vmatprep.subr.mxu0 0.0
        %2372 = vmatpush1.xpose.msra.mxu0 0.0
        %2373 = vmatprep.subr.mxu0 0.0
        %2374 = vmatpush1.xpose.msra.mxu0 0.0
        %2375 = vmatprep.subr.mxu0 0.0
        %2376 = vmatpush1.xpose.msra.mxu0 0.0
        %2377 = vmatprep.subr.mxu0 0.0
        %2378 = vmatpush1.xpose.msra.mxu0 0.0
        %2379 = vmatprep.subr.mxu0 0.0
        %2380 = vmatpush1.xpose.msra.mxu0 0.0
        %2381 = vmatprep.subr.mxu0 0.0
        %2382 = vmatpush1.xpose.msra.mxu0 0.0
        %2383 = vmatprep.subr.mxu0 0.0
        %2384 = vmatpush1.xpose.msra.mxu0 %v2353
        %2385 = vmatprep.subr.mxu0 0.0
        %2386 = vmatpush1.xpose.msra.mxu0 %v2351
        %2387 = vmatprep.subr.mxu0 0.0
        %2388 = vmatpush2.xpose.msra.mxu0 0.0
        %2389 = vmatprep.subr.mxu0 0.0
        %2390 = vmatpush2.xpose.msra.mxu0 0.0
        %2391 = vmatprep.subr.mxu0 0.0
        %2392 = vmatpush2.xpose.msra.mxu0 0.0
        %2393 = vmatprep.subr.mxu0 0.0
        %2394 = vmatpush2.xpose.msra.mxu0 0.0
        %2395 = vmatprep.subr.mxu0 0.0
        %2396 = vmatpush2.xpose.msra.mxu0 0.0
        %2397 = vmatprep.subr.mxu0 0.0
        %2398 = vmatpush2.xpose.msra.mxu0 0.0
        %2399 = vmatprep.subr.mxu0 0.0
        %2400 = vmatpush2.xpose.msra.mxu0 0.0
        %2401 = vmatprep.subr.mxu0 0.0
        %2402 = vmatpush2.xpose.msra.mxu0 0.0
        %2403 = vmatprep.subr.mxu0 0.0
        %2404 = vmatpush2.xpose.msra.mxu0 0.0
        %2405 = vmatprep.subr.mxu0 0.0
        %2406 = vmatpush2.xpose.msra.mxu0 0.0
        %2407 = vmatprep.subr.mxu0 0.0
        %2408 = vmatpush2.xpose.msra.mxu0 0.0
        %2409 = vmatprep.subr.mxu0 0.0
        %2410 = vmatpush2.xpose.msra.mxu0 0.0
        %2411 = vmatprep.subr.mxu0 0.0
        %2412 = vmatpush2.xpose.msra.mxu0 0.0
        %2413 = vmatprep.subr.mxu0 0.0
        %2414 = vmatpush2.xpose.msra.mxu0 0.0
        %2415 = vmatprep.subr.mxu0 0.0
        %2416 = vmatpush2.xpose.msra.mxu0 0.0
        %2417 = vmatprep.subr.mxu0 0.0
        %2418 = vmatpush2.xpose.msra.mxu0 0.0
        %2419 = vmatprep.mubr.f32.mxu0 0.0
        %2420 = vmatmul.mubr.f32.gmra.mxu0 %v2347
        %v2421 = vpop.f32.mrf.mxu0
        %v2422 = vadd.f32 0.0, %v2421
        %v2423 = vpop.f32.mrf.mxu0
        %2424 = vmatprep.mubr.f32.mxu0 0.0
        %2425 = vmatmul.mubr.f32.gmra.mxu0 %v2349
        %v2426 = vpop.f32.mrf.mxu0
        %v2427 = vadd.f32 0.0, %v2426
        %v2428 = vpop.f32.mrf.mxu0
        %2429 = vdwg.mxu0
        %2430 = vrot.lane.b32.xlu0 %v1983, 96
        %v2431 = vpop.permute.xlu0 %2430
        %2432 = vrot.lane.b32.xlu0 %v1985, 96
        %v2433 = vpop.permute.xlu0 %2432
        %v2434 = vsel %vm1998, %v1983, 0
        %v2436 = vsel %vm1998, %v1985, 0
        %v2438 = vsel %vm1998, %v2431, 0
        %v2440 = vsel %vm1998, %v2433, 0
        %2442 = vmatprep.subr.mxu0 0.0
        %2443 = vmatpush1.xpose.msra.mxu0 0.0
        %2444 = vmatprep.subr.mxu0 0.0
        %2445 = vmatpush1.xpose.msra.mxu0 0.0
        %2446 = vmatprep.subr.mxu0 0.0
        %2447 = vmatpush1.xpose.msra.mxu0 0.0
        %2448 = vmatprep.subr.mxu0 0.0
        %2449 = vmatpush1.xpose.msra.mxu0 0.0
        %2450 = vmatprep.subr.mxu0 0.0
        %2451 = vmatpush1.xpose.msra.mxu0 0.0
        %2452 = vmatprep.subr.mxu0 0.0
        %2453 = vmatpush1.xpose.msra.mxu0 0.0
        %2454 = vmatprep.subr.mxu0 0.0
        %2455 = vmatpush1.xpose.msra.mxu0 0.0
        %2456 = vmatprep.subr.mxu0 0.0
        %2457 = vmatpush1.xpose.msra.mxu0 0.0
        %2458 = vmatprep.subr.mxu0 0.0
        %2459 = vmatpush1.xpose.msra.mxu0 0.0
        %2460 = vmatprep.subr.mxu0 0.0
        %2461 = vmatpush1.xpose.msra.mxu0 0.0
        %2462 = vmatprep.subr.mxu0 0.0
        %2463 = vmatpush1.xpose.msra.mxu0 0.0
        %2464 = vmatprep.subr.mxu0 0.0
        %2465 = vmatpush1.xpose.msra.mxu0 0.0
        %2466 = vmatprep.subr.mxu0 0.0
        %2467 = vmatpush1.xpose.msra.mxu0 0.0
        %2468 = vmatprep.subr.mxu0 0.0
        %2469 = vmatpush1.xpose.msra.mxu0 0.0
        %2470 = vmatprep.subr.mxu0 0.0
        %2471 = vmatpush1.xpose.msra.mxu0 %v2440
        %2472 = vmatprep.subr.mxu0 0.0
        %2473 = vmatpush1.xpose.msra.mxu0 %v2438
        %2474 = vmatprep.subr.mxu0 0.0
        %2475 = vmatpush2.xpose.msra.mxu0 0.0
        %2476 = vmatprep.subr.mxu0 0.0
        %2477 = vmatpush2.xpose.msra.mxu0 0.0
        %2478 = vmatprep.subr.mxu0 0.0
        %2479 = vmatpush2.xpose.msra.mxu0 0.0
        %2480 = vmatprep.subr.mxu0 0.0
        %2481 = vmatpush2.xpose.msra.mxu0 0.0
        %2482 = vmatprep.subr.mxu0 0.0
        %2483 = vmatpush2.xpose.msra.mxu0 0.0
        %2484 = vmatprep.subr.mxu0 0.0
        %2485 = vmatpush2.xpose.msra.mxu0 0.0
        %2486 = vmatprep.subr.mxu0 0.0
        %2487 = vmatpush2.xpose.msra.mxu0 0.0
        %2488 = vmatprep.subr.mxu0 0.0
        %2489 = vmatpush2.xpose.msra.mxu0 0.0
        %2490 = vmatprep.subr.mxu0 0.0
        %2491 = vmatpush2.xpose.msra.mxu0 0.0
        %2492 = vmatprep.subr.mxu0 0.0
        %2493 = vmatpush2.xpose.msra.mxu0 0.0
        %2494 = vmatprep.subr.mxu0 0.0
        %2495 = vmatpush2.xpose.msra.mxu0 0.0
        %2496 = vmatprep.subr.mxu0 0.0
        %2497 = vmatpush2.xpose.msra.mxu0 0.0
        %2498 = vmatprep.subr.mxu0 0.0
        %2499 = vmatpush2.xpose.msra.mxu0 0.0
        %2500 = vmatprep.subr.mxu0 0.0
        %2501 = vmatpush2.xpose.msra.mxu0 0.0
        %2502 = vmatprep.subr.mxu0 0.0
        %2503 = vmatpush2.xpose.msra.mxu0 0.0
        %2504 = vmatprep.subr.mxu0 0.0
        %2505 = vmatpush2.xpose.msra.mxu0 0.0
        %2506 = vmatprep.mubr.f32.mxu0 0.0
        %2507 = vmatmul.mubr.f32.gmra.mxu0 %v2434
        %v2508 = vpop.f32.mrf.mxu0
        %v2509 = vadd.f32 0.0, %v2508
        %v2510 = vpop.f32.mrf.mxu0
        %2511 = vmatprep.mubr.f32.mxu0 0.0
        %2512 = vmatmul.mubr.f32.gmra.mxu0 %v2436
        %v2513 = vpop.f32.mrf.mxu0
        %v2514 = vadd.f32 0.0, %v2513
        %v2515 = vpop.f32.mrf.mxu0
        %2516 = vdwg.mxu0
        %2517 = vrot.lane.b32.xlu0 %v1987, 96
        %v2518 = vpop.permute.xlu0 %2517
        %2519 = vrot.lane.b32.xlu0 %v1989, 96
        %v2520 = vpop.permute.xlu0 %2519
        %v2521 = vsel %vm1998, %v1987, 0
        %v2523 = vsel %vm1998, %v1989, 0
        %v2525 = vsel %vm1998, %v2518, 0
        %v2527 = vsel %vm1998, %v2520, 0
        %2529 = vmatprep.subr.mxu0 0.0
        %2530 = vmatpush1.xpose.msra.mxu0 0.0
        %2531 = vmatprep.subr.mxu0 0.0
        %2532 = vmatpush1.xpose.msra.mxu0 0.0
        %2533 = vmatprep.subr.mxu0 0.0
        %2534 = vmatpush1.xpose.msra.mxu0 0.0
        %2535 = vmatprep.subr.mxu0 0.0
        %2536 = vmatpush1.xpose.msra.mxu0 0.0
        %2537 = vmatprep.subr.mxu0 0.0
        %2538 = vmatpush1.xpose.msra.mxu0 0.0
        %2539 = vmatprep.subr.mxu0 0.0
        %2540 = vmatpush1.xpose.msra.mxu0 0.0
        %2541 = vmatprep.subr.mxu0 0.0
        %2542 = vmatpush1.xpose.msra.mxu0 0.0
        %2543 = vmatprep.subr.mxu0 0.0
        %2544 = vmatpush1.xpose.msra.mxu0 0.0
        %2545 = vmatprep.subr.mxu0 0.0
        %2546 = vmatpush1.xpose.msra.mxu0 0.0
        %2547 = vmatprep.subr.mxu0 0.0
        %2548 = vmatpush1.xpose.msra.mxu0 0.0
        %2549 = vmatprep.subr.mxu0 0.0
        %2550 = vmatpush1.xpose.msra.mxu0 0.0
        %2551 = vmatprep.subr.mxu0 0.0
        %2552 = vmatpush1.xpose.msra.mxu0 0.0
        %2553 = vmatprep.subr.mxu0 0.0
        %2554 = vmatpush1.xpose.msra.mxu0 0.0
        %2555 = vmatprep.subr.mxu0 0.0
        %2556 = vmatpush1.xpose.msra.mxu0 0.0
        %2557 = vmatprep.subr.mxu0 0.0
        %2558 = vmatpush1.xpose.msra.mxu0 %v2527
        %2559 = vmatprep.subr.mxu0 0.0
        %2560 = vmatpush1.xpose.msra.mxu0 %v2525
        %2561 = vmatprep.subr.mxu0 0.0
        %2562 = vmatpush2.xpose.msra.mxu0 0.0
        %2563 = vmatprep.subr.mxu0 0.0
        %2564 = vmatpush2.xpose.msra.mxu0 0.0
        %2565 = vmatprep.subr.mxu0 0.0
        %2566 = vmatpush2.xpose.msra.mxu0 0.0
        %2567 = vmatprep.subr.mxu0 0.0
        %2568 = vmatpush2.xpose.msra.mxu0 0.0
        %2569 = vmatprep.subr.mxu0 0.0
        %2570 = vmatpush2.xpose.msra.mxu0 0.0
        %2571 = vmatprep.subr.mxu0 0.0
        %2572 = vmatpush2.xpose.msra.mxu0 0.0
        %2573 = vmatprep.subr.mxu0 0.0
        %2574 = vmatpush2.xpose.msra.mxu0 0.0
        %2575 = vmatprep.subr.mxu0 0.0
        %2576 = vmatpush2.xpose.msra.mxu0 0.0
        %2577 = vmatprep.subr.mxu0 0.0
        %2578 = vmatpush2.xpose.msra.mxu0 0.0
        %2579 = vmatprep.subr.mxu0 0.0
        %2580 = vmatpush2.xpose.msra.mxu0 0.0
        %2581 = vmatprep.subr.mxu0 0.0
        %2582 = vmatpush2.xpose.msra.mxu0 0.0
        %2583 = vmatprep.subr.mxu0 0.0
        %2584 = vmatpush2.xpose.msra.mxu0 0.0
        %2585 = vmatprep.subr.mxu0 0.0
        %2586 = vmatpush2.xpose.msra.mxu0 0.0
        %2587 = vmatprep.subr.mxu0 0.0
        %2588 = vmatpush2.xpose.msra.mxu0 0.0
        %2589 = vmatprep.subr.mxu0 0.0
        %2590 = vmatpush2.xpose.msra.mxu0 0.0
        %2591 = vmatprep.subr.mxu0 0.0
        %2592 = vmatpush2.xpose.msra.mxu0 0.0
        %2593 = vmatprep.mubr.f32.mxu0 0.0
        %2594 = vmatmul.mubr.f32.gmra.mxu0 %v2521
        %v2595 = vpop.f32.mrf.mxu0
        %v2596 = vadd.f32 0.0, %v2595
        %v2597 = vpop.f32.mrf.mxu0
        %2598 = vmatprep.mubr.f32.mxu0 0.0
        %2599 = vmatmul.mubr.f32.gmra.mxu0 %v2523
        %v2600 = vpop.f32.mrf.mxu0
        %v2601 = vadd.f32 0.0, %v2600
        %v2602 = vpop.f32.mrf.mxu0
        %2603 = vdwg.mxu0
        %2604 = vrot.lane.b32.xlu0 %v1991, 96
        %v2605 = vpop.permute.xlu0 %2604
        %2606 = vrot.lane.b32.xlu0 %v1993, 96
        %v2607 = vpop.permute.xlu0 %2606
        %v2608 = vsel %vm1998, %v1991, 0
        %v2610 = vsel %vm1998, %v1993, 0
        %v2612 = vsel %vm1998, %v2605, 0
        %v2614 = vsel %vm1998, %v2607, 0
        %2616 = vmatprep.subr.mxu0 0.0
        %2617 = vmatpush1.xpose.msra.mxu0 0.0
        %2618 = vmatprep.subr.mxu0 0.0
        %2619 = vmatpush1.xpose.msra.mxu0 0.0
        %2620 = vmatprep.subr.mxu0 0.0
        %2621 = vmatpush1.xpose.msra.mxu0 0.0
        %2622 = vmatprep.subr.mxu0 0.0
        %2623 = vmatpush1.xpose.msra.mxu0 0.0
        %2624 = vmatprep.subr.mxu0 0.0
        %2625 = vmatpush1.xpose.msra.mxu0 0.0
        %2626 = vmatprep.subr.mxu0 0.0
        %2627 = vmatpush1.xpose.msra.mxu0 0.0
        %2628 = vmatprep.subr.mxu0 0.0
        %2629 = vmatpush1.xpose.msra.mxu0 0.0
        %2630 = vmatprep.subr.mxu0 0.0
        %2631 = vmatpush1.xpose.msra.mxu0 0.0
        %2632 = vmatprep.subr.mxu0 0.0
        %2633 = vmatpush1.xpose.msra.mxu0 0.0
        %2634 = vmatprep.subr.mxu0 0.0
        %2635 = vmatpush1.xpose.msra.mxu0 0.0
        %2636 = vmatprep.subr.mxu0 0.0
        %2637 = vmatpush1.xpose.msra.mxu0 0.0
        %2638 = vmatprep.subr.mxu0 0.0
        %2639 = vmatpush1.xpose.msra.mxu0 0.0
        %2640 = vmatprep.subr.mxu0 0.0
        %2641 = vmatpush1.xpose.msra.mxu0 0.0
        %2642 = vmatprep.subr.mxu0 0.0
        %2643 = vmatpush1.xpose.msra.mxu0 0.0
        %2644 = vmatprep.subr.mxu0 0.0
        %2645 = vmatpush1.xpose.msra.mxu0 %v2614
        %2646 = vmatprep.subr.mxu0 0.0
        %2647 = vmatpush1.xpose.msra.mxu0 %v2612
        %2648 = vmatprep.subr.mxu0 0.0
        %2649 = vmatpush2.xpose.msra.mxu0 0.0
        %2650 = vmatprep.subr.mxu0 0.0
        %2651 = vmatpush2.xpose.msra.mxu0 0.0
        %2652 = vmatprep.subr.mxu0 0.0
        %2653 = vmatpush2.xpose.msra.mxu0 0.0
        %2654 = vmatprep.subr.mxu0 0.0
        %2655 = vmatpush2.xpose.msra.mxu0 0.0
        %2656 = vmatprep.subr.mxu0 0.0
        %2657 = vmatpush2.xpose.msra.mxu0 0.0
        %2658 = vmatprep.subr.mxu0 0.0
        %2659 = vmatpush2.xpose.msra.mxu0 0.0
        %2660 = vmatprep.subr.mxu0 0.0
        %2661 = vmatpush2.xpose.msra.mxu0 0.0
        %2662 = vmatprep.subr.mxu0 0.0
        %2663 = vmatpush2.xpose.msra.mxu0 0.0
        %2664 = vmatprep.subr.mxu0 0.0
        %2665 = vmatpush2.xpose.msra.mxu0 0.0
        %2666 = vmatprep.subr.mxu0 0.0
        %2667 = vmatpush2.xpose.msra.mxu0 0.0
        %2668 = vmatprep.subr.mxu0 0.0
        %2669 = vmatpush2.xpose.msra.mxu0 0.0
        %2670 = vmatprep.subr.mxu0 0.0
        %2671 = vmatpush2.xpose.msra.mxu0 0.0
        %2672 = vmatprep.subr.mxu0 0.0
        %2673 = vmatpush2.xpose.msra.mxu0 0.0
        %2674 = vmatprep.subr.mxu0 0.0
        %2675 = vmatpush2.xpose.msra.mxu0 0.0
        %2676 = vmatprep.subr.mxu0 0.0
        %2677 = vmatpush2.xpose.msra.mxu0 0.0
        %2678 = vmatprep.subr.mxu0 0.0
        %2679 = vmatpush2.xpose.msra.mxu0 0.0
        %2680 = vmatprep.mubr.f32.mxu0 0.0
        %2681 = vmatmul.mubr.f32.gmra.mxu0 %v2608
        %v2682 = vpop.f32.mrf.mxu0
        %v2683 = vadd.f32 0.0, %v2682
        %v2684 = vpop.f32.mrf.mxu0
        %2685 = vmatprep.mubr.f32.mxu0 0.0
        %2686 = vmatmul.mubr.f32.gmra.mxu0 %v2610
        %v2687 = vpop.f32.mrf.mxu0
        %v2688 = vadd.f32 0.0, %v2687
        %v2689 = vpop.f32.mrf.mxu0
        %2690 = vdwg.mxu0
        %vm2691 = vcmask 72704
        %v2692 = vsel %vm2691, %v2074, -inf
        %2693 = vmax.xlane.f32.xlu0 %v2692
        %v2694 = vpop.xlane.xlu0 %2693
        %vm2695 = vcmask 65536
        %v2696 = vsel %vm2695, %v2079, -inf
        %2697 = vmax.xlane.f32.xlu0 %v2696
        %v2698 = vpop.xlane.xlu0 %2697
        %v2699 = vsel %vm2691, %v2161, -inf
        %2700 = vmax.xlane.f32.xlu0 %v2699
        %v2701 = vpop.xlane.xlu0 %2700
        %v2702 = vsel %vm2695, %v2166, -inf
        %2703 = vmax.xlane.f32.xlu0 %v2702
        %v2704 = vpop.xlane.xlu0 %2703
        %v2705 = vsel %vm2691, %v2248, -inf
        %2706 = vmax.xlane.f32.xlu0 %v2705
        %v2707 = vpop.xlane.xlu0 %2706
        %v2708 = vsel %vm2695, %v2253, -inf
        %2709 = vmax.xlane.f32.xlu0 %v2708
        %v2710 = vpop.xlane.xlu0 %2709
        %v2711 = vsel %vm2691, %v2335, -inf
        %2712 = vmax.xlane.f32.xlu0 %v2711
        %v2713 = vpop.xlane.xlu0 %2712
        %v2714 = vsel %vm2695, %v2340, -inf
        %2715 = vmax.xlane.f32.xlu0 %v2714
        %v2716 = vpop.xlane.xlu0 %2715
        %v2717 = vsel %vm2691, %v2422, -inf
        %2718 = vmax.xlane.f32.xlu0 %v2717
        %v2719 = vpop.xlane.xlu0 %2718
        %v2720 = vsel %vm2695, %v2427, -inf
        %2721 = vmax.xlane.f32.xlu0 %v2720
        %v2722 = vpop.xlane.xlu0 %2721
        %v2723 = vsel %vm2691, %v2509, -inf
        %2724 = vmax.xlane.f32.xlu0 %v2723
        %v2725 = vpop.xlane.xlu0 %2724
        %v2726 = vsel %vm2695, %v2514, -inf
        %2727 = vmax.xlane.f32.xlu0 %v2726
        %v2728 = vpop.xlane.xlu0 %2727
        %v2729 = vsel %vm2691, %v2596, -inf
        %2730 = vmax.xlane.f32.xlu0 %v2729
        %v2731 = vpop.xlane.xlu0 %2730
        %v2732 = vsel %vm2695, %v2601, -inf
        %2733 = vmax.xlane.f32.xlu0 %v2732
        %v2734 = vpop.xlane.xlu0 %2733
        %v2735 = vsel %vm2691, %v2683, -inf
        %2736 = vmax.xlane.f32.xlu0 %v2735
        %v2737 = vpop.xlane.xlu0 %2736
        %v2738 = vsel %vm2695, %v2688, -inf
        %2739 = vmax.xlane.f32.xlu0 %v2738
        %v2740 = vpop.xlane.xlu0 %2739
        %v2741 = vsub.f32 %v2074, %v2694
        %v2742 = vsub.f32 %v2079, %v2698
        %v2743 = vsub.f32 %v2161, %v2701
        %v2744 = vsub.f32 %v2166, %v2704
        %v2745 = vsub.f32 %v2248, %v2707
        %v2746 = vsub.f32 %v2253, %v2710
        %v2747 = vsub.f32 %v2335, %v2713
        %v2748 = vsub.f32 %v2340, %v2716
        %v2749 = vsub.f32 %v2422, %v2719
        %v2750 = vsub.f32 %v2427, %v2722
        %v2751 = vsub.f32 %v2509, %v2725
        %v2752 = vsub.f32 %v2514, %v2728
        %v2753 = vsub.f32 %v2596, %v2731
        %v2754 = vsub.f32 %v2601, %v2734
        %v2755 = vsub.f32 %v2683, %v2737
        %v2756 = vsub.f32 %v2688, %v2740
        %v2757 = vmul.f32 %v2741, 1.442695
        %v2758 = vpow.pop %v2757
        %v2759 = vmul.f32 %v2742, 1.442695
        %v2760 = vpow.pop %v2759
        %v2761 = vmul.f32 %v2743, 1.442695
        %v2762 = vpow.pop %v2761
        %v2763 = vmul.f32 %v2744, 1.442695
        %v2764 = vpow.pop %v2763
        %v2765 = vmul.f32 %v2745, 1.442695
        %v2766 = vpow.pop %v2765
        %v2767 = vmul.f32 %v2746, 1.442695
        %v2768 = vpow.pop %v2767
        %v2769 = vmul.f32 %v2747, 1.442695
        %v2770 = vpow.pop %v2769
        %v2771 = vmul.f32 %v2748, 1.442695
        %v2772 = vpow.pop %v2771
        %v2773 = vmul.f32 %v2749, 1.442695
        %v2774 = vpow.pop %v2773
        %v2775 = vmul.f32 %v2750, 1.442695
        %v2776 = vpow.pop %v2775
        %v2777 = vmul.f32 %v2751, 1.442695
        %v2778 = vpow.pop %v2777
        %v2779 = vmul.f32 %v2752, 1.442695
        %v2780 = vpow.pop %v2779
        %v2781 = vmul.f32 %v2753, 1.442695
        %v2782 = vpow.pop %v2781
        %v2783 = vmul.f32 %v2754, 1.442695
        %v2784 = vpow.pop %v2783
        %v2785 = vmul.f32 %v2755, 1.442695
        %v2786 = vpow.pop %v2785
        %v2787 = vmul.f32 %v2756, 1.442695
        %v2788 = vpow.pop %v2787
        %v2789 = vsel %vm2691, %v2758, 0.0
        %2790 = vadd.xlane.f32.xlu0 %v2789
        %v2791 = vpop.xlane.xlu0 %2790
        %v2792 = vsel %vm2695, %v2760, 0.0
        %2793 = vadd.xlane.f32.xlu0 %v2792
        %v2794 = vpop.xlane.xlu0 %2793
        %v2795 = vsel %vm2691, %v2762, 0.0
        %2796 = vadd.xlane.f32.xlu0 %v2795
        %v2797 = vpop.xlane.xlu0 %2796
        %v2798 = vsel %vm2695, %v2764, 0.0
        %2799 = vadd.xlane.f32.xlu0 %v2798
        %v2800 = vpop.xlane.xlu0 %2799
        %v2801 = vsel %vm2691, %v2766, 0.0
        %2802 = vadd.xlane.f32.xlu0 %v2801
        %v2803 = vpop.xlane.xlu0 %2802
        %v2804 = vsel %vm2695, %v2768, 0.0
        %2805 = vadd.xlane.f32.xlu0 %v2804
        %v2806 = vpop.xlane.xlu0 %2805
        %v2807 = vsel %vm2691, %v2770, 0.0
        %2808 = vadd.xlane.f32.xlu0 %v2807
        %v2809 = vpop.xlane.xlu0 %2808
        %v2810 = vsel %vm2695, %v2772, 0.0
        %2811 = vadd.xlane.f32.xlu0 %v2810
        %v2812 = vpop.xlane.xlu0 %2811
        %v2813 = vsel %vm2691, %v2774, 0.0
        %2814 = vadd.xlane.f32.xlu0 %v2813
        %v2815 = vpop.xlane.xlu0 %2814
        %v2816 = vsel %vm2695, %v2776, 0.0
        %2817 = vadd.xlane.f32.xlu0 %v2816
        %v2818 = vpop.xlane.xlu0 %2817
        %v2819 = vsel %vm2691, %v2778, 0.0
        %2820 = vadd.xlane.f32.xlu0 %v2819
        %v2821 = vpop.xlane.xlu0 %2820
        %v2822 = vsel %vm2695, %v2780, 0.0
        %2823 = vadd.xlane.f32.xlu0 %v2822
        %v2824 = vpop.xlane.xlu0 %2823
        %v2825 = vsel %vm2691, %v2782, 0.0
        %2826 = vadd.xlane.f32.xlu0 %v2825
        %v2827 = vpop.xlane.xlu0 %2826
        %v2828 = vsel %vm2695, %v2784, 0.0
        %2829 = vadd.xlane.f32.xlu0 %v2828
        %v2830 = vpop.xlane.xlu0 %2829
        %v2831 = vsel %vm2691, %v2786, 0.0
        %2832 = vadd.xlane.f32.xlu0 %v2831
        %v2833 = vpop.xlane.xlu0 %2832
        %v2834 = vsel %vm2695, %v2788, 0.0
        %2835 = vadd.xlane.f32.xlu0 %v2834
        %v2836 = vpop.xlane.xlu0 %2835
        %v2837 = vrcp.pop %v2791
        %v2838 = vrcp.pop %v2794
        %v2839 = vrcp.pop %v2797
        %v2840 = vrcp.pop %v2800
        %v2841 = vrcp.pop %v2803
        %v2842 = vrcp.pop %v2806
        %v2843 = vrcp.pop %v2809
        %v2844 = vrcp.pop %v2812
        %v2845 = vrcp.pop %v2815
        %v2846 = vrcp.pop %v2818
        %v2847 = vrcp.pop %v2821
        %v2848 = vrcp.pop %v2824
        %v2849 = vrcp.pop %v2827
        %v2850 = vrcp.pop %v2830
        %v2851 = vrcp.pop %v2833
        %v2852 = vrcp.pop %v2836
        %v2853 = vmul.f32 %v2758, %v2837
        %v2854 = vmul.f32 %v2760, %v2838
        %v2855 = vmul.f32 %v2762, %v2839
        %v2856 = vmul.f32 %v2764, %v2840
        %v2857 = vmul.f32 %v2766, %v2841
        %v2858 = vmul.f32 %v2768, %v2842
        %v2859 = vmul.f32 %v2770, %v2843
        %v2860 = vmul.f32 %v2772, %v2844
        %v2861 = vmul.f32 %v2774, %v2845
        %v2862 = vmul.f32 %v2776, %v2846
        %v2863 = vmul.f32 %v2778, %v2847
        %v2864 = vmul.f32 %v2780, %v2848
        %v2865 = vmul.f32 %v2782, %v2849
        %v2866 = vmul.f32 %v2784, %v2850
        %v2867 = vmul.f32 %v2786, %v2851
        %v2868 = vmul.f32 %v2788, %v2852
        %2869 = vrot.lane.b32.xlu0 %v1950, 64
        %v2870 = vpop.permute.xlu0 %2869
        %2871 = vrot.lane.b32.xlu0 %v1955, 64
        %v2872 = vpop.permute.xlu0 %2871
        %v2875 = vsel %vm2691, %v2853, 0
        %v2878 = vsel %vm2691, %v2854, 0
        %vm2880 = vcmask 1040384
        %v2881 = vsel %vm2880, %v2872, 0
        %2883 = vmatprep.subr.mxu0 0.0
        %2884 = vmatpush1.msra.mxu0 0.0
        %2885 = vmatprep.subr.mxu0 0.0
        %2886 = vmatpush1.msra.mxu0 0.0
        %2887 = vmatprep.subr.mxu0 0.0
        %2888 = vmatpush1.msra.mxu0 0.0
        %2889 = vmatprep.subr.mxu0 0.0
        %2890 = vmatpush1.msra.mxu0 0.0
        %2891 = vmatprep.subr.mxu0 0.0
        %2892 = vmatpush1.msra.mxu0 0.0
        %2893 = vmatprep.subr.mxu0 0.0
        %2894 = vmatpush1.msra.mxu0 0.0
        %2895 = vmatprep.subr.mxu0 0.0
        %2896 = vmatpush1.msra.mxu0 0.0
        %2897 = vmatprep.subr.mxu0 0.0
        %2898 = vmatpush1.msra.mxu0 0.0
        %2899 = vmatprep.subr.mxu0 0.0
        %2900 = vmatpush1.msra.mxu0 0.0
        %2901 = vmatprep.subr.mxu0 0.0
        %2902 = vmatpush1.msra.mxu0 0.0
        %2903 = vmatprep.subr.mxu0 0.0
        %2904 = vmatpush1.msra.mxu0 0.0
        %2905 = vmatprep.subr.mxu0 0.0
        %2906 = vmatpush1.msra.mxu0 0.0
        %2907 = vmatprep.subr.mxu0 0.0
        %2908 = vmatpush1.msra.mxu0 0.0
        %2909 = vmatprep.subr.mxu0 0.0
        %2910 = vmatpush1.msra.mxu0 0.0
        %2911 = vmatprep.subr.mxu0 0.0
        %2912 = vmatpush1.msra.mxu0 %v2881
        %2913 = vmatprep.subr.mxu0 0.0
        %2914 = vmatpush1.msra.mxu0 %v2870
        %2915 = vmatprep.subr.mxu0 0.0
        %2916 = vmatpush2.msra.mxu0 0.0
        %2917 = vmatprep.subr.mxu0 0.0
        %2918 = vmatpush2.msra.mxu0 0.0
        %2919 = vmatprep.subr.mxu0 0.0
        %2920 = vmatpush2.msra.mxu0 0.0
        %2921 = vmatprep.subr.mxu0 0.0
        %2922 = vmatpush2.msra.mxu0 0.0
        %2923 = vmatprep.subr.mxu0 0.0
        %2924 = vmatpush2.msra.mxu0 0.0
        %2925 = vmatprep.subr.mxu0 0.0
        %2926 = vmatpush2.msra.mxu0 0.0
        %2927 = vmatprep.subr.mxu0 0.0
        %2928 = vmatpush2.msra.mxu0 0.0
        %2929 = vmatprep.subr.mxu0 0.0
        %2930 = vmatpush2.msra.mxu0 0.0
        %2931 = vmatprep.subr.mxu0 0.0
        %2932 = vmatpush2.msra.mxu0 0.0
        %2933 = vmatprep.subr.mxu0 0.0
        %2934 = vmatpush2.msra.mxu0 0.0
        %2935 = vmatprep.subr.mxu0 0.0
        %2936 = vmatpush2.msra.mxu0 0.0
        %2937 = vmatprep.subr.mxu0 0.0
        %2938 = vmatpush2.msra.mxu0 0.0
        %2939 = vmatprep.subr.mxu0 0.0
        %2940 = vmatpush2.msra.mxu0 0.0
        %2941 = vmatprep.subr.mxu0 0.0
        %2942 = vmatpush2.msra.mxu0 0.0
        %2943 = vmatprep.subr.mxu0 0.0
        %2944 = vmatpush2.msra.mxu0 0.0
        %2945 = vmatprep.subr.mxu0 0.0
        %2946 = vmatpush2.msra.mxu0 0.0
        %2947 = vmatprep.mubr.f32.mxu0 0.0
        %2948 = vmatmul.mubr.f32.gmra.mxu0 %v2875
        %v2949 = vpop.f32.mrf.mxu0
        %v2950 = vadd.f32 0.0, %v2949
        %v2951 = vpop.f32.mrf.mxu0
        %2952 = vmatprep.mubr.f32.mxu0 0.0
        %2953 = vmatmul.mubr.f32.gmra.mxu0 %v2878
        %v2954 = vpop.f32.mrf.mxu0
        %v2955 = vadd.f32 0.0, %v2954
        %v2956 = vpop.f32.mrf.mxu0
        %2957 = vdwg.mxu0
        %2958 = vrot.lane.b32.xlu0 %v1966, 64
        %v2959 = vpop.permute.xlu0 %2958
        %2960 = vrot.lane.b32.xlu0 %v1968, 64
        %v2961 = vpop.permute.xlu0 %2960
        %v2964 = vsel %vm2691, %v2855, 0
        %v2967 = vsel %vm2691, %v2856, 0
        %v2969 = vsel %vm2880, %v2961, 0
        %2971 = vmatprep.subr.mxu0 0.0
        %2972 = vmatpush1.msra.mxu0 0.0
        %2973 = vmatprep.subr.mxu0 0.0
        %2974 = vmatpush1.msra.mxu0 0.0
        %2975 = vmatprep.subr.mxu0 0.0
        %2976 = vmatpush1.msra.mxu0 0.0
        %2977 = vmatprep.subr.mxu0 0.0
        %2978 = vmatpush1.msra.mxu0 0.0
        %2979 = vmatprep.subr.mxu0 0.0
        %2980 = vmatpush1.msra.mxu0 0.0
        %2981 = vmatprep.subr.mxu0 0.0
        %2982 = vmatpush1.msra.mxu0 0.0
        %2983 = vmatprep.subr.mxu0 0.0
        %2984 = vmatpush1.msra.mxu0 0.0
        %2985 = vmatprep.subr.mxu0 0.0
        %2986 = vmatpush1.msra.mxu0 0.0
        %2987 = vmatprep.subr.mxu0 0.0
        %2988 = vmatpush1.msra.mxu0 0.0
        %2989 = vmatprep.subr.mxu0 0.0
        %2990 = vmatpush1.msra.mxu0 0.0
        %2991 = vmatprep.subr.mxu0 0.0
        %2992 = vmatpush1.msra.mxu0 0.0
        %2993 = vmatprep.subr.mxu0 0.0
        %2994 = vmatpush1.msra.mxu0 0.0
        %2995 = vmatprep.subr.mxu0 0.0
        %2996 = vmatpush1.msra.mxu0 0.0
        %2997 = vmatprep.subr.mxu0 0.0
        %2998 = vmatpush1.msra.mxu0 0.0
        %2999 = vmatprep.subr.mxu0 0.0
        %3000 = vmatpush1.msra.mxu0 %v2969
        %3001 = vmatprep.subr.mxu0 0.0
        %3002 = vmatpush1.msra.mxu0 %v2959
        %3003 = vmatprep.subr.mxu0 0.0
        %3004 = vmatpush2.msra.mxu0 0.0
        %3005 = vmatprep.subr.mxu0 0.0
        %3006 = vmatpush2.msra.mxu0 0.0
        %3007 = vmatprep.subr.mxu0 0.0
        %3008 = vmatpush2.msra.mxu0 0.0
        %3009 = vmatprep.subr.mxu0 0.0
        %3010 = vmatpush2.msra.mxu0 0.0
        %3011 = vmatprep.subr.mxu0 0.0
        %3012 = vmatpush2.msra.mxu0 0.0
        %3013 = vmatprep.subr.mxu0 0.0
        %3014 = vmatpush2.msra.mxu0 0.0
        %3015 = vmatprep.subr.mxu0 0.0
        %3016 = vmatpush2.msra.mxu0 0.0
        %3017 = vmatprep.subr.mxu0 0.0
        %3018 = vmatpush2.msra.mxu0 0.0
        %3019 = vmatprep.subr.mxu0 0.0
        %3020 = vmatpush2.msra.mxu0 0.0
        %3021 = vmatprep.subr.mxu0 0.0
        %3022 = vmatpush2.msra.mxu0 0.0
        %3023 = vmatprep.subr.mxu0 0.0
        %3024 = vmatpush2.msra.mxu0 0.0
        %3025 = vmatprep.subr.mxu0 0.0
        %3026 = vmatpush2.msra.mxu0 0.0
        %3027 = vmatprep.subr.mxu0 0.0
        %3028 = vmatpush2.msra.mxu0 0.0
        %3029 = vmatprep.subr.mxu0 0.0
        %3030 = vmatpush2.msra.mxu0 0.0
        %3031 = vmatprep.subr.mxu0 0.0
        %3032 = vmatpush2.msra.mxu0 0.0
        %3033 = vmatprep.subr.mxu0 0.0
        %3034 = vmatpush2.msra.mxu0 0.0
        %3035 = vmatprep.mubr.f32.mxu0 0.0
        %3036 = vmatmul.mubr.f32.gmra.mxu0 %v2964
        %v3037 = vpop.f32.mrf.mxu0
        %v3038 = vadd.f32 0.0, %v3037
        %v3039 = vpop.f32.mrf.mxu0
        %3040 = vmatprep.mubr.f32.mxu0 0.0
        %3041 = vmatmul.mubr.f32.gmra.mxu0 %v2967
        %v3042 = vpop.f32.mrf.mxu0
        %v3043 = vadd.f32 0.0, %v3042
        %v3044 = vpop.f32.mrf.mxu0
        %3045 = vdwg.mxu0
        %3046 = vrot.lane.b32.xlu0 %v1970, 64
        %v3047 = vpop.permute.xlu0 %3046
        %3048 = vrot.lane.b32.xlu0 %v1972, 64
        %v3049 = vpop.permute.xlu0 %3048
        %v3052 = vsel %vm2691, %v2857, 0
        %v3055 = vsel %vm2691, %v2858, 0
        %v3057 = vsel %vm2880, %v3049, 0
        %3059 = vmatprep.subr.mxu0 0.0
        %3060 = vmatpush1.msra.mxu0 0.0
        %3061 = vmatprep.subr.mxu0 0.0
        %3062 = vmatpush1.msra.mxu0 0.0
        %3063 = vmatprep.subr.mxu0 0.0
        %3064 = vmatpush1.msra.mxu0 0.0
        %3065 = vmatprep.subr.mxu0 0.0
        %3066 = vmatpush1.msra.mxu0 0.0
        %3067 = vmatprep.subr.mxu0 0.0
        %3068 = vmatpush1.msra.mxu0 0.0
        %3069 = vmatprep.subr.mxu0 0.0
        %3070 = vmatpush1.msra.mxu0 0.0
        %3071 = vmatprep.subr.mxu0 0.0
        %3072 = vmatpush1.msra.mxu0 0.0
        %3073 = vmatprep.subr.mxu0 0.0
        %3074 = vmatpush1.msra.mxu0 0.0
        %3075 = vmatprep.subr.mxu0 0.0
        %3076 = vmatpush1.msra.mxu0 0.0
        %3077 = vmatprep.subr.mxu0 0.0
        %3078 = vmatpush1.msra.mxu0 0.0
        %3079 = vmatprep.subr.mxu0 0.0
        %3080 = vmatpush1.msra.mxu0 0.0
        %3081 = vmatprep.subr.mxu0 0.0
        %3082 = vmatpush1.msra.mxu0 0.0
        %3083 = vmatprep.subr.mxu0 0.0
        %3084 = vmatpush1.msra.mxu0 0.0
        %3085 = vmatprep.subr.mxu0 0.0
        %3086 = vmatpush1.msra.mxu0 0.0
        %3087 = vmatprep.subr.mxu0 0.0
        %3088 = vmatpush1.msra.mxu0 %v3057
        %3089 = vmatprep.subr.mxu0 0.0
        %3090 = vmatpush1.msra.mxu0 %v3047
        %3091 = vmatprep.subr.mxu0 0.0
        %3092 = vmatpush2.msra.mxu0 0.0
        %3093 = vmatprep.subr.mxu0 0.0
        %3094 = vmatpush2.msra.mxu0 0.0
        %3095 = vmatprep.subr.mxu0 0.0
        %3096 = vmatpush2.msra.mxu0 0.0
        %3097 = vmatprep.subr.mxu0 0.0
        %3098 = vmatpush2.msra.mxu0 0.0
        %3099 = vmatprep.subr.mxu0 0.0
        %3100 = vmatpush2.msra.mxu0 0.0
        %3101 = vmatprep.subr.mxu0 0.0
        %3102 = vmatpush2.msra.mxu0 0.0
        %3103 = vmatprep.subr.mxu0 0.0
        %3104 = vmatpush2.msra.mxu0 0.0
        %3105 = vmatprep.subr.mxu0 0.0
        %3106 = vmatpush2.msra.mxu0 0.0
        %3107 = vmatprep.subr.mxu0 0.0
        %3108 = vmatpush2.msra.mxu0 0.0
        %3109 = vmatprep.subr.mxu0 0.0
        %3110 = vmatpush2.msra.mxu0 0.0
        %3111 = vmatprep.subr.mxu0 0.0
        %3112 = vmatpush2.msra.mxu0 0.0
        %3113 = vmatprep.subr.mxu0 0.0
        %3114 = vmatpush2.msra.mxu0 0.0
        %3115 = vmatprep.subr.mxu0 0.0
        %3116 = vmatpush2.msra.mxu0 0.0
        %3117 = vmatprep.subr.mxu0 0.0
        %3118 = vmatpush2.msra.mxu0 0.0
        %3119 = vmatprep.subr.mxu0 0.0
        %3120 = vmatpush2.msra.mxu0 0.0
        %3121 = vmatprep.subr.mxu0 0.0
        %3122 = vmatpush2.msra.mxu0 0.0
        %3123 = vmatprep.mubr.f32.mxu0 0.0
        %3124 = vmatmul.mubr.f32.gmra.mxu0 %v3052
        %v3125 = vpop.f32.mrf.mxu0
        %v3126 = vadd.f32 0.0, %v3125
        %v3127 = vpop.f32.mrf.mxu0
        %3128 = vmatprep.mubr.f32.mxu0 0.0
        %3129 = vmatmul.mubr.f32.gmra.mxu0 %v3055
        %v3130 = vpop.f32.mrf.mxu0
        %v3131 = vadd.f32 0.0, %v3130
        %v3132 = vpop.f32.mrf.mxu0
        %3133 = vdwg.mxu0
        %3134 = vrot.lane.b32.xlu0 %v1974, 64
        %v3135 = vpop.permute.xlu0 %3134
        %3136 = vrot.lane.b32.xlu0 %v1976, 64
        %v3137 = vpop.permute.xlu0 %3136
        %v3140 = vsel %vm2691, %v2859, 0
        %v3143 = vsel %vm2691, %v2860, 0
        %v3145 = vsel %vm2880, %v3137, 0
        %3147 = vmatprep.subr.mxu0 0.0
        %3148 = vmatpush1.msra.mxu0 0.0
        %3149 = vmatprep.subr.mxu0 0.0
        %3150 = vmatpush1.msra.mxu0 0.0
        %3151 = vmatprep.subr.mxu0 0.0
        %3152 = vmatpush1.msra.mxu0 0.0
        %3153 = vmatprep.subr.mxu0 0.0
        %3154 = vmatpush1.msra.mxu0 0.0
        %3155 = vmatprep.subr.mxu0 0.0
        %3156 = vmatpush1.msra.mxu0 0.0
        %3157 = vmatprep.subr.mxu0 0.0
        %3158 = vmatpush1.msra.mxu0 0.0
        %3159 = vmatprep.subr.mxu0 0.0
        %3160 = vmatpush1.msra.mxu0 0.0
        %3161 = vmatprep.subr.mxu0 0.0
        %3162 = vmatpush1.msra.mxu0 0.0
        %3163 = vmatprep.subr.mxu0 0.0
        %3164 = vmatpush1.msra.mxu0 0.0
        %3165 = vmatprep.subr.mxu0 0.0
        %3166 = vmatpush1.msra.mxu0 0.0
        %3167 = vmatprep.subr.mxu0 0.0
        %3168 = vmatpush1.msra.mxu0 0.0
        %3169 = vmatprep.subr.mxu0 0.0
        %3170 = vmatpush1.msra.mxu0 0.0
        %3171 = vmatprep.subr.mxu0 0.0
        %3172 = vmatpush1.msra.mxu0 0.0
        %3173 = vmatprep.subr.mxu0 0.0
        %3174 = vmatpush1.msra.mxu0 0.0
        %3175 = vmatprep.subr.mxu0 0.0
        %3176 = vmatpush1.msra.mxu0 %v3145
        %3177 = vmatprep.subr.mxu0 0.0
        %3178 = vmatpush1.msra.mxu0 %v3135
        %3179 = vmatprep.subr.mxu0 0.0
        %3180 = vmatpush2.msra.mxu0 0.0
        %3181 = vmatprep.subr.mxu0 0.0
        %3182 = vmatpush2.msra.mxu0 0.0
        %3183 = vmatprep.subr.mxu0 0.0
        %3184 = vmatpush2.msra.mxu0 0.0
        %3185 = vmatprep.subr.mxu0 0.0
        %3186 = vmatpush2.msra.mxu0 0.0
        %3187 = vmatprep.subr.mxu0 0.0
        %3188 = vmatpush2.msra.mxu0 0.0
        %3189 = vmatprep.subr.mxu0 0.0
        %3190 = vmatpush2.msra.mxu0 0.0
        %3191 = vmatprep.subr.mxu0 0.0
        %3192 = vmatpush2.msra.mxu0 0.0
        %3193 = vmatprep.subr.mxu0 0.0
        %3194 = vmatpush2.msra.mxu0 0.0
        %3195 = vmatprep.subr.mxu0 0.0
        %3196 = vmatpush2.msra.mxu0 0.0
        %3197 = vmatprep.subr.mxu0 0.0
        %3198 = vmatpush2.msra.mxu0 0.0
        %3199 = vmatprep.subr.mxu0 0.0
        %3200 = vmatpush2.msra.mxu0 0.0
        %3201 = vmatprep.subr.mxu0 0.0
        %3202 = vmatpush2.msra.mxu0 0.0
        %3203 = vmatprep.subr.mxu0 0.0
        %3204 = vmatpush2.msra.mxu0 0.0
        %3205 = vmatprep.subr.mxu0 0.0
        %3206 = vmatpush2.msra.mxu0 0.0
        %3207 = vmatprep.subr.mxu0 0.0
        %3208 = vmatpush2.msra.mxu0 0.0
        %3209 = vmatprep.subr.mxu0 0.0
        %3210 = vmatpush2.msra.mxu0 0.0
        %3211 = vmatprep.mubr.f32.mxu0 0.0
        %3212 = vmatmul.mubr.f32.gmra.mxu0 %v3140
        %v3213 = vpop.f32.mrf.mxu0
        %v3214 = vadd.f32 0.0, %v3213
        %v3215 = vpop.f32.mrf.mxu0
        %3216 = vmatprep.mubr.f32.mxu0 0.0
        %3217 = vmatmul.mubr.f32.gmra.mxu0 %v3143
        %v3218 = vpop.f32.mrf.mxu0
        %v3219 = vadd.f32 0.0, %v3218
        %v3220 = vpop.f32.mrf.mxu0
        %3221 = vdwg.mxu0
        %3222 = vrot.lane.b32.xlu0 %v1981, 64
        %v3223 = vpop.permute.xlu0 %3222
        %3224 = vrot.lane.b32.xlu0 %v1980, 64
        %v3225 = vpop.permute.xlu0 %3224
        %v3228 = vsel %vm2691, %v2861, 0
        %v3231 = vsel %vm2691, %v2862, 0
        %v3233 = vsel %vm2880, %v3225, 0
        %3235 = vmatprep.subr.mxu0 0.0
        %3236 = vmatpush1.msra.mxu0 0.0
        %3237 = vmatprep.subr.mxu0 0.0
        %3238 = vmatpush1.msra.mxu0 0.0
        %3239 = vmatprep.subr.mxu0 0.0
        %3240 = vmatpush1.msra.mxu0 0.0
        %3241 = vmatprep.subr.mxu0 0.0
        %3242 = vmatpush1.msra.mxu0 0.0
        %3243 = vmatprep.subr.mxu0 0.0
        %3244 = vmatpush1.msra.mxu0 0.0
        %3245 = vmatprep.subr.mxu0 0.0
        %3246 = vmatpush1.msra.mxu0 0.0
        %3247 = vmatprep.subr.mxu0 0.0
        %3248 = vmatpush1.msra.mxu0 0.0
        %3249 = vmatprep.subr.mxu0 0.0
        %3250 = vmatpush1.msra.mxu0 0.0
        %3251 = vmatprep.subr.mxu0 0.0
        %3252 = vmatpush1.msra.mxu0 0.0
        %3253 = vmatprep.subr.mxu0 0.0
        %3254 = vmatpush1.msra.mxu0 0.0
        %3255 = vmatprep.subr.mxu0 0.0
        %3256 = vmatpush1.msra.mxu0 0.0
        %3257 = vmatprep.subr.mxu0 0.0
        %3258 = vmatpush1.msra.mxu0 0.0
        %3259 = vmatprep.subr.mxu0 0.0
        %3260 = vmatpush1.msra.mxu0 0.0
        %3261 = vmatprep.subr.mxu0 0.0
        %3262 = vmatpush1.msra.mxu0 0.0
        %3263 = vmatprep.subr.mxu0 0.0
        %3264 = vmatpush1.msra.mxu0 %v3233
        %3265 = vmatprep.subr.mxu0 0.0
        %3266 = vmatpush1.msra.mxu0 %v3223
        %3267 = vmatprep.subr.mxu0 0.0
        %3268 = vmatpush2.msra.mxu0 0.0
        %3269 = vmatprep.subr.mxu0 0.0
        %3270 = vmatpush2.msra.mxu0 0.0
        %3271 = vmatprep.subr.mxu0 0.0
        %3272 = vmatpush2.msra.mxu0 0.0
        %3273 = vmatprep.subr.mxu0 0.0
        %3274 = vmatpush2.msra.mxu0 0.0
        %3275 = vmatprep.subr.mxu0 0.0
        %3276 = vmatpush2.msra.mxu0 0.0
        %3277 = vmatprep.subr.mxu0 0.0
        %3278 = vmatpush2.msra.mxu0 0.0
        %3279 = vmatprep.subr.mxu0 0.0
        %3280 = vmatpush2.msra.mxu0 0.0
        %3281 = vmatprep.subr.mxu0 0.0
        %3282 = vmatpush2.msra.mxu0 0.0
        %3283 = vmatprep.subr.mxu0 0.0
        %3284 = vmatpush2.msra.mxu0 0.0
        %3285 = vmatprep.subr.mxu0 0.0
        %3286 = vmatpush2.msra.mxu0 0.0
        %3287 = vmatprep.subr.mxu0 0.0
        %3288 = vmatpush2.msra.mxu0 0.0
        %3289 = vmatprep.subr.mxu0 0.0
        %3290 = vmatpush2.msra.mxu0 0.0
        %3291 = vmatprep.subr.mxu0 0.0
        %3292 = vmatpush2.msra.mxu0 0.0
        %3293 = vmatprep.subr.mxu0 0.0
        %3294 = vmatpush2.msra.mxu0 0.0
        %3295 = vmatprep.subr.mxu0 0.0
        %3296 = vmatpush2.msra.mxu0 0.0
        %3297 = vmatprep.subr.mxu0 0.0
        %3298 = vmatpush2.msra.mxu0 0.0
        %3299 = vmatprep.mubr.f32.mxu0 0.0
        %3300 = vmatmul.mubr.f32.gmra.mxu0 %v3228
        %v3301 = vpop.f32.mrf.mxu0
        %v3302 = vadd.f32 0.0, %v3301
        %v3303 = vpop.f32.mrf.mxu0
        %3304 = vmatprep.mubr.f32.mxu0 0.0
        %3305 = vmatmul.mubr.f32.gmra.mxu0 %v3231
        %v3306 = vpop.f32.mrf.mxu0
        %v3307 = vadd.f32 0.0, %v3306
        %v3308 = vpop.f32.mrf.mxu0
        %3309 = vdwg.mxu0
        %3310 = vrot.lane.b32.xlu0 %v1983, 64
        %v3311 = vpop.permute.xlu0 %3310
        %3312 = vrot.lane.b32.xlu0 %v1985, 64
        %v3313 = vpop.permute.xlu0 %3312
        %v3316 = vsel %vm2691, %v2863, 0
        %v3319 = vsel %vm2691, %v2864, 0
        %v3321 = vsel %vm2880, %v3313, 0
        %3323 = vmatprep.subr.mxu0 0.0
        %3324 = vmatpush1.msra.mxu0 0.0
        %3325 = vmatprep.subr.mxu0 0.0
        %3326 = vmatpush1.msra.mxu0 0.0
        %3327 = vmatprep.subr.mxu0 0.0
        %3328 = vmatpush1.msra.mxu0 0.0
        %3329 = vmatprep.subr.mxu0 0.0
        %3330 = vmatpush1.msra.mxu0 0.0
        %3331 = vmatprep.subr.mxu0 0.0
        %3332 = vmatpush1.msra.mxu0 0.0
        %3333 = vmatprep.subr.mxu0 0.0
        %3334 = vmatpush1.msra.mxu0 0.0
        %3335 = vmatprep.subr.mxu0 0.0
        %3336 = vmatpush1.msra.mxu0 0.0
        %3337 = vmatprep.subr.mxu0 0.0
        %3338 = vmatpush1.msra.mxu0 0.0
        %3339 = vmatprep.subr.mxu0 0.0
        %3340 = vmatpush1.msra.mxu0 0.0
        %3341 = vmatprep.subr.mxu0 0.0
        %3342 = vmatpush1.msra.mxu0 0.0
        %3343 = vmatprep.subr.mxu0 0.0
        %3344 = vmatpush1.msra.mxu0 0.0
        %3345 = vmatprep.subr.mxu0 0.0
        %3346 = vmatpush1.msra.mxu0 0.0
        %3347 = vmatprep.subr.mxu0 0.0
        %3348 = vmatpush1.msra.mxu0 0.0
        %3349 = vmatprep.subr.mxu0 0.0
        %3350 = vmatpush1.msra.mxu0 0.0
        %3351 = vmatprep.subr.mxu0 0.0
        %3352 = vmatpush1.msra.mxu0 %v3321
        %3353 = vmatprep.subr.mxu0 0.0
        %3354 = vmatpush1.msra.mxu0 %v3311
        %3355 = vmatprep.subr.mxu0 0.0
        %3356 = vmatpush2.msra.mxu0 0.0
        %3357 = vmatprep.subr.mxu0 0.0
        %3358 = vmatpush2.msra.mxu0 0.0
        %3359 = vmatprep.subr.mxu0 0.0
        %3360 = vmatpush2.msra.mxu0 0.0
        %3361 = vmatprep.subr.mxu0 0.0
        %3362 = vmatpush2.msra.mxu0 0.0
        %3363 = vmatprep.subr.mxu0 0.0
        %3364 = vmatpush2.msra.mxu0 0.0
        %3365 = vmatprep.subr.mxu0 0.0
        %3366 = vmatpush2.msra.mxu0 0.0
        %3367 = vmatprep.subr.mxu0 0.0
        %3368 = vmatpush2.msra.mxu0 0.0
        %3369 = vmatprep.subr.mxu0 0.0
        %3370 = vmatpush2.msra.mxu0 0.0
        %3371 = vmatprep.subr.mxu0 0.0
        %3372 = vmatpush2.msra.mxu0 0.0
        %3373 = vmatprep.subr.mxu0 0.0
        %3374 = vmatpush2.msra.mxu0 0.0
        %3375 = vmatprep.subr.mxu0 0.0
        %3376 = vmatpush2.msra.mxu0 0.0
        %3377 = vmatprep.subr.mxu0 0.0
        %3378 = vmatpush2.msra.mxu0 0.0
        %3379 = vmatprep.subr.mxu0 0.0
        %3380 = vmatpush2.msra.mxu0 0.0
        %3381 = vmatprep.subr.mxu0 0.0
        %3382 = vmatpush2.msra.mxu0 0.0
        %3383 = vmatprep.subr.mxu0 0.0
        %3384 = vmatpush2.msra.mxu0 0.0
        %3385 = vmatprep.subr.mxu0 0.0
        %3386 = vmatpush2.msra.mxu0 0.0
        %3387 = vmatprep.mubr.f32.mxu0 0.0
        %3388 = vmatmul.mubr.f32.gmra.mxu0 %v3316
        %v3389 = vpop.f32.mrf.mxu0
        %v3390 = vadd.f32 0.0, %v3389
        %v3391 = vpop.f32.mrf.mxu0
        %3392 = vmatprep.mubr.f32.mxu0 0.0
        %3393 = vmatmul.mubr.f32.gmra.mxu0 %v3319
        %v3394 = vpop.f32.mrf.mxu0
        %v3395 = vadd.f32 0.0, %v3394
        %v3396 = vpop.f32.mrf.mxu0
        %3397 = vdwg.mxu0
        %3398 = vrot.lane.b32.xlu0 %v1987, 64
        %v3399 = vpop.permute.xlu0 %3398
        %3400 = vrot.lane.b32.xlu0 %v1989, 64
        %v3401 = vpop.permute.xlu0 %3400
        %v3404 = vsel %vm2691, %v2865, 0
        %v3407 = vsel %vm2691, %v2866, 0
        %v3409 = vsel %vm2880, %v3401, 0
        %3411 = vmatprep.subr.mxu0 0.0
        %3412 = vmatpush1.msra.mxu0 0.0
        %3413 = vmatprep.subr.mxu0 0.0
        %3414 = vmatpush1.msra.mxu0 0.0
        %3415 = vmatprep.subr.mxu0 0.0
        %3416 = vmatpush1.msra.mxu0 0.0
        %3417 = vmatprep.subr.mxu0 0.0
        %3418 = vmatpush1.msra.mxu0 0.0
        %3419 = vmatprep.subr.mxu0 0.0
        %3420 = vmatpush1.msra.mxu0 0.0
        %3421 = vmatprep.subr.mxu0 0.0
        %3422 = vmatpush1.msra.mxu0 0.0
        %3423 = vmatprep.subr.mxu0 0.0
        %3424 = vmatpush1.msra.mxu0 0.0
        %3425 = vmatprep.subr.mxu0 0.0
        %3426 = vmatpush1.msra.mxu0 0.0
        %3427 = vmatprep.subr.mxu0 0.0
        %3428 = vmatpush1.msra.mxu0 0.0
        %3429 = vmatprep.subr.mxu0 0.0
        %3430 = vmatpush1.msra.mxu0 0.0
        %3431 = vmatprep.subr.mxu0 0.0
        %3432 = vmatpush1.msra.mxu0 0.0
        %3433 = vmatprep.subr.mxu0 0.0
        %3434 = vmatpush1.msra.mxu0 0.0
        %3435 = vmatprep.subr.mxu0 0.0
        %3436 = vmatpush1.msra.mxu0 0.0
        %3437 = vmatprep.subr.mxu0 0.0
        %3438 = vmatpush1.msra.mxu0 0.0
        %3439 = vmatprep.subr.mxu0 0.0
        %3440 = vmatpush1.msra.mxu0 %v3409
        %3441 = vmatprep.subr.mxu0 0.0
        %3442 = vmatpush1.msra.mxu0 %v3399
        %3443 = vmatprep.subr.mxu0 0.0
        %3444 = vmatpush2.msra.mxu0 0.0
        %3445 = vmatprep.subr.mxu0 0.0
        %3446 = vmatpush2.msra.mxu0 0.0
        %3447 = vmatprep.subr.mxu0 0.0
        %3448 = vmatpush2.msra.mxu0 0.0
        %3449 = vmatprep.subr.mxu0 0.0
        %3450 = vmatpush2.msra.mxu0 0.0
        %3451 = vmatprep.subr.mxu0 0.0
        %3452 = vmatpush2.msra.mxu0 0.0
        %3453 = vmatprep.subr.mxu0 0.0
        %3454 = vmatpush2.msra.mxu0 0.0
        %3455 = vmatprep.subr.mxu0 0.0
        %3456 = vmatpush2.msra.mxu0 0.0
        %3457 = vmatprep.subr.mxu0 0.0
        %3458 = vmatpush2.msra.mxu0 0.0
        %3459 = vmatprep.subr.mxu0 0.0
        %3460 = vmatpush2.msra.mxu0 0.0
        %3461 = vmatprep.subr.mxu0 0.0
        %3462 = vmatpush2.msra.mxu0 0.0
        %3463 = vmatprep.subr.mxu0 0.0
        %3464 = vmatpush2.msra.mxu0 0.0
        %3465 = vmatprep.subr.mxu0 0.0
        %3466 = vmatpush2.msra.mxu0 0.0
        %3467 = vmatprep.subr.mxu0 0.0
        %3468 = vmatpush2.msra.mxu0 0.0
        %3469 = vmatprep.subr.mxu0 0.0
        %3470 = vmatpush2.msra.mxu0 0.0
        %3471 = vmatprep.subr.mxu0 0.0
        %3472 = vmatpush2.msra.mxu0 0.0
        %3473 = vmatprep.subr.mxu0 0.0
        %3474 = vmatpush2.msra.mxu0 0.0
        %3475 = vmatprep.mubr.f32.mxu0 0.0
        %3476 = vmatmul.mubr.f32.gmra.mxu0 %v3404
        %v3477 = vpop.f32.mrf.mxu0
        %v3478 = vadd.f32 0.0, %v3477
        %v3479 = vpop.f32.mrf.mxu0
        %3480 = vmatprep.mubr.f32.mxu0 0.0
        %3481 = vmatmul.mubr.f32.gmra.mxu0 %v3407
        %v3482 = vpop.f32.mrf.mxu0
        %v3483 = vadd.f32 0.0, %v3482
        %v3484 = vpop.f32.mrf.mxu0
        %3485 = vdwg.mxu0
        %3486 = vrot.lane.b32.xlu0 %v1991, 64
        %v3487 = vpop.permute.xlu0 %3486
        %3488 = vrot.lane.b32.xlu0 %v1993, 64
        %v3489 = vpop.permute.xlu0 %3488
        %v3492 = vsel %vm2691, %v2867, 0
        %v3495 = vsel %vm2691, %v2868, 0
        %v3497 = vsel %vm2880, %v3489, 0
        %3499 = vmatprep.subr.mxu0 0.0
        %3500 = vmatpush1.msra.mxu0 0.0
        %3501 = vmatprep.subr.mxu0 0.0
        %3502 = vmatpush1.msra.mxu0 0.0
        %3503 = vmatprep.subr.mxu0 0.0
        %3504 = vmatpush1.msra.mxu0 0.0
        %3505 = vmatprep.subr.mxu0 0.0
        %3506 = vmatpush1.msra.mxu0 0.0
        %3507 = vmatprep.subr.mxu0 0.0
        %3508 = vmatpush1.msra.mxu0 0.0
        %3509 = vmatprep.subr.mxu0 0.0
        %3510 = vmatpush1.msra.mxu0 0.0
        %3511 = vmatprep.subr.mxu0 0.0
        %3512 = vmatpush1.msra.mxu0 0.0
        %3513 = vmatprep.subr.mxu0 0.0
        %3514 = vmatpush1.msra.mxu0 0.0
        %3515 = vmatprep.subr.mxu0 0.0
        %3516 = vmatpush1.msra.mxu0 0.0
        %3517 = vmatprep.subr.mxu0 0.0
        %3518 = vmatpush1.msra.mxu0 0.0
        %3519 = vmatprep.subr.mxu0 0.0
        %3520 = vmatpush1.msra.mxu0 0.0
        %3521 = vmatprep.subr.mxu0 0.0
        %3522 = vmatpush1.msra.mxu0 0.0
        %3523 = vmatprep.subr.mxu0 0.0
        %3524 = vmatpush1.msra.mxu0 0.0
        %3525 = vmatprep.subr.mxu0 0.0
        %3526 = vmatpush1.msra.mxu0 0.0
        %3527 = vmatprep.subr.mxu0 0.0
        %3528 = vmatpush1.msra.mxu0 %v3497
        %3529 = vmatprep.subr.mxu0 0.0
        %3530 = vmatpush1.msra.mxu0 %v3487
        %3531 = vmatprep.subr.mxu0 0.0
        %3532 = vmatpush2.msra.mxu0 0.0
        %3533 = vmatprep.subr.mxu0 0.0
        %3534 = vmatpush2.msra.mxu0 0.0
        %3535 = vmatprep.subr.mxu0 0.0
        %3536 = vmatpush2.msra.mxu0 0.0
        %3537 = vmatprep.subr.mxu0 0.0
        %3538 = vmatpush2.msra.mxu0 0.0
        %3539 = vmatprep.subr.mxu0 0.0
        %3540 = vmatpush2.msra.mxu0 0.0
        %3541 = vmatprep.subr.mxu0 0.0
        %3542 = vmatpush2.msra.mxu0 0.0
        %3543 = vmatprep.subr.mxu0 0.0
        %3544 = vmatpush2.msra.mxu0 0.0
        %3545 = vmatprep.subr.mxu0 0.0
        %3546 = vmatpush2.msra.mxu0 0.0
        %3547 = vmatprep.subr.mxu0 0.0
        %3548 = vmatpush2.msra.mxu0 0.0
        %3549 = vmatprep.subr.mxu0 0.0
        %3550 = vmatpush2.msra.mxu0 0.0
        %3551 = vmatprep.subr.mxu0 0.0
        %3552 = vmatpush2.msra.mxu0 0.0
        %3553 = vmatprep.subr.mxu0 0.0
        %3554 = vmatpush2.msra.mxu0 0.0
        %3555 = vmatprep.subr.mxu0 0.0
        %3556 = vmatpush2.msra.mxu0 0.0
        %3557 = vmatprep.subr.mxu0 0.0
        %3558 = vmatpush2.msra.mxu0 0.0
        %3559 = vmatprep.subr.mxu0 0.0
        %3560 = vmatpush2.msra.mxu0 0.0
        %3561 = vmatprep.subr.mxu0 0.0
        %3562 = vmatpush2.msra.mxu0 0.0
        %3563 = vmatprep.mubr.f32.mxu0 0.0
        %3564 = vmatmul.mubr.f32.gmra.mxu0 %v3492
        %v3565 = vpop.f32.mrf.mxu0
        %v3566 = vadd.f32 0.0, %v3565
        %v3567 = vpop.f32.mrf.mxu0
        %3568 = vmatprep.mubr.f32.mxu0 0.0
        %3569 = vmatmul.mubr.f32.gmra.mxu0 %v3495
        %v3570 = vpop.f32.mrf.mxu0
        %v3571 = vadd.f32 0.0, %v3570
        %v3572 = vpop.f32.mrf.mxu0
        %3573 = vdwg.mxu0
        %3576 = vrot.lane.b32.xlu0 %v3038, 8
        %v3577 = vpop.permute.xlu0 %3576
        %3578 = vrot.lane.b32.xlu0 %v3043, 8
        %v3579 = vpop.permute.xlu0 %3578
        %3584 = vrot.lane.b32.xlu0 %v3126, 16
        %v3585 = vpop.permute.xlu0 %3584
        %3586 = vrot.lane.b32.xlu0 %v3131, 16
        %v3587 = vpop.permute.xlu0 %3586
        %3592 = vrot.lane.b32.xlu0 %v3214, 24
        %v3593 = vpop.permute.xlu0 %3592
        %3594 = vrot.lane.b32.xlu0 %v3219, 24
        %v3595 = vpop.permute.xlu0 %3594
        %v3598 = vsel %vm1998, %v2950, %v3577
        %v3599 = vsel %vm1998, %v2955, %v3579
        %vm3600 = vcmask 130048
        %v3601 = vsel %vm3600, %v3598, %v3585
        %v3602 = vsel %vm3600, %v3599, %v3587
        %vm3603 = vcmask 195584
        %v3604 = vsel %vm3603, %v3601, %v3593
        %v3605 = vsel %vm3603, %v3602, %v3595
        %3608 = vrot.lane.b32.xlu0 %v3390, 8
        %v3609 = vpop.permute.xlu0 %3608
        %3610 = vrot.lane.b32.xlu0 %v3395, 8
        %v3611 = vpop.permute.xlu0 %3610
        %3616 = vrot.lane.b32.xlu0 %v3478, 16
        %v3617 = vpop.permute.xlu0 %3616
        %3618 = vrot.lane.b32.xlu0 %v3483, 16
        %v3619 = vpop.permute.xlu0 %3618
        %3624 = vrot.lane.b32.xlu0 %v3566, 24
        %v3625 = vpop.permute.xlu0 %3624
        %3626 = vrot.lane.b32.xlu0 %v3571, 24
        %v3627 = vpop.permute.xlu0 %3626
        %v3630 = vsel %vm1998, %v3302, %v3609
        %v3631 = vsel %vm1998, %v3307, %v3611
        %v3632 = vsel %vm3600, %v3630, %v3617
        %v3633 = vsel %vm3600, %v3631, %v3619
        %v3634 = vsel %vm3603, %v3632, %v3625
        %v3635 = vsel %vm3603, %v3633, %v3627
        %v3638 = vrot.slane %v3634, 7
        %v3639 = vrot.slane %v3635, 7
        %v3640 = vsel %vm2880, %v3638, %v3639
        %v3642 = vsel %vm2880, %v3605, %v3638
        %v3643 = vld [vmem:[%s1086] sm:$0xff]
        %v3644 = vld [vmem:[%s1086 + $0x8] sm:$0xff]
        %v3645 = vld [vmem:[%s1086 + $0x10] sm:$0xff]
        %v3646 = vld [vmem:[%s1086 + $0x18] sm:$0xff]
        %v3647 = vld [vmem:[%s1089] sm:$0x1]
        %v3649 = vlaneseq
        %v3650 = vshrl.u32 %v3649, 7
        %v3651 = vsub.s32 0, %v3650
        %v3652 = vrot.slane %v3647, %v3651
        %v3655 = vsel %vm1873, %v3604, 0
        %v3658 = vsel %vm1873, %v3642, 0
        %v3660 = vsel %vm1873, %v3640, 0
        %3662 = vmatprep.subr.mxu0 0.0
        %3663 = vmatpush1.msra.mxu0 0.0
        %3664 = vmatprep.subr.mxu0 0.0
        %3665 = vmatpush1.msra.mxu0 0.0
        %3666 = vmatprep.subr.mxu0 0.0
        %3667 = vmatpush1.msra.mxu0 0.0
        %3668 = vmatprep.subr.mxu0 0.0
        %3669 = vmatpush1.msra.mxu0 0.0
        %3670 = vmatprep.subr.mxu0 0.0
        %3671 = vmatpush1.msra.mxu0 0.0
        %3672 = vmatprep.subr.mxu0 0.0
        %3673 = vmatpush1.msra.mxu0 0.0
        %3674 = vmatprep.subr.mxu0 0.0
        %3675 = vmatpush1.msra.mxu0 0.0
        %3676 = vmatprep.subr.mxu0 0.0
        %3677 = vmatpush1.msra.mxu0 0.0
        %3678 = vmatprep.subr.mxu0 0.0
        %3679 = vmatpush1.msra.mxu0 0.0
        %3680 = vmatprep.subr.mxu0 0.0
        %3681 = vmatpush1.msra.mxu0 0.0
        %3682 = vmatprep.subr.mxu0 0.0
        %3683 = vmatpush1.msra.mxu0 0.0
        %3684 = vmatprep.subr.mxu0 0.0
        %3685 = vmatpush1.msra.mxu0 0.0
        %3686 = vmatprep.subr.mxu0 0.0
        %3687 = vmatpush1.msra.mxu0 %v3646
        %3688 = vmatprep.subr.mxu0 0.0
        %3689 = vmatpush1.msra.mxu0 %v3645
        %3690 = vmatprep.subr.mxu0 0.0
        %3691 = vmatpush1.msra.mxu0 %v3644
        %3692 = vmatprep.subr.mxu0 0.0
        %3693 = vmatpush1.msra.mxu0 %v3643
        %3694 = vmatprep.subr.mxu0 0.0
        %3695 = vmatpush2.msra.mxu0 0.0
        %3696 = vmatprep.subr.mxu0 0.0
        %3697 = vmatpush2.msra.mxu0 0.0
        %3698 = vmatprep.subr.mxu0 0.0
        %3699 = vmatpush2.msra.mxu0 0.0
        %3700 = vmatprep.subr.mxu0 0.0
        %3701 = vmatpush2.msra.mxu0 0.0
        %3702 = vmatprep.subr.mxu0 0.0
        %3703 = vmatpush2.msra.mxu0 0.0
        %3704 = vmatprep.subr.mxu0 0.0
        %3705 = vmatpush2.msra.mxu0 0.0
        %3706 = vmatprep.subr.mxu0 0.0
        %3707 = vmatpush2.msra.mxu0 0.0
        %3708 = vmatprep.subr.mxu0 0.0
        %3709 = vmatpush2.msra.mxu0 0.0
        %3710 = vmatprep.subr.mxu0 0.0
        %3711 = vmatpush2.msra.mxu0 0.0
        %3712 = vmatprep.subr.mxu0 0.0
        %3713 = vmatpush2.msra.mxu0 0.0
        %3714 = vmatprep.subr.mxu0 0.0
        %3715 = vmatpush2.msra.mxu0 0.0
        %3716 = vmatprep.subr.mxu0 0.0
        %3717 = vmatpush2.msra.mxu0 0.0
        %3718 = vmatprep.subr.mxu0 0.0
        %3719 = vmatpush2.msra.mxu0 0.0
        %3720 = vmatprep.subr.mxu0 0.0
        %3721 = vmatpush2.msra.mxu0 0.0
        %3722 = vmatprep.subr.mxu0 0.0
        %3723 = vmatpush2.msra.mxu0 0.0
        %3724 = vmatprep.subr.mxu0 0.0
        %3725 = vmatpush2.msra.mxu0 0.0
        %3726 = vmatprep.mubr.f32.mxu0 0.0
        %3727 = vmatmul.mubr.f32.gmra.mxu0 %v3655
        %v3728 = vpop.f32.mrf.mxu0
        %v3729 = vadd.f32 %v3652, %v3728
        %v3730 = vpop.f32.mrf.mxu0
        %3731 = vmatprep.mubr.f32.mxu0 0.0
        %3732 = vmatmul.mubr.f32.gmra.mxu0 %v3658
        %v3733 = vpop.f32.mrf.mxu0
        %v3734 = vadd.f32 %v3652, %v3733
        %v3735 = vpop.f32.mrf.mxu0
        %3736 = vmatprep.mubr.f32.mxu0 0.0
        %3737 = vmatmul.mubr.f32.gmra.mxu0 %v3660
        %v3738 = vpop.f32.mrf.mxu0
        %v3739 = vadd.f32 %v3652, %v3738
        %v3740 = vpop.f32.mrf.mxu0
        %3741 = vdwg.mxu0
        %v3742 = vadd.f32 %v1859, %v3729
        %v3743 = vadd.f32 %v1860, %v3734
        %v3744 = vadd.f32 %v1861, %v3739
        %v3745 = vld [vmem:[%s1092] sm:$0x1]
        %v3746 = vld [vmem:[%s1095] sm:$0x1]
        %v3747 = vsel %vm1873, %v3742, 0.0
        %3748 = vadd.xlane.f32.xlu0 %v3747
        %v3749 = vpop.xlane.xlu0 %3748
        %v3750 = vsel %vm1873, %v3743, 0.0
        %3751 = vadd.xlane.f32.xlu0 %v3750
        %v3752 = vpop.xlane.xlu0 %3751
        %vm3753 = vcmask 254976
        %v3754 = vsel %vm3753, %v3744, 0.0
        %3755 = vadd.xlane.f32.xlu0 %v3754
        %v3756 = vpop.xlane.xlu0 %3755
        %v3757 = vrcp.pop 32.0
        %v3758 = vmul.f32 %v3749, %v3757
        %v3759 = vmul.f32 %v3752, %v3757
        %v3760 = vmul.f32 %v3756, %v3757
        %v3761 = vsub.f32 %v3742, %v3758
        %v3762 = vsub.f32 %v3743, %v3759
        %v3763 = vsub.f32 %v3744, %v3760
        %v3764 = vmul.f32 %v3761, %v3761
        %v3765 = vmul.f32 %v3762, %v3762
        %v3766 = vmul.f32 %v3763, %v3763
        %v3767 = vsel %vm1873, %v3764, 0.0
        %3768 = vadd.xlane.f32.xlu0 %v3767
        %v3769 = vpop.xlane.xlu0 %3768
        %v3770 = vsel %vm1873, %v3765, 0.0
        %3771 = vadd.xlane.f32.xlu0 %v3770
        %v3772 = vpop.xlane.xlu0 %3771
        %v3773 = vsel %vm3753, %v3766, 0.0
        %3774 = vadd.xlane.f32.xlu0 %v3773
        %v3775 = vpop.xlane.xlu0 %3774
        %v3776 = vmul.f32 %v3769, %v3757
        %v3777 = vmul.f32 %v3772, %v3757
        %v3778 = vmul.f32 %v3775, %v3757
        %v3779 = vadd.f32 %v3776, 1e-05
        %v3780 = vadd.f32 %v3777, 1e-05
        %v3781 = vadd.f32 %v3778, 1e-05
        %v3782 = vrsqrt.pop %v3779
        %v3783 = vrsqrt.pop %v3780
        %v3784 = vrsqrt.pop %v3781
        %v3785 = vmul.f32 %v3761, %v3782
        %v3786 = vmul.f32 %v3762, %v3783
        %v3787 = vmul.f32 %v3763, %v3784
        %v3789 = vlaneseq
        %v3790 = vshrl.u32 %v3789, 7
        %v3791 = vsub.s32 0, %v3790
        %v3792 = vrot.slane %v3745, %v3791
        %v3794 = vmul.f32 %v3785, %v3792
        %v3795 = vmul.f32 %v3786, %v3792
        %v3796 = vmul.f32 %v3787, %v3792
        %v3798 = vlaneseq
        %v3799 = vshrl.u32 %v3798, 7
        %v3800 = vsub.s32 0, %v3799
        %v3801 = vrot.slane %v3746, %v3800
        %v3803 = vadd.f32 %v3794, %v3801
        %v3804 = vadd.f32 %v3795, %v3801
        %v3805 = vadd.f32 %v3796, %v3801
        %v3806 = vld [vmem:[%s1100] sm:$0xff]
        %v3807 = vld [vmem:[%s1100 + $0x8] sm:$0xff]
        %v3808 = vld [vmem:[%s1100 + $0x10] sm:$0xff]
        %v3809 = vld [vmem:[%s1100 + $0x18] sm:$0xff]
        %v3810 = vld [vmem:[%s951] sm:$0x1]
        %v3812 = vlaneseq
        %v3813 = vshrl.u32 %v3812, 7
        %v3814 = vsub.s32 0, %v3813
        %v3815 = vrot.slane %v3810, %v3814
        %v3818 = vsel %vm1873, %v3803, 0
        %v3821 = vsel %vm1873, %v3804, 0
        %v3824 = vsel %vm1873, %v3805, 0
        %3826 = vmatprep.subr.mxu0 0.0
        %3827 = vmatpush1.msra.mxu0 0.0
        %3828 = vmatprep.subr.mxu0 0.0
        %3829 = vmatpush1.msra.mxu0 0.0
        %3830 = vmatprep.subr.mxu0 0.0
        %3831 = vmatpush1.msra.mxu0 0.0
        %3832 = vmatprep.subr.mxu0 0.0
        %3833 = vmatpush1.msra.mxu0 0.0
        %3834 = vmatprep.subr.mxu0 0.0
        %3835 = vmatpush1.msra.mxu0 0.0
        %3836 = vmatprep.subr.mxu0 0.0
        %3837 = vmatpush1.msra.mxu0 0.0
        %3838 = vmatprep.subr.mxu0 0.0
        %3839 = vmatpush1.msra.mxu0 0.0
        %3840 = vmatprep.subr.mxu0 0.0
        %3841 = vmatpush1.msra.mxu0 0.0
        %3842 = vmatprep.subr.mxu0 0.0
        %3843 = vmatpush1.msra.mxu0 0.0
        %3844 = vmatprep.subr.mxu0 0.0
        %3845 = vmatpush1.msra.mxu0 0.0
        %3846 = vmatprep.subr.mxu0 0.0
        %3847 = vmatpush1.msra.mxu0 0.0
        %3848 = vmatprep.subr.mxu0 0.0
        %3849 = vmatpush1.msra.mxu0 0.0
        %3850 = vmatprep.subr.mxu0 0.0
        %3851 = vmatpush1.msra.mxu0 %v3809
        %3852 = vmatprep.subr.mxu0 0.0
        %3853 = vmatpush1.msra.mxu0 %v3808
        %3854 = vmatprep.subr.mxu0 0.0
        %3855 = vmatpush1.msra.mxu0 %v3807
        %3856 = vmatprep.subr.mxu0 0.0
        %3857 = vmatpush1.msra.mxu0 %v3806
        %3858 = vmatprep.subr.mxu0 0.0
        %3859 = vmatpush2.msra.mxu0 0.0
        %3860 = vmatprep.subr.mxu0 0.0
        %3861 = vmatpush2.msra.mxu0 0.0
        %3862 = vmatprep.subr.mxu0 0.0
        %3863 = vmatpush2.msra.mxu0 0.0
        %3864 = vmatprep.subr.mxu0 0.0
        %3865 = vmatpush2.msra.mxu0 0.0
        %3866 = vmatprep.subr.mxu0 0.0
        %3867 = vmatpush2.msra.mxu0 0.0
        %3868 = vmatprep.subr.mxu0 0.0
        %3869 = vmatpush2.msra.mxu0 0.0
        %3870 = vmatprep.subr.mxu0 0.0
        %3871 = vmatpush2.msra.mxu0 0.0
        %3872 = vmatprep.subr.mxu0 0.0
        %3873 = vmatpush2.msra.mxu0 0.0
        %3874 = vmatprep.subr.mxu0 0.0
        %3875 = vmatpush2.msra.mxu0 0.0
        %3876 = vmatprep.subr.mxu0 0.0
        %3877 = vmatpush2.msra.mxu0 0.0
        %3878 = vmatprep.subr.mxu0 0.0
        %3879 = vmatpush2.msra.mxu0 0.0
        %3880 = vmatprep.subr.mxu0 0.0
        %3881 = vmatpush2.msra.mxu0 0.0
        %3882 = vmatprep.subr.mxu0 0.0
        %3883 = vmatpush2.msra.mxu0 0.0
        %3884 = vmatprep.subr.mxu0 0.0
        %3885 = vmatpush2.msra.mxu0 0.0
        %3886 = vmatprep.subr.mxu0 0.0
        %3887 = vmatpush2.msra.mxu0 0.0
        %3888 = vmatprep.subr.mxu0 0.0
        %3889 = vmatpush2.msra.mxu0 0.0
        %3890 = vmatprep.mubr.f32.mxu0 0.0
        %3891 = vmatmul.mubr.f32.gmra.mxu0 %v3818
        %v3892 = vpop.f32.mrf.mxu0
        %v3893 = vadd.f32 %v3815, %v3892
        %v3894 = vpop.f32.mrf.mxu0
        %3895 = vmatprep.mubr.f32.mxu0 0.0
        %3896 = vmatmul.mubr.f32.gmra.mxu0 %v3821
        %v3897 = vpop.f32.mrf.mxu0
        %v3898 = vadd.f32 %v3815, %v3897
        %v3899 = vpop.f32.mrf.mxu0
        %3900 = vmatprep.mubr.f32.mxu0 0.0
        %3901 = vmatmul.mubr.f32.gmra.mxu0 %v3824
        %v3902 = vpop.f32.mrf.mxu0
        %v3903 = vadd.f32 %v3815, %v3902
        %v3904 = vpop.f32.mrf.mxu0
        %3905 = vdwg.mxu0
        %v3906 = vmul.f32 %v3893, 0.5
        %v3907 = vmul.f32 %v3898, 0.5
        %v3908 = vmul.f32 %v3903, 0.5
        %v3909 = vmul.f32 %v3893, 0.044715
        %v3910 = vmul.f32 %v3898, 0.044715
        %v3911 = vmul.f32 %v3903, 0.044715
        %v3912 = vmul.f32 %v3909, %v3893
        %v3913 = vmul.f32 %v3910, %v3898
        %v3914 = vmul.f32 %v3911, %v3903
        %v3915 = vmul.f32 %v3912, %v3893
        %v3916 = vmul.f32 %v3913, %v3898
        %v3917 = vmul.f32 %v3914, %v3903
        %v3918 = vadd.f32 %v3893, %v3915
        %v3919 = vadd.f32 %v3898, %v3916
        %v3920 = vadd.f32 %v3903, %v3917
        %v3921 = vmul.f32 %v3918, 0.7978846
        %v3922 = vmul.f32 %v3919, 0.7978846
        %v3923 = vmul.f32 %v3920, 0.7978846
        %v3924 = vtanh.pop %v3921
        %v3925 = vtanh.pop %v3922
        %v3926 = vtanh.pop %v3923
        %v3927 = vadd.f32 %v3924, 1.0
        %v3928 = vadd.f32 %v3925, 1.0
        %v3929 = vadd.f32 %v3926, 1.0
        %v3930 = vmul.f32 %v3906, %v3927
        %v3931 = vmul.f32 %v3907, %v3928
        %v3932 = vmul.f32 %v3908, %v3929
        %v3933 = vld [vmem:[%s1105] sm:$0xff]
        %v3934 = vld [vmem:[%s1105 + $0x8] sm:$0xff]
        %v3935 = vld [vmem:[%s1105 + $0x10] sm:$0xff]
        %v3936 = vld [vmem:[%s1105 + $0x18] sm:$0xff]
        %v3937 = vld [vmem:[%s1105 + $0x20] sm:$0xff]
        %v3938 = vld [vmem:[%s1105 + $0x28] sm:$0xff]
        %v3939 = vld [vmem:[%s1105 + $0x30] sm:$0xff]
        %v3940 = vld [vmem:[%s1105 + $0x38] sm:$0xff]
        %v3941 = vld [vmem:[%s959] sm:$0x1]
        %v3943 = vlaneseq
        %v3944 = vshrl.u32 %v3943, 7
        %v3945 = vsub.s32 0, %v3944
        %v3946 = vrot.slane %v3941, %v3945
        %vm3948 = vcmask 523264
        %v3950 = vsel %vm3948, %v3930, 0
        %v3953 = vsel %vm3948, %v3931, 0
        %v3956 = vsel %vm3948, %v3932, 0
        %3958 = vmatprep.subr.mxu0 0.0
        %3959 = vmatpush1.msra.mxu0 0.0
        %3960 = vmatprep.subr.mxu0 0.0
        %3961 = vmatpush1.msra.mxu0 0.0
        %3962 = vmatprep.subr.mxu0 0.0
        %3963 = vmatpush1.msra.mxu0 0.0
        %3964 = vmatprep.subr.mxu0 0.0
        %3965 = vmatpush1.msra.mxu0 0.0
        %3966 = vmatprep.subr.mxu0 0.0
        %3967 = vmatpush1.msra.mxu0 0.0
        %3968 = vmatprep.subr.mxu0 0.0
        %3969 = vmatpush1.msra.mxu0 0.0
        %3970 = vmatprep.subr.mxu0 0.0
        %3971 = vmatpush1.msra.mxu0 0.0
        %3972 = vmatprep.subr.mxu0 0.0
        %3973 = vmatpush1.msra.mxu0 0.0
        %3974 = vmatprep.subr.mxu0 0.0
        %3975 = vmatpush1.msra.mxu0 %v3940
        %3976 = vmatprep.subr.mxu0 0.0
        %3977 = vmatpush1.msra.mxu0 %v3939
        %3978 = vmatprep.subr.mxu0 0.0
        %3979 = vmatpush1.msra.mxu0 %v3938
        %3980 = vmatprep.subr.mxu0 0.0
        %3981 = vmatpush1.msra.mxu0 %v3937
        %3982 = vmatprep.subr.mxu0 0.0
        %3983 = vmatpush1.msra.mxu0 %v3936
        %3984 = vmatprep.subr.mxu0 0.0
        %3985 = vmatpush1.msra.mxu0 %v3935
        %3986 = vmatprep.subr.mxu0 0.0
        %3987 = vmatpush1.msra.mxu0 %v3934
        %3988 = vmatprep.subr.mxu0 0.0
        %3989 = vmatpush1.msra.mxu0 %v3933
        %3990 = vmatprep.subr.mxu0 0.0
        %3991 = vmatpush2.msra.mxu0 0.0
        %3992 = vmatprep.subr.mxu0 0.0
        %3993 = vmatpush2.msra.mxu0 0.0
        %3994 = vmatprep.subr.mxu0 0.0
        %3995 = vmatpush2.msra.mxu0 0.0
        %3996 = vmatprep.subr.mxu0 0.0
        %3997 = vmatpush2.msra.mxu0 0.0
        %3998 = vmatprep.subr.mxu0 0.0
        %3999 = vmatpush2.msra.mxu0 0.0
        %4000 = vmatprep.subr.mxu0 0.0
        %4001 = vmatpush2.msra.mxu0 0.0
        %4002 = vmatprep.subr.mxu0 0.0
        %4003 = vmatpush2.msra.mxu0 0.0
        %4004 = vmatprep.subr.mxu0 0.0
        %4005 = vmatpush2.msra.mxu0 0.0
        %4006 = vmatprep.subr.mxu0 0.0
        %4007 = vmatpush2.msra.mxu0 0.0
        %4008 = vmatprep.subr.mxu0 0.0
        %4009 = vmatpush2.msra.mxu0 0.0
        %4010 = vmatprep.subr.mxu0 0.0
        %4011 = vmatpush2.msra.mxu0 0.0
        %4012 = vmatprep.subr.mxu0 0.0
        %4013 = vmatpush2.msra.mxu0 0.0
        %4014 = vmatprep.subr.mxu0 0.0
        %4015 = vmatpush2.msra.mxu0 0.0
        %4016 = vmatprep.subr.mxu0 0.0
        %4017 = vmatpush2.msra.mxu0 0.0
        %4018 = vmatprep.subr.mxu0 0.0
        %4019 = vmatpush2.msra.mxu0 0.0
        %4020 = vmatprep.subr.mxu0 0.0
        %4021 = vmatpush2.msra.mxu0 0.0
        %4022 = vmatprep.mubr.f32.mxu0 0.0
        %4023 = vmatmul.mubr.f32.gmra.mxu0 %v3950
        %v4024 = vpop.f32.mrf.mxu0
        %v4025 = vadd.f32 %v3946, %v4024
        %v4026 = vpop.f32.mrf.mxu0
        %4027 = vmatprep.mubr.f32.mxu0 0.0
        %4028 = vmatmul.mubr.f32.gmra.mxu0 %v3953
        %v4029 = vpop.f32.mrf.mxu0
        %v4030 = vadd.f32 %v3946, %v4029
        %v4031 = vpop.f32.mrf.mxu0
        %4032 = vmatprep.mubr.f32.mxu0 0.0
        %4033 = vmatmul.mubr.f32.gmra.mxu0 %v3956
        %v4034 = vpop.f32.mrf.mxu0
        %v4035 = vadd.f32 %v3946, %v4034
        %v4036 = vpop.f32.mrf.mxu0
        %4037 = vdwg.mxu0
        %v4038 = vadd.f32 %v3803, %v4025
        %v4039 = vadd.f32 %v3804, %v4030
        %v4040 = vadd.f32 %v3805, %v4035
        %v4041 = vld [vmem:[%s1108] sm:$0x1]
        %v4042 = vld [vmem:[%s1111] sm:$0x1]
        %v4043 = vsel %vm1873, %v4038, 0.0
        %4044 = vadd.xlane.f32.xlu0 %v4043
        %v4045 = vpop.xlane.xlu0 %4044
        %v4046 = vsel %vm1873, %v4039, 0.0
        %4047 = vadd.xlane.f32.xlu0 %v4046
        %v4048 = vpop.xlane.xlu0 %4047
        %v4049 = vsel %vm3753, %v4040, 0.0
        %4050 = vadd.xlane.f32.xlu0 %v4049
        %v4051 = vpop.xlane.xlu0 %4050
        %v4052 = vmul.f32 %v4045, %v3757
        %v4053 = vmul.f32 %v4048, %v3757
        %v4054 = vmul.f32 %v4051, %v3757
        %v4055 = vsub.f32 %v4038, %v4052
        %v4056 = vsub.f32 %v4039, %v4053
        %v4057 = vsub.f32 %v4040, %v4054
        %v4058 = vmul.f32 %v4055, %v4055
        %v4059 = vmul.f32 %v4056, %v4056
        %v4060 = vmul.f32 %v4057, %v4057
        %v4061 = vsel %vm1873, %v4058, 0.0
        %4062 = vadd.xlane.f32.xlu0 %v4061
        %v4063 = vpop.xlane.xlu0 %4062
        %v4064 = vsel %vm1873, %v4059, 0.0
        %4065 = vadd.xlane.f32.xlu0 %v4064
        %v4066 = vpop.xlane.xlu0 %4065
        %v4067 = vsel %vm3753, %v4060, 0.0
        %4068 = vadd.xlane.f32.xlu0 %v4067
        %v4069 = vpop.xlane.xlu0 %4068
        %v4070 = vmul.f32 %v4063, %v3757
        %v4071 = vmul.f32 %v4066, %v3757
        %v4072 = vmul.f32 %v4069, %v3757
        %v4073 = vadd.f32 %v4070, 1e-05
        %v4074 = vadd.f32 %v4071, 1e-05
        %v4075 = vadd.f32 %v4072, 1e-05
        %v4076 = vrsqrt.pop %v4073
        %v4077 = vrsqrt.pop %v4074
        %v4078 = vrsqrt.pop %v4075
        %v4079 = vmul.f32 %v4055, %v4076
        %v4080 = vmul.f32 %v4056, %v4077
        %v4081 = vmul.f32 %v4057, %v4078
        %v4083 = vlaneseq
        %v4084 = vshrl.u32 %v4083, 7
        %v4085 = vsub.s32 0, %v4084
        %v4086 = vrot.slane %v4041, %v4085
        %v4088 = vmul.f32 %v4079, %v4086
        %v4089 = vmul.f32 %v4080, %v4086
        %v4090 = vmul.f32 %v4081, %v4086
        %v4092 = vlaneseq
        %v4093 = vshrl.u32 %v4092, 7
        %v4094 = vsub.s32 0, %v4093
        %v4095 = vrot.slane %v4042, %v4094
        %v4097 = vadd.f32 %v4088, %v4095
        %v4098 = vadd.f32 %v4089, %v4095
        %v4099 = vadd.f32 %v4090, %v4095
        %4100 = vst.msk [vmem:[#allocation2] sm:$0xff] %vm1873, %v4097
        %4101 = vst.msk [vmem:[#allocation2 + $0x8] sm:$0xff] %vm1873, %v4098
        %4102 = vst.msk [vmem:[#allocation2 + $0x10] sm:$0x3] %vm3753, %v4099
        %p4103 = scmp.eq.s32.totalorder %s76, 1
        // Predicated region
        $region153: #{run.1} parent=135 // pred_check
          %p4104 = pneg %p4103
        $region154: #{run.1} parent=135 // pred_check_branch
          %4106 = sbr.rel (%p4104) target = $region156
        $region155: #{run.1} parent=135 // pred_region
          %v4107 = vld [vmem:[%s53] sm:$0xff]
          %v4108 = vld [vmem:[%s53 + $0x8] sm:$0xff]
          %v4109 = vld [vmem:[%s53 + $0x10] sm:$0xff]
          %v4110 = vld [vmem:[%s53 + $0x18] sm:$0xff]
          %v4112 = vsel %vm1873, %v4097, 0
          %v4115 = vsel %vm1873, %v4098, 0
          %v4118 = vsel %vm1873, %v4099, 0
          %4120 = vmatprep.subr.mxu0 0.0
          %4121 = vmatpush1.msra.mxu0 0.0
          %4122 = vmatprep.subr.mxu0 0.0
          %4123 = vmatpush1.msra.mxu0 0.0
          %4124 = vmatprep.subr.mxu0 0.0
          %4125 = vmatpush1.msra.mxu0 0.0
          %4126 = vmatprep.subr.mxu0 0.0
          %4127 = vmatpush1.msra.mxu0 0.0
          %4128 = vmatprep.subr.mxu0 0.0
          %4129 = vmatpush1.msra.mxu0 0.0
          %4130 = vmatprep.subr.mxu0 0.0
          %4131 = vmatpush1.msra.mxu0 0.0
          %4132 = vmatprep.subr.mxu0 0.0
          %4133 = vmatpush1.msra.mxu0 0.0
          %4134 = vmatprep.subr.mxu0 0.0
          %4135 = vmatpush1.msra.mxu0 0.0
          %4136 = vmatprep.subr.mxu0 0.0
          %4137 = vmatpush1.msra.mxu0 0.0
          %4138 = vmatprep.subr.mxu0 0.0
          %4139 = vmatpush1.msra.mxu0 0.0
          %4140 = vmatprep.subr.mxu0 0.0
          %4141 = vmatpush1.msra.mxu0 0.0
          %4142 = vmatprep.subr.mxu0 0.0
          %4143 = vmatpush1.msra.mxu0 0.0
          %4144 = vmatprep.subr.mxu0 0.0
          %4145 = vmatpush1.msra.mxu0 %v4110
          %4146 = vmatprep.subr.mxu0 0.0
          %4147 = vmatpush1.msra.mxu0 %v4109
          %4148 = vmatprep.subr.mxu0 0.0
          %4149 = vmatpush1.msra.mxu0 %v4108
          %4150 = vmatprep.subr.mxu0 0.0
          %4151 = vmatpush1.msra.mxu0 %v4107
          %4152 = vmatprep.subr.mxu0 0.0
          %4153 = vmatpush2.msra.mxu0 0.0
          %4154 = vmatprep.subr.mxu0 0.0
          %4155 = vmatpush2.msra.mxu0 0.0
          %4156 = vmatprep.subr.mxu0 0.0
          %4157 = vmatpush2.msra.mxu0 0.0
          %4158 = vmatprep.subr.mxu0 0.0
          %4159 = vmatpush2.msra.mxu0 0.0
          %4160 = vmatprep.subr.mxu0 0.0
          %4161 = vmatpush2.msra.mxu0 0.0
          %4162 = vmatprep.subr.mxu0 0.0
          %4163 = vmatpush2.msra.mxu0 0.0
          %4164 = vmatprep.subr.mxu0 0.0
          %4165 = vmatpush2.msra.mxu0 0.0
          %4166 = vmatprep.subr.mxu0 0.0
          %4167 = vmatpush2.msra.mxu0 0.0
          %4168 = vmatprep.subr.mxu0 0.0
          %4169 = vmatpush2.msra.mxu0 0.0
          %4170 = vmatprep.subr.mxu0 0.0
          %4171 = vmatpush2.msra.mxu0 0.0
          %4172 = vmatprep.subr.mxu0 0.0
          %4173 = vmatpush2.msra.mxu0 0.0
          %4174 = vmatprep.subr.mxu0 0.0
          %4175 = vmatpush2.msra.mxu0 0.0
          %4176 = vmatprep.subr.mxu0 0.0
          %4177 = vmatpush2.msra.mxu0 0.0
          %4178 = vmatprep.subr.mxu0 0.0
          %4179 = vmatpush2.msra.mxu0 0.0
          %4180 = vmatprep.subr.mxu0 0.0
          %4181 = vmatpush2.msra.mxu0 0.0
          %4182 = vmatprep.subr.mxu0 0.0
          %4183 = vmatpush2.msra.mxu0 0.0
          %4184 = vmatprep.mubr.f32.mxu0 0.0
          %4185 = vmatmul.mubr.f32.gmra.mxu0 %v4112
          %v4186 = vpop.f32.mrf.mxu0
          %v4187 = vadd.f32 0.0, %v4186
          %v4188 = vpop.f32.mrf.mxu0
          %4189 = vmatprep.mubr.f32.mxu0 0.0
          %4190 = vmatmul.mubr.f32.gmra.mxu0 %v4115
          %v4191 = vpop.f32.mrf.mxu0
          %v4192 = vadd.f32 0.0, %v4191
          %v4193 = vpop.f32.mrf.mxu0
          %4194 = vmatprep.mubr.f32.mxu0 0.0
          %4195 = vmatmul.mubr.f32.gmra.mxu0 %v4118
          %v4196 = vpop.f32.mrf.mxu0
          %v4197 = vadd.f32 0.0, %v4196
          %v4198 = vpop.f32.mrf.mxu0
          %4199 = vdwg.mxu0
          %v4200 = vld [vmem:[%s57] sm:$0xff]
          %v4201 = vmul.f32 %v4187, %v4200
          %v4202 = vrot.slane %v4201, 4
          %v4203 = vadd.f32 %v4201, %v4202
          %v4204 = vrot.slane %v4203, 2
          %v4205 = vadd.f32 %v4203, %v4204
          %v4206 = vrot.slane %v4205, 1
          %v4207 = vadd.f32 %v4205, %v4206
          %v4208 = vld [vmem:[#allocation7] sm:$0x1]
          %v4209 = vadd.f32 %v4207, %v4208
          %v4211 = vrot.slane %v4200, 7
          %v4213 = vmul.f32 %v4192, %v4211
          %v4214 = vmul.f32 %v4197, %v4211
          %v4217 = vrot.slane %v4213, 1
          %v4218 = vrot.slane %v4214, 1
          %v4219 = vsel %vm1978, %v4217, %v4218
          %v4221 = vrot.slane %v4219, 4
          %v4222 = vadd.f32 %v4219, %v4221
          %v4223 = vrot.slane %v4222, 2
          %v4224 = vadd.f32 %v4222, %v4223
          %v4225 = vrot.slane %v4224, 1
          %v4226 = vadd.f32 %v4224, %v4225
          %v4227 = vadd.f32 %v4226, %v4208
          %v4229 = vrot.slane %v4227, 7
          %v4231 = vsel %vm2880, %v4209, %v4229
          %4232 = vst [vmem:[%s59] sm:$0x3] %v4231
        $region156: #{run.1} parent=135 // pred_fallthru
          _
        // Predicated region
        $region157: #{run.1} parent=135 // pred_check
          %p4233 = pneg %p758
        $region158: #{run.1} parent=135 // pred_check_branch
          %4235 = sbr.rel (%p4233) target = $region160
        $region159: #{run.1} parent=135 // pred_region
          _
        $region160: #{run.1} parent=135 // pred_fallthru
          _
        // Predicated region
        $region161: #{run.1} parent=135 // pred_check
          %p4236 = pneg %p758
        $region162: #{run.1} parent=135 // pred_check_branch
          %4238 = sbr.rel (%p4236) target = $region164
        $region163: #{run.1} parent=135 // pred_region
          _
        $region164: #{run.1} parent=135 // pred_fallthru
          _
      $region136: #{run.1} parent=5 // pred_fallthru
        _
      %p4239 = scmp.le.s32.totalorder 2, %s71
      // Predicated region
      $region165: #{run.1} parent=5 // pred_check
        %p4240 = pneg %p4239
      $region166: #{run.1} parent=5 // pred_check_branch
        %4242 = sbr.rel (%p4240) target = $region168
      $region167: #{run.1} parent=5 // pred_region
        %s4243 = ssub.s32 %s71, 2
      $region168: #{run.1} parent=5 // pred_fallthru
        _
    $region6: #{run.1} parent=1 // loop_footer
      %s75 = sadd.s32 1, %s71
    $region7: #{run.1} parent=1 // loop_footer_branch
      %70 = sbr.rel target = $region3
    $region8: #{run.1} parent=1 // loop_exit
      _
    %4244 = vsyncpa [#allocation4], 1
    %s4245 = scalar_lea.sflag [#allocation4], 1
    %4246 = vsyncpa %s4245, 1
    %4247 = vsyncpa [#allocation6], 1
    %s4248 = scalar_lea.sflag [#allocation6], 1
    %4249 = vsyncpa %s4248, 1

</llo_original>
